<compile_context>
chip_gen: v7x
topology: tpu7x:2x2x1
jax: 0.10.0
libtpu: 0.0.40
codegen_flags: <defaults>
</compile_context>

<pallas_src>
import functools

import jax
import jax.numpy as jnp
from jax.experimental import pallas as pl
from jax.experimental.pallas import tpu as pltpu

EPS = 1e-5

# Largest lane extent we allow for the banded formulation before demanding
# stripe tiling (keeps the banded weights and per-step activations small).
_MAX_BANDED_LANES = 1024


# ---------------------------------------------------------------------------
# Kernel
# ---------------------------------------------------------------------------
def _preact_block_kernel(x_ref, s1_ref, b1_ref, wb1_ref, s2_ref, b2_ref,
                         wb2_ref, *rest, B, H, W, Cin, Cout,
                         matmul_dtype, fuse_shortcut, mm_precision):
    if fuse_shortcut:
        ws_ref, o_ref = rest
    else:
        (o_ref,) = rest

    f32 = jnp.float32
    M = B * H  # matmul rows: one row per (image, y)

    def pad_hw(v, c):
        # (B, H, W*c) -> (B, H+2, (W+2)*c) with zero borders, in matmul_dtype.
        # Built as an in-register value: no scratch, no border re-zeroing.
        zc = jnp.zeros((B, H, c), matmul_dtype)
        body = jnp.concatenate([zc, v.astype(matmul_dtype), zc], axis=-1)
        zr = jnp.zeros((B, 1, (W + 2) * c), matmul_dtype)
        return jnp.concatenate([zr, body, zr], axis=1)

    def conv3x3(padded, wb_ref, c):
        # Three banded matmuls (one per kernel row dy); each operand is a
        # direct lane-dense row-slice of the padded activation.
        k = (W + 2) * c
        acc = None
        for dy in range(3):
            a = padded[:, dy:dy + H, :].reshape(M, k)
            p = jnp.dot(a, wb_ref[dy], preferred_element_type=f32,
                        precision=mm_precision)
            acc = p if acc is None else acc + p
        return acc                                       # (M, W*Cout) f32

    # --- bn1 + relu: lane-dense (B, H, W*Cin) f32 on the VPU ----------------
    x = x_ref[...].astype(f32)
    h = jnp.maximum(x * s1_ref[...] + b1_ref[...], 0.0)
    h_mm = h.astype(matmul_dtype)

    # --- conv1: 3x3 / stride 1 / pad 1 --------------------------------------
    out1 = conv3x3(pad_hw(h_mm, Cin), wb1_ref, Cin)

    # --- bn2 + relu: lane-dense (B, H, W*Cout) f32 ---------------------------
    h2 = jnp.maximum(out1.reshape(B, H, W * Cout) * s2_ref[...] + b2_ref[...],
                     0.0)

    # --- conv2 + shortcut ----------------------------------------------------
    acc = conv3x3(pad_hw(h2, Cout), wb2_ref, Cout)        # (M, W*Cout) f32
    if fuse_shortcut:
        acc = acc + jnp.dot(h_mm.reshape(M, W * Cin), ws_ref[...],
                            preferred_element_type=f32, precision=mm_precision)
        out = acc.reshape(B, H, W * Cout)
    else:
        out = acc.reshape(B, H, W * Cout) + x             # identity: Cin == Cout

    # Lane-dense store of the (B, H, W*Cout) slab.
    o_ref[...] = out.astype(o_ref.dtype)


# ---------------------------------------------------------------------------
# Wrapper-side weight preparation
# ---------------------------------------------------------------------------
def _banded_conv3x3_weights(w_oihw, w_spatial, matmul_dtype):
    """OIHW (Cout, Cin, 3, 3) -> (3, (W+2)*Cin, W*Cout) banded weights.

    Band dy, contracted against the lane-dense padded row (W+2)*Cin, realizes
    all three dx taps of kernel row dy of the conv; padded border columns hit
    zero input lanes so no masking is needed.
    """
    w_hwio = jnp.transpose(w_oihw, (2, 3, 1, 0)).astype(jnp.float32)  # (3,3,Ci,Co)
    kh, kw, cin, cout = w_hwio.shape
    wp = w_spatial
    px = jnp.arange(wp + 2)[:, None]          # padded input column index
    xo = jnp.arange(wp)[None, :]              # output column index
    dx = px - xo                              # (W+2, W) tap offset
    valid = (dx >= 0) & (dx < kw)
    dx_c = jnp.clip(dx, 0, kw - 1)
    g = w_hwio[:, dx_c]                       # (3, W+2, W, Cin, Cout)
    g = jnp.where(valid[None, :, :, None, None], g, 0.0)
    bands = jnp.transpose(g, (0, 1, 3, 2, 4)).reshape(
        kh, (wp + 2) * cin, wp * cout)
    return bands.astype(matmul_dtype)


def _blockdiag_1x1_weights(ws_oihw, w_spatial, matmul_dtype):
    """1x1-conv OIHW (Cout, Cin, 1, 1) -> block-diagonal (W*Cin, W*Cout)."""
    w = jnp.transpose(ws_oihw[:, :, 0, 0], (1, 0)).astype(jnp.float32)  # (Ci,Co)
    cin, cout = w.shape
    eye = jnp.eye(w_spatial, dtype=jnp.float32)
    bd = jnp.einsum("xy,io->xiyo", eye, w).reshape(w_spatial * cin,
                                                   w_spatial * cout)
    return bd.astype(matmul_dtype)


def _pick_images_per_step(n, h, w, max_rows=4096):
    """Largest divisor B of n with grid length n//B >= 2 (keeps both v7x TCs
    busy) and a bounded per-step row count."""
    best = 1
    for b in range(1, n + 1):
        if n % b != 0 or b * h * w > max_rows:
            continue
        if n // b >= 2 or n == 1:
            best = max(best, b)
    return best


def _estimate_vmem_bytes(B, H, W, Cin, Cout, matmul_dtype, fuse_shortcut):
    f32b = 4
    mmb = jnp.dtype(matmul_dtype).itemsize
    blk_in = B * H * W * Cin * f32b
    blk_out = B * H * W * Cout * f32b
    wgts = (3 * (W + 2) * Cin * W * Cout + 3 * (W + 2) * Cout * W * Cout) * mmb
    if fuse_shortcut:
        wgts += W * Cin * W * Cout * mmb
    bn = 2 * W * (Cin + Cout) * f32b
    temps = (2 * B * H * W * Cin * f32b                       # x, h
             + B * (H + 2) * (W + 2) * (Cin + Cout) * mmb     # padded bodies
             + 4 * B * H * W * Cout * f32b)                   # conv accs, h2, out
    est = 2 * (blk_in + blk_out) + 2 * (wgts + bn) + temps
    return int(min(max(2 * est + (8 << 20), 16 << 20), 48 << 20))


# ---------------------------------------------------------------------------
# Public wrapper
# ---------------------------------------------------------------------------
def preact_block_pallas(x_nhwc, params, *, stride=1, matmul_dtype=jnp.bfloat16,
                        out_dtype=jnp.float32, images_per_step=None):
    """x_nhwc: (N, H, W, Cin) float32. Returns (N, H, W, Cout) in out_dtype."""
    if stride != 1:
        # TODO(synk): strided conv1 / strided 1x1 shortcut not implemented.
        raise NotImplementedError("stride != 1 is not supported")

    N, H, W, Cin = x_nhwc.shape
    Cout = params["w1"].shape[0]                # torch OIHW: (Cout, Cin, 3, 3)
    fuse_shortcut = ("ws" in params) and (params["ws"] is not None)
    if not fuse_shortcut and Cin != Cout:
        raise ValueError("identity shortcut requires in_planes == planes")
    if W * Cout > _MAX_BANDED_LANES or (W + 2) * max(Cin, Cout) > _MAX_BANDED_LANES:
        # TODO(synk): H/W-stripe tiling (1-row halo) + per-channel-block matmuls
        #             needed for ResNet-scale shapes.
        raise NotImplementedError("shape too large for the banded-conv kernel")

    # Fold BN (eval mode) to per-channel scale/shift, tiled lane-dense (1, W*C).
    def fold(g, b, m, v, width):
        s = (g / jnp.sqrt(v + EPS)).astype(jnp.float32).reshape(1, -1)
        t = (b - m * (g / jnp.sqrt(v + EPS))).astype(jnp.float32).reshape(1, -1)
        return jnp.tile(s, (1, width)), jnp.tile(t, (1, width))

    s1, b1 = fold(params["bn1_g"], params["bn1_b"],
                  params["bn1_m"], params["bn1_v"], W)
    s2, b2 = fold(params["bn2_g"], params["bn2_b"],
                  params["bn2_m"], params["bn2_v"], W)

    wb1 = _banded_conv3x3_weights(params["w1"], W, matmul_dtype)
    wb2 = _banded_conv3x3_weights(params["w2"], W, matmul_dtype)

    if images_per_step is None:
        B = _pick_images_per_step(N, H, W)
    else:
        B = images_per_step
        if N % B != 0:
            raise ValueError("images_per_step must divide the batch size")
    grid = (N // B,)

    x_slab = x_nhwc.reshape(N, H, W * Cin)      # lane-dense input slab

    in_specs = [
        pl.BlockSpec((B, H, W * Cin), lambda n: (n, 0, 0)),                # x
        pl.BlockSpec((1, W * Cin), lambda n: (0, 0)),                      # bn1 scale
        pl.BlockSpec((1, W * Cin), lambda n: (0, 0)),                      # bn1 shift
        pl.BlockSpec((3, (W + 2) * Cin, W * Cout), lambda n: (0, 0, 0)),   # conv1 bands
        pl.BlockSpec((1, W * Cout), lambda n: (0, 0)),                     # bn2 scale
        pl.BlockSpec((1, W * Cout), lambda n: (0, 0)),                     # bn2 shift
        pl.BlockSpec((3, (W + 2) * Cout, W * Cout), lambda n: (0, 0, 0)),  # conv2 bands
    ]
    args = [x_slab, s1, b1, wb1, s2, b2, wb2]
    if fuse_shortcut:
        wsd = _blockdiag_1x1_weights(params["ws"], W, matmul_dtype)
        in_specs.append(pl.BlockSpec((W * Cin, W * Cout), lambda n: (0, 0)))
        args.append(wsd)

    mm_precision = (jax.lax.Precision.HIGHEST
                    if jnp.dtype(matmul_dtype) == jnp.dtype(jnp.float32)
                    else None)
    kernel = functools.partial(
        _preact_block_kernel, B=B, H=H, W=W, Cin=Cin, Cout=Cout,
        matmul_dtype=matmul_dtype, fuse_shortcut=fuse_shortcut,
        mm_precision=mm_precision)

    out = pl.pallas_call(
        kernel,
        out_shape=jax.ShapeDtypeStruct((N, H, W * Cout), out_dtype),
        grid_spec=pltpu.PrefetchScalarGridSpec(
            num_scalar_prefetch=0,
            grid=grid,
            in_specs=in_specs,
            out_specs=pl.BlockSpec((B, H, W * Cout), lambda n: (n, 0, 0)),
        ),
        compiler_params=pltpu.CompilerParams(
            dimension_semantics=("parallel",),
            vmem_limit_bytes=_estimate_vmem_bytes(
                B, H, W, Cin, Cout, matmul_dtype, fuse_shortcut)),
    )(*args)

    return out.reshape(N, H, W, Cout)


# ---------------------------------------------------------------------------
# Pure-JAX reference & self-test
# ---------------------------------------------------------------------------
def preact_block_reference(x_nhwc, params):
    """Pure-JAX reference (lax conv), handles both shortcut variants."""
    def bn(x, g, b, m, v):
        return (x - m) / jnp.sqrt(v + EPS) * g + b

    def conv(x, w_oihw, stride):
        w_hwio = jnp.transpose(w_oihw, (2, 3, 1, 0))
        pad = (w_oihw.shape[2] - 1) // 2
        return jax.lax.conv_general_dilated(
            x, w_hwio, window_strides=(stride, stride),
            padding=[(pad, pad), (pad, pad)],
            dimension_numbers=("NHWC", "HWIO", "NHWC"))

    h = jax.nn.relu(bn(x_nhwc, params["bn1_g"], params["bn1_b"],
                       params["bn1_m"], params["bn1_v"]))
    shortcut = conv(h, params["ws"], 1) if "ws" in params else x_nhwc
    out = conv(h, params["w1"], 1)
    out = jax.nn.relu(bn(out, params["bn2_g"], params["bn2_b"],
                         params["bn2_m"], params["bn2_v"]))
    out = conv(out, params["w2"], 1)
    return out + shortcut


def _make_params(key, cin, planes, with_shortcut):
    ks = jax.random.split(key, 11)
    p = {
        "bn1_g": 1.0 + 0.1 * jax.random.normal(ks[0], (cin,), jnp.float32),
        "bn1_b": 0.1 * jax.random.normal(ks[1], (cin,), jnp.float32),
        "bn1_m": 0.1 * jax.random.normal(ks[2], (cin,), jnp.float32),
        "bn1_v": jnp.abs(1.0 + 0.1 * jax.random.normal(ks[3], (cin,), jnp.float32)),
        "w1": 0.1 * jax.random.normal(ks[4], (planes, cin, 3, 3), jnp.float32),
        "bn2_g": 1.0 + 0.1 * jax.random.normal(ks[5], (planes,), jnp.float32),
        "bn2_b": 0.1 * jax.random.normal(ks[6], (planes,), jnp.float32),
        "bn2_m": 0.1 * jax.random.normal(ks[7], (planes,), jnp.float32),
        "bn2_v": jnp.abs(1.0 + 0.1 * jax.random.normal(ks[8], (planes,), jnp.float32)),
        "w2": 0.1 * jax.random.normal(ks[9], (planes, planes, 3, 3), jnp.float32),
    }
    if with_shortcut:
        p["ws"] = 0.1 * jax.random.normal(ks[10], (planes, cin, 1, 1), jnp.float32)
    return p


def _check(name, out, ref, atol, rtol):
    out = jax.block_until_ready(out)
    if not jnp.allclose(out, ref, atol=atol, rtol=rtol):
        err = float(jnp.max(jnp.abs(out - ref)))
        raise AssertionError(
            f"{name}: Pallas output does not match reference (max abs err {err:.3e})")


if __name__ == "__main__":
    key = jax.random.PRNGKey(0)
    k_p1, k_x1, k_p2, k_x2 = jax.random.split(key, 4)
    H = W = 16

    # Case 1: in_planes != planes -> 1x1-conv shortcut; N=4 so the wrapper
    # packs 2 images per grid step (grid length 2 keeps both v7x TCs busy).
    N1, cin, planes = 4, 4, 8
    params1 = _make_params(k_p1, cin, planes, with_shortcut=True)
    x1 = jnp.transpose(jax.random.normal(k_x1, (N1, cin, H, W), jnp.float32),
                       (0, 2, 3, 1))                            # NCHW -> NHWC
    ref1 = preact_block_reference(x1, params1)
    _check("shortcut/f32",
           preact_block_pallas(x1, params1, matmul_dtype=jnp.float32),
           ref1, atol=2e-4, rtol=2e-4)
    _check("shortcut/bf16",
           preact_block_pallas(x1, params1, matmul_dtype=jnp.bfloat16),
           ref1, atol=3e-2, rtol=3e-2)

    # Case 2: in_planes == planes, stride == 1 -> identity shortcut; N=2 so
    # the wrapper keeps 1 image per step (grid length 2).
    N2 = 2
    cin2 = planes2 = 8
    params2 = _make_params(k_p2, cin2, planes2, with_shortcut=False)
    x2 = jnp.transpose(jax.random.normal(k_x2, (N2, cin2, H, W), jnp.float32),
                       (0, 2, 3, 1))
    ref2 = preact_block_reference(x2, params2)
    _check("identity/f32",
           preact_block_pallas(x2, params2, matmul_dtype=jnp.float32),
           ref2, atol=2e-4, rtol=2e-4)
    _check("identity/bf16",
           preact_block_pallas(x2, params2, matmul_dtype=jnp.bfloat16),
           ref2, atol=3e-2, rtol=3e-2)

    print("KERNEL_OK")
</pallas_src>

<mosaic_0001>
module attributes {stable_mosaic.version = 11 : i64} {
  func.func @_preact_block_kernel(%arg0: i32, %arg1: memref<2x16x64xf32, #tpu.memory_space<vmem>>, %arg2: memref<1x64xf32, #tpu.memory_space<vmem>>, %arg3: memref<1x64xf32, #tpu.memory_space<vmem>>, %arg4: memref<3x72x128xf32, #tpu.memory_space<vmem>>, %arg5: memref<1x128xf32, #tpu.memory_space<vmem>>, %arg6: memref<1x128xf32, #tpu.memory_space<vmem>>, %arg7: memref<3x144x128xf32, #tpu.memory_space<vmem>>, %arg8: memref<64x128xf32, #tpu.memory_space<vmem>>, %arg9: memref<2x16x128xf32, #tpu.memory_space<vmem>>) attributes {dimension_semantics = [#tpu.dimension_semantics<parallel>], iteration_bounds = array<i64: 2>, scalar_prefetch = 0 : i64, scratch_operands = 0 : i64, tpu.core_type = #tpu.core_type<tc>, window_params = [{transform_indices = @transform_0, window_bounds = array<i64: 2, 16, 64>}, {pipeline_mode = #tpu.pipeline_mode<synchronous>, transform_indices = @transform_1, window_bounds = array<i64: 1, 64>}, {pipeline_mode = #tpu.pipeline_mode<synchronous>, transform_indices = @transform_2, window_bounds = array<i64: 1, 64>}, {pipeline_mode = #tpu.pipeline_mode<synchronous>, transform_indices = @transform_3, window_bounds = array<i64: 3, 72, 128>}, {pipeline_mode = #tpu.pipeline_mode<synchronous>, transform_indices = @transform_4, window_bounds = array<i64: 1, 128>}, {pipeline_mode = #tpu.pipeline_mode<synchronous>, transform_indices = @transform_5, window_bounds = array<i64: 1, 128>}, {pipeline_mode = #tpu.pipeline_mode<synchronous>, transform_indices = @transform_6, window_bounds = array<i64: 3, 144, 128>}, {pipeline_mode = #tpu.pipeline_mode<synchronous>, transform_indices = @transform_7, window_bounds = array<i64: 64, 128>}, {transform_indices = @transform_8, window_bounds = array<i64: 2, 16, 128>}]} {
    %c0 = arith.constant 0 : index
    %c0_0 = arith.constant 0 : index
    %c0_1 = arith.constant 0 : index
    %0 = vector.load %arg1[%c0, %c0_0, %c0_1] : memref<2x16x64xf32, #tpu.memory_space<vmem>>, vector<2x16x64xf32>
    %c0_2 = arith.constant 0 : index
    %c0_3 = arith.constant 0 : index
    %1 = vector.load %arg2[%c0_2, %c0_3] : memref<1x64xf32, #tpu.memory_space<vmem>>, vector<1x64xf32>
    %2 = vector.shape_cast %1 : vector<1x64xf32> to vector<1x1x64xf32>
    %3 = vector.broadcast %2 : vector<1x1x64xf32> to vector<2x16x64xf32>
    %4 = arith.mulf %0, %3 : vector<2x16x64xf32>
    %c0_4 = arith.constant 0 : index
    %c0_5 = arith.constant 0 : index
    %5 = vector.load %arg3[%c0_4, %c0_5] : memref<1x64xf32, #tpu.memory_space<vmem>>, vector<1x64xf32>
    %6 = vector.shape_cast %5 : vector<1x64xf32> to vector<1x1x64xf32>
    %7 = vector.broadcast %6 : vector<1x1x64xf32> to vector<2x16x64xf32>
    %8 = arith.addf %4, %7 : vector<2x16x64xf32>
    %cst = arith.constant 0.000000e+00 : f32
    %9 = vector.broadcast %cst : f32 to vector<2x16x64xf32>
    %10 = arith.maximumf %8, %9 : vector<2x16x64xf32>
    %cst_6 = arith.constant 0.000000e+00 : f32
    %11 = vector.broadcast %cst_6 : f32 to vector<2x16x4xf32>
    %12 = tpu.concatenate %11, %10, %11 in 2 : vector<2x16x4xf32>, vector<2x16x64xf32>, vector<2x16x4xf32> -> vector<2x16x72xf32>
    %cst_7 = arith.constant 0.000000e+00 : f32
    %13 = vector.broadcast %cst_7 : f32 to vector<2x1x72xf32>
    %14 = tpu.concatenate %13, %12, %13 in 1 : vector<2x1x72xf32>, vector<2x16x72xf32>, vector<2x1x72xf32> -> vector<2x18x72xf32>
    %15 = vector.extract_strided_slice %14 {offsets = [0, 0, 0], sizes = [2, 16, 72], strides = [1, 1, 1]} : vector<2x18x72xf32> to vector<2x16x72xf32>
    %16 = vector.shape_cast %15 : vector<2x16x72xf32> to vector<32x72xf32>
    %c0_8 = arith.constant 0 : index
    %c0_9 = arith.constant 0 : index
    %c0_10 = arith.constant 0 : index
    %17 = vector.load %arg4[%c0_8, %c0_9, %c0_10] : memref<3x72x128xf32, #tpu.memory_space<vmem>>, vector<1x72x128xf32>
    %18 = vector.shape_cast %17 : vector<1x72x128xf32> to vector<72x128xf32>
    %cst_11 = arith.constant dense<0.000000e+00> : vector<32x128xf32>
    %19 = tpu.matmul %16, %18, %cst_11 {dimension_numbers = #tpu.dot_dimension_numbers<[1], [0], [0], [1], [0, 0, 1, 1], [], []>, precision = #tpu.contract_precision<fp32>} : vector<32x72xf32>, vector<72x128xf32>, vector<32x128xf32> -> vector<32x128xf32>
    %20 = vector.extract_strided_slice %14 {offsets = [0, 1, 0], sizes = [2, 16, 72], strides = [1, 1, 1]} : vector<2x18x72xf32> to vector<2x16x72xf32>
    %21 = vector.shape_cast %20 : vector<2x16x72xf32> to vector<32x72xf32>
    %c1 = arith.constant 1 : index
    %c0_12 = arith.constant 0 : index
    %c0_13 = arith.constant 0 : index
    %22 = vector.load %arg4[%c1, %c0_12, %c0_13] : memref<3x72x128xf32, #tpu.memory_space<vmem>>, vector<1x72x128xf32>
    %23 = vector.shape_cast %22 : vector<1x72x128xf32> to vector<72x128xf32>
    %cst_14 = arith.constant dense<0.000000e+00> : vector<32x128xf32>
    %24 = tpu.matmul %21, %23, %cst_14 {dimension_numbers = #tpu.dot_dimension_numbers<[1], [0], [0], [1], [0, 0, 1, 1], [], []>, precision = #tpu.contract_precision<fp32>} : vector<32x72xf32>, vector<72x128xf32>, vector<32x128xf32> -> vector<32x128xf32>
    %25 = arith.addf %19, %24 : vector<32x128xf32>
    %26 = vector.extract_strided_slice %14 {offsets = [0, 2, 0], sizes = [2, 16, 72], strides = [1, 1, 1]} : vector<2x18x72xf32> to vector<2x16x72xf32>
    %27 = vector.shape_cast %26 : vector<2x16x72xf32> to vector<32x72xf32>
    %c2 = arith.constant 2 : index
    %c0_15 = arith.constant 0 : index
    %c0_16 = arith.constant 0 : index
    %28 = vector.load %arg4[%c2, %c0_15, %c0_16] : memref<3x72x128xf32, #tpu.memory_space<vmem>>, vector<1x72x128xf32>
    %29 = vector.shape_cast %28 : vector<1x72x128xf32> to vector<72x128xf32>
    %cst_17 = arith.constant dense<0.000000e+00> : vector<32x128xf32>
    %30 = tpu.matmul %27, %29, %cst_17 {dimension_numbers = #tpu.dot_dimension_numbers<[1], [0], [0], [1], [0, 0, 1, 1], [], []>, precision = #tpu.contract_precision<fp32>} : vector<32x72xf32>, vector<72x128xf32>, vector<32x128xf32> -> vector<32x128xf32>
    %31 = arith.addf %25, %30 : vector<32x128xf32>
    %32 = vector.shape_cast %31 : vector<32x128xf32> to vector<2x16x128xf32>
    %c0_18 = arith.constant 0 : index
    %c0_19 = arith.constant 0 : index
    %33 = vector.load %arg5[%c0_18, %c0_19] : memref<1x128xf32, #tpu.memory_space<vmem>>, vector<1x128xf32>
    %34 = vector.shape_cast %33 : vector<1x128xf32> to vector<1x1x128xf32>
    %35 = vector.broadcast %34 : vector<1x1x128xf32> to vector<2x16x128xf32>
    %36 = arith.mulf %32, %35 : vector<2x16x128xf32>
    %c0_20 = arith.constant 0 : index
    %c0_21 = arith.constant 0 : index
    %37 = vector.load %arg6[%c0_20, %c0_21] : memref<1x128xf32, #tpu.memory_space<vmem>>, vector<1x128xf32>
    %38 = vector.shape_cast %37 : vector<1x128xf32> to vector<1x1x128xf32>
    %39 = vector.broadcast %38 : vector<1x1x128xf32> to vector<2x16x128xf32>
    %40 = arith.addf %36, %39 : vector<2x16x128xf32>
    %cst_22 = arith.constant 0.000000e+00 : f32
    %41 = vector.broadcast %cst_22 : f32 to vector<2x16x128xf32>
    %42 = arith.maximumf %40, %41 : vector<2x16x128xf32>
    %cst_23 = arith.constant 0.000000e+00 : f32
    %43 = vector.broadcast %cst_23 : f32 to vector<2x16x8xf32>
    %44 = tpu.concatenate %43, %42, %43 in 2 : vector<2x16x8xf32>, vector<2x16x128xf32>, vector<2x16x8xf32> -> vector<2x16x144xf32>
    %cst_24 = arith.constant 0.000000e+00 : f32
    %45 = vector.broadcast %cst_24 : f32 to vector<2x1x144xf32>
    %46 = tpu.concatenate %45, %44, %45 in 1 : vector<2x1x144xf32>, vector<2x16x144xf32>, vector<2x1x144xf32> -> vector<2x18x144xf32>
    %47 = vector.extract_strided_slice %46 {offsets = [0, 0, 0], sizes = [2, 16, 144], strides = [1, 1, 1]} : vector<2x18x144xf32> to vector<2x16x144xf32>
    %48 = vector.shape_cast %47 : vector<2x16x144xf32> to vector<32x144xf32>
    %c0_25 = arith.constant 0 : index
    %c0_26 = arith.constant 0 : index
    %c0_27 = arith.constant 0 : index
    %49 = vector.load %arg7[%c0_25, %c0_26, %c0_27] : memref<3x144x128xf32, #tpu.memory_space<vmem>>, vector<1x144x128xf32>
    %50 = vector.shape_cast %49 : vector<1x144x128xf32> to vector<144x128xf32>
    %cst_28 = arith.constant dense<0.000000e+00> : vector<32x128xf32>
    %51 = tpu.matmul %48, %50, %cst_28 {dimension_numbers = #tpu.dot_dimension_numbers<[1], [0], [0], [1], [0, 0, 1, 1], [], []>, precision = #tpu.contract_precision<fp32>} : vector<32x144xf32>, vector<144x128xf32>, vector<32x128xf32> -> vector<32x128xf32>
    %52 = vector.extract_strided_slice %46 {offsets = [0, 1, 0], sizes = [2, 16, 144], strides = [1, 1, 1]} : vector<2x18x144xf32> to vector<2x16x144xf32>
    %53 = vector.shape_cast %52 : vector<2x16x144xf32> to vector<32x144xf32>
    %c1_29 = arith.constant 1 : index
    %c0_30 = arith.constant 0 : index
    %c0_31 = arith.constant 0 : index
    %54 = vector.load %arg7[%c1_29, %c0_30, %c0_31] : memref<3x144x128xf32, #tpu.memory_space<vmem>>, vector<1x144x128xf32>
    %55 = vector.shape_cast %54 : vector<1x144x128xf32> to vector<144x128xf32>
    %cst_32 = arith.constant dense<0.000000e+00> : vector<32x128xf32>
    %56 = tpu.matmul %53, %55, %cst_32 {dimension_numbers = #tpu.dot_dimension_numbers<[1], [0], [0], [1], [0, 0, 1, 1], [], []>, precision = #tpu.contract_precision<fp32>} : vector<32x144xf32>, vector<144x128xf32>, vector<32x128xf32> -> vector<32x128xf32>
    %57 = arith.addf %51, %56 : vector<32x128xf32>
    %58 = vector.extract_strided_slice %46 {offsets = [0, 2, 0], sizes = [2, 16, 144], strides = [1, 1, 1]} : vector<2x18x144xf32> to vector<2x16x144xf32>
    %59 = vector.shape_cast %58 : vector<2x16x144xf32> to vector<32x144xf32>
    %c2_33 = arith.constant 2 : index
    %c0_34 = arith.constant 0 : index
    %c0_35 = arith.constant 0 : index
    %60 = vector.load %arg7[%c2_33, %c0_34, %c0_35] : memref<3x144x128xf32, #tpu.memory_space<vmem>>, vector<1x144x128xf32>
    %61 = vector.shape_cast %60 : vector<1x144x128xf32> to vector<144x128xf32>
    %cst_36 = arith.constant dense<0.000000e+00> : vector<32x128xf32>
    %62 = tpu.matmul %59, %61, %cst_36 {dimension_numbers = #tpu.dot_dimension_numbers<[1], [0], [0], [1], [0, 0, 1, 1], [], []>, precision = #tpu.contract_precision<fp32>} : vector<32x144xf32>, vector<144x128xf32>, vector<32x128xf32> -> vector<32x128xf32>
    %63 = arith.addf %57, %62 : vector<32x128xf32>
    %64 = vector.shape_cast %10 : vector<2x16x64xf32> to vector<32x64xf32>
    %c0_37 = arith.constant 0 : index
    %c0_38 = arith.constant 0 : index
    %65 = vector.load %arg8[%c0_37, %c0_38] : memref<64x128xf32, #tpu.memory_space<vmem>>, vector<64x128xf32>
    %cst_39 = arith.constant dense<0.000000e+00> : vector<32x128xf32>
    %66 = tpu.matmul %64, %65, %cst_39 {dimension_numbers = #tpu.dot_dimension_numbers<[1], [0], [0], [1], [0, 0, 1, 1], [], []>, precision = #tpu.contract_precision<fp32>} : vector<32x64xf32>, vector<64x128xf32>, vector<32x128xf32> -> vector<32x128xf32>
    %67 = arith.addf %63, %66 : vector<32x128xf32>
    %68 = vector.shape_cast %67 : vector<32x128xf32> to vector<2x16x128xf32>
    %c0_40 = arith.constant 0 : index
    %c0_41 = arith.constant 0 : index
    %c0_42 = arith.constant 0 : index
    %69 = vector.load %arg9[%c0_40, %c0_41, %c0_42] : memref<2x16x128xf32, #tpu.memory_space<vmem>>, vector<2x16x128xf32>
    tpu.vector_store %arg9[%c0_40, %c0_41, %c0_42], %68 {strides = array<i32>} : memref<2x16x128xf32, #tpu.memory_space<vmem>>, vector<2x16x128xf32>,
    return
  }
  func.func @transform_0(%arg0: i32) -> (i32, i32, i32) {
    %c0_i32 = arith.constant 0 : i32
    %c0_i32_0 = arith.constant 0 : i32
    %c0_i32_1 = arith.constant 0 : i32
    return %arg0, %c0_i32, %c0_i32_0 : i32, i32, i32
  }
  func.func @transform_1(%arg0: i32) -> (i32, i32) {
    %c0_i32 = arith.constant 0 : i32
    %c0_i32_0 = arith.constant 0 : i32
    %c0_i32_1 = arith.constant 0 : i32
    return %c0_i32, %c0_i32_0 : i32, i32
  }
  func.func @transform_2(%arg0: i32) -> (i32, i32) {
    %c0_i32 = arith.constant 0 : i32
    %c0_i32_0 = arith.constant 0 : i32
    %c0_i32_1 = arith.constant 0 : i32
    return %c0_i32, %c0_i32_0 : i32, i32
  }
  func.func @transform_3(%arg0: i32) -> (i32, i32, i32) {
    %c0_i32 = arith.constant 0 : i32
    %c0_i32_0 = arith.constant 0 : i32
    %c0_i32_1 = arith.constant 0 : i32
    %c0_i32_2 = arith.constant 0 : i32
    return %c0_i32, %c0_i32_0, %c0_i32_1 : i32, i32, i32
  }
  func.func @transform_4(%arg0: i32) -> (i32, i32) {
    %c0_i32 = arith.constant 0 : i32
    %c0_i32_0 = arith.constant 0 : i32
    %c0_i32_1 = arith.constant 0 : i32
    return %c0_i32, %c0_i32_0 : i32, i32
  }
  func.func @transform_5(%arg0: i32) -> (i32, i32) {
    %c0_i32 = arith.constant 0 : i32
    %c0_i32_0 = arith.constant 0 : i32
    %c0_i32_1 = arith.constant 0 : i32
    return %c0_i32, %c0_i32_0 : i32, i32
  }
  func.func @transform_6(%arg0: i32) -> (i32, i32, i32) {
    %c0_i32 = arith.constant 0 : i32
    %c0_i32_0 = arith.constant 0 : i32
    %c0_i32_1 = arith.constant 0 : i32
    %c0_i32_2 = arith.constant 0 : i32
    return %c0_i32, %c0_i32_0, %c0_i32_1 : i32, i32, i32
  }
  func.func @transform_7(%arg0: i32) -> (i32, i32) {
    %c0_i32 = arith.constant 0 : i32
    %c0_i32_0 = arith.constant 0 : i32
    %c0_i32_1 = arith.constant 0 : i32
    return %c0_i32, %c0_i32_0 : i32, i32
  }
  func.func @transform_8(%arg0: i32) -> (i32, i32, i32) {
    %c0_i32 = arith.constant 0 : i32
    %c0_i32_0 = arith.constant 0 : i32
    %c0_i32_1 = arith.constant 0 : i32
    return %arg0, %c0_i32, %c0_i32_0 : i32, i32, i32
  }
}

</mosaic_0001>

<llo_original>
// kernel: tpu_custom_call.1
$region0: #{tpu_custom_call.1}
  #allocation0 [shape = 'u32[]', space=smem, size = 0x4, offset = 0x4, fixed_abs, tag = 'smem constant byte address 0x4 - core index']
  #allocation1 [shape = 'u32[144,128]{1,0:T(1,128)}', space=vmem, size = 0x12000, scoped, tag = 'internal scratch']
  %s0 = inlined_call_operand.hbm [shape: f32[4,16,64], index: 0, kind: input, shape index: {}]
  %s1 = inlined_call_operand.vmem [shape: f32[1,64], index: 1, kind: input, shape index: {}]
  %s2 = inlined_call_operand.vmem [shape: f32[1,64], index: 2, kind: input, shape index: {}]
  %s3 = inlined_call_operand.hbm [shape: f32[3,72,128], index: 3, kind: input, shape index: {}]
  %s4 = inlined_call_operand.vmem [shape: f32[1,128], index: 4, kind: input, shape index: {}]
  %s5 = inlined_call_operand.vmem [shape: f32[1,128], index: 5, kind: input, shape index: {}]
  %s6 = inlined_call_operand.hbm [shape: f32[3,144,128], index: 6, kind: input, shape index: {}]
  %s7 = inlined_call_operand.hbm [shape: f32[64,128], index: 7, kind: input, shape index: {}]
  %s8 = inlined_call_operand.hbm [shape: f32[4,16,128], index: 8, kind: output, shape index: {}]
  %s9 = sld [smem:[#allocation0]]
  $region81: #{tpu_custom_call.1} parent=0
    _
  %s11 = ssub.s32 1, %s9
  %s12 = scalar_select 0, %s11, %s9
  $region1: #{tpu_custom_call.1} parent=0
    #allocation2 [shape = 'u8[32768]{0}', space=vmem, size = 0x8000, scoped, tag = 'input window, operand 0']
    #allocation3 [shape = 's32[2]{0}', space=sflag, size = 0x8, scoped, tag = 'scoped memory for tpu_custom_call.1']
    #allocation4 [shape = 's32[2]{0}', space=sflag, size = 0x8, scoped, tag = 'scoped memory for tpu_custom_call.1']
    #allocation5 [shape = 'u8[110592]{0}', space=vmem, size = 0x1b000, scoped, tag = 'input window, operand 3, single buffered']
    #allocation6 [shape = 's32[1]{0}', space=sflag, size = 0x4, scoped, tag = 'scoped memory for tpu_custom_call.1']
    #allocation7 [shape = 'u8[221184]{0}', space=vmem, size = 0x36000, scoped, tag = 'input window, operand 6, single buffered']
    #allocation8 [shape = 'u8[32768]{0}', space=vmem, size = 0x8000, scoped, tag = 'input window, operand 7, single buffered']
    #allocation9 [shape = 's32[1]{0}', space=sflag, size = 0x4, scoped, tag = 'scoped memory for tpu_custom_call.1']
    #allocation10 [shape = 'u8[32768]{0}', space=vmem, size = 0x8000, scoped, tag = 'output window, operand 0']
    %13 = vsyncpa [#allocation3], 0
    %s14 = scalar_lea.sflag [#allocation3], 1
    %15 = vsyncpa %s14, 0
    %16 = vsyncpa [#allocation6], 0
    %17 = vsyncpa [#allocation9], 0
    %18 = vsyncpa [#allocation4], 0
    %s19 = scalar_lea.sflag [#allocation4], 1
    %20 = vsyncpa %s19, 0
    loop: start=0, step=1, limit=4
    $region2: #{tpu_custom_call.1} parent=1 // loop_pre_header
      _
    $region3: #{tpu_custom_call.1} parent=1 // loop_header
      %s22 = sphi 0, %s26
      %p23 = scmp.ge.s32.totalorder %s22, 4
      %s32 = sphi 0, %s34
      %s35 = sphi 0, %s32
      %s36 = sphi 0, %s35
      %s52 = sphi 0, %s36
      %s56 = sphi 0, %s56
      %s58 = sphi 0, %s56
      %s59 = sphi 0, %s58
      %s73 = sphi 0, %s59
      %s77 = sphi 0, %s77
      %s79 = sphi 0, %s77
      %s80 = sphi 0, %s79
      %s94 = sphi 0, %s80
      %s98 = sphi 0, %s98
      %s100 = sphi 0, %s98
      %s101 = sphi 0, %s100
      %s115 = sphi 0, %s101
      %s119 = sphi 0, %s119
      %s121 = sphi 0, %s119
      %s122 = sphi 0, %s121
      %s136 = sphi 0, %s122
      %s140 = sphi 0, %s140
      %s142 = sphi 0, %s140
      %s143 = sphi 0, %s142
      %s157 = sphi 0, %s143
      %s161 = sphi 0, %s161
      %s163 = sphi 0, %s161
      %s164 = sphi 0, %s163
      %s178 = sphi 0, %s164
      %s182 = sphi 0, %s182
      %s184 = sphi 0, %s182
      %s185 = sphi 0, %s184
      %s199 = sphi 0, %s185
      %s205 = sphi 0, %s207
      %s208 = sphi 0, %s205
      %s209 = sphi 0, %s208
      %s225 = sphi 0, %s209
    $region4: #{tpu_custom_call.1} parent=1 // loop_header_branch
      %25 = sbr.rel (%p23) target = $region8
    $region5: #{tpu_custom_call.1} parent=1 // loop_body
      %s27 = ssub.s32 %s22, 1
      %s28 = ssub.s32 %s22, 2
      %s29 = sadd.s32 %s22, 1
      %s30 = ssub.s32 %s22, %s29
      %p31 = scmp.eq.s32.totalorder %s30, 0
      %s33 = sadd.s32 %s32, 1
      %s34 = scalar_select %p31, %s32, %s33
      %p37 = pneg %p31
      %p38 = scmp.eq.s32.totalorder %s22, 1
      %p39 = por %p37, %p38
      %p40 = scmp.ne.s32.totalorder %s32, %s35
      %p41 = scmp.eq.s32.totalorder %s22, 0
      %p42 = por %p40, %p41
      %p43 = scmp.ne.s32.totalorder %s32, %s35
      %p44 = scmp.eq.s32.totalorder %s27, 1
      %p45 = por %p43, %p44
      %p46 = scmp.ne.s32.totalorder %s35, %s36
      %p47 = scmp.eq.s32.totalorder %s27, 0
      %p48 = por %p46, %p47
      %p49 = scmp.ne.s32.totalorder %s35, %s36
      %p50 = scmp.eq.s32.totalorder %s28, 1
      %p51 = por %p49, %p50
      %p53 = scmp.ne.s32.totalorder %s36, %s52
      %p54 = scmp.eq.s32.totalorder %s28, 0
      %p55 = por %p53, %p54
      %s57 = sadd.s32 %s56, 1
      %p60 = scmp.eq.s32.totalorder %s22, 1
      %p61 = scmp.ne.s32.totalorder %s56, %s58
      %p62 = scmp.eq.s32.totalorder %s22, 0
      %p63 = por %p61, %p62
      %p64 = scmp.ne.s32.totalorder %s56, %s58
      %p65 = scmp.eq.s32.totalorder %s27, 1
      %p66 = por %p64, %p65
      %p67 = scmp.ne.s32.totalorder %s58, %s59
      %p68 = scmp.eq.s32.totalorder %s27, 0
      %p69 = por %p67, %p68
      %p70 = scmp.ne.s32.totalorder %s58, %s59
      %p71 = scmp.eq.s32.totalorder %s28, 1
      %p72 = por %p70, %p71
      %p74 = scmp.ne.s32.totalorder %s59, %s73
      %p75 = scmp.eq.s32.totalorder %s28, 0
      %p76 = por %p74, %p75
      %s78 = sadd.s32 %s77, 1
      %p81 = scmp.eq.s32.totalorder %s22, 1
      %p82 = scmp.ne.s32.totalorder %s77, %s79
      %p83 = scmp.eq.s32.totalorder %s22, 0
      %p84 = por %p82, %p83
      %p85 = scmp.ne.s32.totalorder %s77, %s79
      %p86 = scmp.eq.s32.totalorder %s27, 1
      %p87 = por %p85, %p86
      %p88 = scmp.ne.s32.totalorder %s79, %s80
      %p89 = scmp.eq.s32.totalorder %s27, 0
      %p90 = por %p88, %p89
      %p91 = scmp.ne.s32.totalorder %s79, %s80
      %p92 = scmp.eq.s32.totalorder %s28, 1
      %p93 = por %p91, %p92
      %p95 = scmp.ne.s32.totalorder %s80, %s94
      %p96 = scmp.eq.s32.totalorder %s28, 0
      %p97 = por %p95, %p96
      %s99 = sadd.s32 %s98, 1
      %p102 = scmp.eq.s32.totalorder %s22, 1
      %p103 = scmp.ne.s32.totalorder %s98, %s100
      %p104 = scmp.eq.s32.totalorder %s22, 0
      %p105 = por %p103, %p104
      %p106 = scmp.ne.s32.totalorder %s98, %s100
      %p107 = scmp.eq.s32.totalorder %s27, 1
      %p108 = por %p106, %p107
      %p109 = scmp.ne.s32.totalorder %s100, %s101
      %p110 = scmp.eq.s32.totalorder %s27, 0
      %p111 = por %p109, %p110
      %p112 = scmp.ne.s32.totalorder %s100, %s101
      %p113 = scmp.eq.s32.totalorder %s28, 1
      %p114 = por %p112, %p113
      %p116 = scmp.ne.s32.totalorder %s101, %s115
      %p117 = scmp.eq.s32.totalorder %s28, 0
      %p118 = por %p116, %p117
      %s120 = sadd.s32 %s119, 1
      %p123 = scmp.eq.s32.totalorder %s22, 1
      %p124 = scmp.ne.s32.totalorder %s119, %s121
      %p125 = scmp.eq.s32.totalorder %s22, 0
      %p126 = por %p124, %p125
      %p127 = scmp.ne.s32.totalorder %s119, %s121
      %p128 = scmp.eq.s32.totalorder %s27, 1
      %p129 = por %p127, %p128
      %p130 = scmp.ne.s32.totalorder %s121, %s122
      %p131 = scmp.eq.s32.totalorder %s27, 0
      %p132 = por %p130, %p131
      %p133 = scmp.ne.s32.totalorder %s121, %s122
      %p134 = scmp.eq.s32.totalorder %s28, 1
      %p135 = por %p133, %p134
      %p137 = scmp.ne.s32.totalorder %s122, %s136
      %p138 = scmp.eq.s32.totalorder %s28, 0
      %p139 = por %p137, %p138
      %s141 = sadd.s32 %s140, 1
      %p144 = scmp.eq.s32.totalorder %s22, 1
      %p145 = scmp.ne.s32.totalorder %s140, %s142
      %p146 = scmp.eq.s32.totalorder %s22, 0
      %p147 = por %p145, %p146
      %p148 = scmp.ne.s32.totalorder %s140, %s142
      %p149 = scmp.eq.s32.totalorder %s27, 1
      %p150 = por %p148, %p149
      %p151 = scmp.ne.s32.totalorder %s142, %s143
      %p152 = scmp.eq.s32.totalorder %s27, 0
      %p153 = por %p151, %p152
      %p154 = scmp.ne.s32.totalorder %s142, %s143
      %p155 = scmp.eq.s32.totalorder %s28, 1
      %p156 = por %p154, %p155
      %p158 = scmp.ne.s32.totalorder %s143, %s157
      %p159 = scmp.eq.s32.totalorder %s28, 0
      %p160 = por %p158, %p159
      %s162 = sadd.s32 %s161, 1
      %p165 = scmp.eq.s32.totalorder %s22, 1
      %p166 = scmp.ne.s32.totalorder %s161, %s163
      %p167 = scmp.eq.s32.totalorder %s22, 0
      %p168 = por %p166, %p167
      %p169 = scmp.ne.s32.totalorder %s161, %s163
      %p170 = scmp.eq.s32.totalorder %s27, 1
      %p171 = por %p169, %p170
      %p172 = scmp.ne.s32.totalorder %s163, %s164
      %p173 = scmp.eq.s32.totalorder %s27, 0
      %p174 = por %p172, %p173
      %p175 = scmp.ne.s32.totalorder %s163, %s164
      %p176 = scmp.eq.s32.totalorder %s28, 1
      %p177 = por %p175, %p176
      %p179 = scmp.ne.s32.totalorder %s164, %s178
      %p180 = scmp.eq.s32.totalorder %s28, 0
      %p181 = por %p179, %p180
      %s183 = sadd.s32 %s182, 1
      %p186 = scmp.eq.s32.totalorder %s22, 1
      %p187 = scmp.ne.s32.totalorder %s182, %s184
      %p188 = scmp.eq.s32.totalorder %s22, 0
      %p189 = por %p187, %p188
      %p190 = scmp.ne.s32.totalorder %s182, %s184
      %p191 = scmp.eq.s32.totalorder %s27, 1
      %p192 = por %p190, %p191
      %p193 = scmp.ne.s32.totalorder %s184, %s185
      %p194 = scmp.eq.s32.totalorder %s27, 0
      %p195 = por %p193, %p194
      %p196 = scmp.ne.s32.totalorder %s184, %s185
      %p197 = scmp.eq.s32.totalorder %s28, 1
      %p198 = por %p196, %p197
      %p200 = scmp.ne.s32.totalorder %s185, %s199
      %p201 = scmp.eq.s32.totalorder %s28, 0
      %p202 = por %p200, %p201
      %s203 = ssub.s32 %s22, %s29
      %p204 = scmp.eq.s32.totalorder %s203, 0
      %s206 = sadd.s32 %s205, 1
      %s207 = scalar_select %p204, %s205, %s206
      %p210 = pneg %p204
      %p211 = scmp.eq.s32.totalorder %s22, 1
      %p212 = por %p210, %p211
      %p213 = scmp.ne.s32.totalorder %s205, %s208
      %p214 = scmp.eq.s32.totalorder %s22, 0
      %p215 = por %p213, %p214
      %p216 = scmp.ne.s32.totalorder %s205, %s208
      %p217 = scmp.eq.s32.totalorder %s27, 1
      %p218 = por %p216, %p217
      %p219 = scmp.ne.s32.totalorder %s208, %s209
      %p220 = scmp.eq.s32.totalorder %s27, 0
      %p221 = por %p219, %p220
      %p222 = scmp.ne.s32.totalorder %s208, %s209
      %p223 = scmp.eq.s32.totalorder %s28, 1
      %p224 = por %p222, %p223
      %p226 = scmp.ne.s32.totalorder %s209, %s225
      %p227 = scmp.eq.s32.totalorder %s28, 0
      %p228 = por %p226, %p227
      %p229 = scmp.le.s32.totalorder 1, %s22
      %p230 = scmp.lt.s32.totalorder %s22, 3
      %p231 = pnand %p229, %p230
      %p232 = pneg %p231
      // Predicated region
      $region9: #{tpu_custom_call.1} parent=5 // pred_check
        _
      $region10: #{tpu_custom_call.1} parent=5 // pred_check_branch
        %234 = sbr.rel (%p231) target = $region12
      $region11: #{tpu_custom_call.1} parent=5 // pred_region
        %s235 = ssub.s32 %s22, 1
        // Predicated region
        $region13: #{tpu_custom_call.1} parent=11 // pred_check
          %p236 = pneg %p69
        $region14: #{tpu_custom_call.1} parent=11 // pred_check_branch
          %238 = sbr.rel (%p236) target = $region16
        $region15: #{tpu_custom_call.1} parent=11 // pred_region
          _
        $region16: #{tpu_custom_call.1} parent=11 // pred_fallthru
          _
        // Predicated region
        $region17: #{tpu_custom_call.1} parent=11 // pred_check
          %p239 = pneg %p90
        $region18: #{tpu_custom_call.1} parent=11 // pred_check_branch
          %241 = sbr.rel (%p239) target = $region20
        $region19: #{tpu_custom_call.1} parent=11 // pred_region
          _
        $region20: #{tpu_custom_call.1} parent=11 // pred_fallthru
          _
        // Predicated region
        $region21: #{tpu_custom_call.1} parent=11 // pred_check
          %p242 = pneg %p111
        $region22: #{tpu_custom_call.1} parent=11 // pred_check_branch
          %244 = sbr.rel (%p242) target = $region24
        $region23: #{tpu_custom_call.1} parent=11 // pred_region
          %s246 = ssub.s32 3456, 3456
          %247 = vsyncadd [#allocation6], %s246
          %s248 = sshll.u32 [#allocation5], 4
          %s249 = int_to_ptr.vmem [resolvable:$true] %s248
          %254 = dma.hbm_to_vmem [thread:$0]  %s3, 3456, %s249, [#allocation6], 128, 128, 8
        $region24: #{tpu_custom_call.1} parent=11 // pred_fallthru
          _
        // Predicated region
        $region25: #{tpu_custom_call.1} parent=11 // pred_check
          %p255 = pneg %p132
        $region26: #{tpu_custom_call.1} parent=11 // pred_check_branch
          %257 = sbr.rel (%p255) target = $region28
        $region27: #{tpu_custom_call.1} parent=11 // pred_region
          _
        $region28: #{tpu_custom_call.1} parent=11 // pred_fallthru
          _
        // Predicated region
        $region29: #{tpu_custom_call.1} parent=11 // pred_check
          %p258 = pneg %p153
        $region30: #{tpu_custom_call.1} parent=11 // pred_check_branch
          %260 = sbr.rel (%p258) target = $region32
        $region31: #{tpu_custom_call.1} parent=11 // pred_region
          _
        $region32: #{tpu_custom_call.1} parent=11 // pred_fallthru
          _
        // Predicated region
        $region33: #{tpu_custom_call.1} parent=11 // pred_check
          %p261 = pneg %p174
        $region34: #{tpu_custom_call.1} parent=11 // pred_check_branch
          %263 = sbr.rel (%p261) target = $region36
        $region35: #{tpu_custom_call.1} parent=11 // pred_region
          %s265 = ssub.s32 6912, 6912
          %266 = vsyncadd [#allocation6], %s265
          %s267 = sshll.u32 [#allocation7], 4
          %s268 = int_to_ptr.vmem [resolvable:$true] %s267
          %273 = dma.hbm_to_vmem [thread:$0]  %s6, 6912, %s268, [#allocation6], 128, 128, 8
        $region36: #{tpu_custom_call.1} parent=11 // pred_fallthru
          _
        // Predicated region
        $region37: #{tpu_custom_call.1} parent=11 // pred_check
          %p274 = pneg %p195
        $region38: #{tpu_custom_call.1} parent=11 // pred_check_branch
          %276 = sbr.rel (%p274) target = $region40
        $region39: #{tpu_custom_call.1} parent=11 // pred_region
          %s278 = ssub.s32 1024, 1024
          %279 = vsyncadd [#allocation9], %s278
          %s280 = sshll.u32 [#allocation8], 4
          %s281 = int_to_ptr.vmem [resolvable:$true] %s280
          %286 = dma.hbm_to_vmem [thread:$0]  %s7, 1024, %s281, [#allocation9], 128, 128, 8
        $region40: #{tpu_custom_call.1} parent=11 // pred_fallthru
          _
      $region12: #{tpu_custom_call.1} parent=5 // pred_fallthru
        _
      %p287 = scmp.lt.s32.totalorder %s22, 2
      // Predicated region
      $region41: #{tpu_custom_call.1} parent=5 // pred_check
        %p288 = pneg %p287
      $region42: #{tpu_custom_call.1} parent=5 // pred_check_branch
        %290 = sbr.rel (%p288) target = $region44
      $region43: #{tpu_custom_call.1} parent=5 // pred_region
        // Predicated region
        $region45: #{tpu_custom_call.1} parent=43 // pred_check
          %p291 = pneg %p42
        $region46: #{tpu_custom_call.1} parent=43 // pred_check_branch
          %293 = sbr.rel (%p291) target = $region48
        $region47: #{tpu_custom_call.1} parent=43 // pred_region
          %s294 = sand.u32 %s32, 1
          %s295 = scalar_lea.sflag [#allocation3], %s294
          %s296 = sand.u32 %s32, 1
          %s297 = smul.addr %s296, 32
          %s298 = scalar_lea.vmem [#allocation2], %s297
          %s299 = smul.u32 2, %s22
          %s301 = ssub.s32 512, 512
          %302 = vsyncadd %s295, %s301
          %s303 = smul.addr %s299, 2
          %s304 = smul.addr %s303, 128
          %s305 = scalar_lea.hbm %s0, %s304
          %s306 = sshll.u32 %s298, 4
          %s307 = int_to_ptr.vmem [resolvable:$true] %s306
          %312 = dma.hbm_to_vmem [thread:$0]  %s305, 512, %s307, %s295, 128, 128, 8
        $region48: #{tpu_custom_call.1} parent=43 // pred_fallthru
          _
      $region44: #{tpu_custom_call.1} parent=5 // pred_fallthru
        _
      %p313 = scmp.le.s32.totalorder 1, %s22
      %p314 = scmp.lt.s32.totalorder %s22, 3
      %p315 = pnand %p313, %p314
      %p316 = pneg %p315
      // Predicated region
      $region49: #{tpu_custom_call.1} parent=5 // pred_check
        _
      $region50: #{tpu_custom_call.1} parent=5 // pred_check_branch
        %318 = sbr.rel (%p315) target = $region52
      $region51: #{tpu_custom_call.1} parent=5 // pred_region
        %s319 = ssub.s32 %s22, 1
        %s320 = sand.u32 %s35, 1
        %s321 = scalar_lea.sflag [#allocation3], %s320
        %s322 = sand.u32 %s35, 1
        %s323 = smul.addr %s322, 32
        %s324 = scalar_lea.vmem [#allocation2], %s323
        // Predicated region
        $region53: #{tpu_custom_call.1} parent=51 // pred_check
          %p325 = pneg %p48
        $region54: #{tpu_custom_call.1} parent=51 // pred_check_branch
          %327 = sbr.rel (%p325) target = $region56
        $region55: #{tpu_custom_call.1} parent=51 // pred_region
          %328 = dma.done %s321, 512
        $region56: #{tpu_custom_call.1} parent=51 // pred_fallthru
          _
        // Predicated region
        $region57: #{tpu_custom_call.1} parent=51 // pred_check
          %p329 = pneg %p111
        $region58: #{tpu_custom_call.1} parent=51 // pred_check_branch
          %331 = sbr.rel (%p329) target = $region60
        $region59: #{tpu_custom_call.1} parent=51 // pred_region
          %332 = dma.done [#allocation6], 3456
        $region60: #{tpu_custom_call.1} parent=51 // pred_fallthru
          _
        // Predicated region
        $region61: #{tpu_custom_call.1} parent=51 // pred_check
          %p333 = pneg %p174
        $region62: #{tpu_custom_call.1} parent=51 // pred_check_branch
          %335 = sbr.rel (%p333) target = $region64
        $region63: #{tpu_custom_call.1} parent=51 // pred_region
          %336 = dma.done [#allocation6], 6912
        $region64: #{tpu_custom_call.1} parent=51 // pred_fallthru
          _
        // Predicated region
        $region65: #{tpu_custom_call.1} parent=51 // pred_check
          %p337 = pneg %p195
        $region66: #{tpu_custom_call.1} parent=51 // pred_check_branch
          %339 = sbr.rel (%p337) target = $region68
        $region67: #{tpu_custom_call.1} parent=51 // pred_region
          %340 = dma.done [#allocation9], 1024
        $region68: #{tpu_custom_call.1} parent=51 // pred_fallthru
          _
        %s341 = sand.u32 %s35, 1
        %s342 = scalar_lea.sflag [#allocation3], %s341
        %s343 = sand.u32 %s35, 1
        %s344 = smul.addr %s343, 32
        %s345 = scalar_lea.vmem [#allocation2], %s344
        %p346 = pneg %p48
        %p347 = pneg %p45
        %p348 = pneg %p69
        %p349 = pneg %p66
        %p350 = pneg %p90
        %p351 = pneg %p87
        %p352 = pneg %p111
        %p353 = pneg %p108
        %p354 = pneg %p132
        %p355 = pneg %p129
        %p356 = pneg %p153
        %p357 = pneg %p150
        %p358 = pneg %p174
        %p359 = pneg %p171
        %p360 = pneg %p195
        %p361 = pneg %p192
        %p362 = pneg %p221
        %p363 = pneg %p218
        %s364 = sand.u32 %s208, 1
        %s365 = scalar_lea.sflag [#allocation4], %s364
        %s366 = sand.u32 %s208, 1
        %s367 = smul.addr %s366, 32
        %s368 = scalar_lea.vmem [#allocation10], %s367
        %s369 = smul.u32 2, %s27
        %s370 = smul.u32 2, %s27
        %v371 = vld [vmem:[%s324] sm:$0xff]
        %v372 = vld [vmem:[%s324 + $0x8] sm:$0xff]
        %v373 = vld [vmem:[%s324 + $0x10] sm:$0xff]
        %v374 = vld [vmem:[%s324 + $0x18] sm:$0xff]
        %v375 = vld [vmem:[%s1] sm:$0x1]
        %v377 = vlaneseq
        %v378 = vshrl.u32 %v377, 7
        %v379 = vsub.s32 0, %v378
        %v380 = vrot.slane %v375, %v379
        %v382 = vmul.f32 %v371, %v380
        %v383 = vmul.f32 %v372, %v380
        %v384 = vmul.f32 %v373, %v380
        %v385 = vmul.f32 %v374, %v380
        %v386 = vld [vmem:[%s2] sm:$0x1]
        %v388 = vlaneseq
        %v389 = vshrl.u32 %v388, 7
        %v390 = vsub.s32 0, %v389
        %v391 = vrot.slane %v386, %v390
        %v393 = vadd.f32 %v382, %v391
        %v394 = vadd.f32 %v383, %v391
        %v395 = vadd.f32 %v384, %v391
        %v396 = vadd.f32 %v385, %v391
        %v397 = vmax.f32 %v393, 0.0
        %v398 = vmax.f32 %v394, 0.0
        %v399 = vmax.f32 %v395, 0.0
        %v400 = vmax.f32 %v396, 0.0
        %405 = vrot.lane.b32.xlu0 %v397, 4
        %v406 = vpop.permute.xlu0 %405
        %407 = vrot.lane.b32.xlu0 %v398, 4
        %v408 = vpop.permute.xlu0 %407
        %409 = vrot.lane.b32.xlu0 %v399, 4
        %v410 = vpop.permute.xlu0 %409
        %411 = vrot.lane.b32.xlu0 %v400, 4
        %v412 = vpop.permute.xlu0 %411
        %vm417 = vcmask 31744
        %v418 = vsel %vm417, 0.0, %v406
        %v419 = vsel %vm417, 0.0, %v408
        %v420 = vsel %vm417, 0.0, %v410
        %v421 = vsel %vm417, 0.0, %v412
        %vm422 = vcmask 556032
        %v423 = vsel %vm422, %v418, 0.0
        %v424 = vsel %vm422, %v419, 0.0
        %v425 = vsel %vm422, %v420, 0.0
        %v426 = vsel %vm422, %v421, 0.0
        %vm431 = vcmask 1040384
        %v432 = vrot.slane %v423, 7
        %v433 = vrot.slane %v424, 7
        %v434 = vsel %vm431, %v432, %v433
        %v435 = vrot.slane %v425, 7
        %v436 = vrot.slane %v426, 7
        %v437 = vsel %vm431, %v435, %v436
        %v442 = vsel %vm431, 0.0, %v432
        %v443 = vsel %vm431, 0.0, %v435
        %v444 = vsel %vm431, %v433, 0.0
        %v445 = vsel %vm431, %v436, 0.0
        %v446 = vld [vmem:[#allocation5] sm:$0xff]
        %v447 = vld [vmem:[#allocation5 + $0x8] sm:$0xff]
        %v448 = vld [vmem:[#allocation5 + $0x10] sm:$0xff]
        %v449 = vld [vmem:[#allocation5 + $0x18] sm:$0xff]
        %v450 = vld [vmem:[#allocation5 + $0x20] sm:$0xff]
        %v451 = vld [vmem:[#allocation5 + $0x28] sm:$0xff]
        %v452 = vld [vmem:[#allocation5 + $0x30] sm:$0xff]
        %v453 = vld [vmem:[#allocation5 + $0x38] sm:$0xff]
        %v454 = vld [vmem:[#allocation5 + $0x40] sm:$0xff]
        %vm459 = vcmask 1046528
        %v460 = vrot.slane %v442, 1
        %v461 = vrot.slane %v434, 1
        %v462 = vsel %vm459, %v460, %v461
        %v463 = vrot.slane %v444, 1
        %v464 = vsel %vm459, %v461, %v463
        %v465 = vrot.slane %v443, 1
        %v466 = vrot.slane %v437, 1
        %v467 = vsel %vm459, %v465, %v466
        %v468 = vrot.slane %v445, 1
        %v469 = vsel %vm459, %v466, %v468
        %s470 = scalar_lea.vmem [#allocation5], 72
        %v471 = vld [vmem:[%s470] sm:$0xff]
        %v472 = vld [vmem:[%s470 + $0x8] sm:$0xff]
        %v473 = vld [vmem:[%s470 + $0x10] sm:$0xff]
        %v474 = vld [vmem:[%s470 + $0x18] sm:$0xff]
        %v475 = vld [vmem:[%s470 + $0x20] sm:$0xff]
        %v476 = vld [vmem:[%s470 + $0x28] sm:$0xff]
        %v477 = vld [vmem:[%s470 + $0x30] sm:$0xff]
        %v478 = vld [vmem:[%s470 + $0x38] sm:$0xff]
        %v479 = vld [vmem:[%s470 + $0x40] sm:$0xff]
        %vm480 = vcmask 588800
        %v481 = vsel %vm480, %v462, 0
        %v483 = vsel %vm480, %v464, 0
        %v485 = vsel %vm480, %v467, 0
        %v487 = vsel %vm480, %v469, 0
        %489 = vmatprep.subr.mxu0 0.0
        %v490 = vand.u32 %v471, 4294901760
        %491 = vmatpush1.msra.mxu0 %v490
        %492 = vmatprep.subr.mxu0 0.0
        %v493 = vand.u32 %v472, 4294901760
        %494 = vmatpush1.msra.mxu0 %v493
        %495 = vmatprep.subr.mxu0 0.0
        %v496 = vand.u32 %v473, 4294901760
        %497 = vmatpush1.msra.mxu0 %v496
        %498 = vmatprep.subr.mxu0 0.0
        %v499 = vand.u32 %v474, 4294901760
        %500 = vmatpush1.msra.mxu0 %v499
        %501 = vmatprep.subr.mxu0 0.0
        %v502 = vand.u32 %v475, 4294901760
        %503 = vmatpush1.msra.mxu0 %v502
        %504 = vmatprep.subr.mxu0 0.0
        %v505 = vand.u32 %v476, 4294901760
        %506 = vmatpush1.msra.mxu0 %v505
        %507 = vmatprep.subr.mxu0 0.0
        %v508 = vand.u32 %v477, 4294901760
        %509 = vmatpush1.msra.mxu0 %v508
        %510 = vmatprep.subr.mxu0 0.0
        %v511 = vand.u32 %v478, 4294901760
        %512 = vmatpush1.msra.mxu0 %v511
        %513 = vmatprep.subr.mxu0 0.0
        %v514 = vand.u32 %v479, 4294901760
        %515 = vmatpush1.msra.mxu0 %v514
        %516 = vmatprep.subr.mxu0 0.0
        %517 = vmatpush1.msra.mxu0 0.0
        %518 = vmatprep.subr.mxu0 0.0
        %519 = vmatpush1.msra.mxu0 0.0
        %520 = vmatprep.subr.mxu0 0.0
        %521 = vmatpush1.msra.mxu0 0.0
        %522 = vmatprep.subr.mxu0 0.0
        %523 = vmatpush1.msra.mxu0 0.0
        %524 = vmatprep.subr.mxu0 0.0
        %525 = vmatpush1.msra.mxu0 0.0
        %526 = vmatprep.subr.mxu0 0.0
        %527 = vmatpush1.msra.mxu0 0.0
        %528 = vmatprep.subr.mxu0 0.0
        %529 = vmatpush1.msra.mxu0 0.0
        %530 = vmatprep.subr.mxu0 0.0
        %531 = vmatpush1.msra.mxu0 0.0
        %532 = vmatprep.subr.mxu0 0.0
        %533 = vmatpush1.msra.mxu0 0.0
        %534 = vmatprep.subr.mxu0 0.0
        %535 = vmatpush1.msra.mxu0 0.0
        %536 = vmatprep.subr.mxu0 0.0
        %537 = vmatpush1.msra.mxu0 0.0
        %538 = vmatprep.subr.mxu0 0.0
        %539 = vmatpush1.msra.mxu0 0.0
        %540 = vmatprep.subr.mxu0 0.0
        %541 = vmatpush1.msra.mxu0 0.0
        %542 = vmatprep.subr.mxu0 0.0
        %543 = vmatpush1.msra.mxu0 0.0
        %544 = vmatprep.subr.mxu0 0.0
        %545 = vmatpush1.msra.mxu0 0.0
        %546 = vmatprep.subr.mxu0 0.0
        %547 = vmatpush1.msra.mxu0 0.0
        %548 = vmatprep.subr.mxu0 0.0
        %549 = vmatpush1.msra.mxu0 0.0
        %550 = vmatprep.subr.mxu0 0.0
        %551 = vmatpush1.msra.mxu0 0.0
        %552 = vmatprep.subr.mxu0 0.0
        %553 = vmatpush1.msra.mxu0 0.0
        %554 = vmatprep.subr.mxu0 0.0
        %555 = vmatpush1.msra.mxu0 0.0
        %556 = vmatprep.subr.mxu0 0.0
        %557 = vmatpush1.msra.mxu0 0.0
        %558 = vmatprep.subr.mxu0 0.0
        %559 = vmatpush1.msra.mxu0 0.0
        %560 = vmatprep.subr.mxu0 0.0
        %561 = vmatpush1.msra.mxu0 0.0
        %562 = vmatprep.mubr.f32.mxu0 0.0
        %v563 = vand.u32 %v481, 4294901760
        %v564 = vsub.f32 %v481, %v563
        %v565 = vand.u32 %v564, 4294901760
        %v566 = vsub.f32 %v564, %v565
        %v567 = vand.u32 %v566, 4294901760
        %568 = vmatmul.mubr.f32.gmra.mrb[0].mxu0 %v567
        %v569 = vpop.f32.mrb[0].mxu0
        %v570 = vadd.f32 0.0, %v569
        %v571 = vpop.f32.mrb[0].mxu0
        %572 = vmatprep.mubr.f32.mxu0 0.0
        %v573 = vand.u32 %v483, 4294901760
        %v574 = vsub.f32 %v483, %v573
        %v575 = vand.u32 %v574, 4294901760
        %v576 = vsub.f32 %v574, %v575
        %v577 = vand.u32 %v576, 4294901760
        %578 = vmatmul.mubr.f32.gmra.mrb[0].mxu0 %v577
        %v579 = vpop.f32.mrb[0].mxu0
        %v580 = vadd.f32 0.0, %v579
        %v581 = vpop.f32.mrb[0].mxu0
        %582 = vmatprep.mubr.f32.mxu0 0.0
        %v583 = vand.u32 %v485, 4294901760
        %v584 = vsub.f32 %v485, %v583
        %v585 = vand.u32 %v584, 4294901760
        %v586 = vsub.f32 %v584, %v585
        %v587 = vand.u32 %v586, 4294901760
        %588 = vmatmul.mubr.f32.gmra.mrb[0].mxu0 %v587
        %v589 = vpop.f32.mrb[0].mxu0
        %v590 = vadd.f32 0.0, %v589
        %v591 = vpop.f32.mrb[0].mxu0
        %592 = vmatprep.mubr.f32.mxu0 0.0
        %v593 = vand.u32 %v487, 4294901760
        %v594 = vsub.f32 %v487, %v593
        %v595 = vand.u32 %v594, 4294901760
        %v596 = vsub.f32 %v594, %v595
        %v597 = vand.u32 %v596, 4294901760
        %598 = vmatmul.mubr.f32.gmra.mrb[0].mxu0 %v597
        %v599 = vpop.f32.mrb[0].mxu0
        %v600 = vadd.f32 0.0, %v599
        %v601 = vpop.f32.mrb[0].mxu0
        %602 = vdwg.mxu0
        %603 = vmatprep.subr.mxu0 0.0
        %v604 = vand.u32 %v471, 4294901760
        %v605 = vsub.f32 %v471, %v604
        %v606 = vand.u32 %v605, 4294901760
        %v607 = vsub.f32 %v605, %v606
        %v608 = vand.u32 %v607, 4294901760
        %609 = vmatpush1.msra.mxu0 %v608
        %610 = vmatprep.subr.mxu0 0.0
        %v611 = vand.u32 %v472, 4294901760
        %v612 = vsub.f32 %v472, %v611
        %v613 = vand.u32 %v612, 4294901760
        %v614 = vsub.f32 %v612, %v613
        %v615 = vand.u32 %v614, 4294901760
        %616 = vmatpush1.msra.mxu0 %v615
        %617 = vmatprep.subr.mxu0 0.0
        %v618 = vand.u32 %v473, 4294901760
        %v619 = vsub.f32 %v473, %v618
        %v620 = vand.u32 %v619, 4294901760
        %v621 = vsub.f32 %v619, %v620
        %v622 = vand.u32 %v621, 4294901760
        %623 = vmatpush1.msra.mxu0 %v622
        %624 = vmatprep.subr.mxu0 0.0
        %v625 = vand.u32 %v474, 4294901760
        %v626 = vsub.f32 %v474, %v625
        %v627 = vand.u32 %v626, 4294901760
        %v628 = vsub.f32 %v626, %v627
        %v629 = vand.u32 %v628, 4294901760
        %630 = vmatpush1.msra.mxu0 %v629
        %631 = vmatprep.subr.mxu0 0.0
        %v632 = vand.u32 %v475, 4294901760
        %v633 = vsub.f32 %v475, %v632
        %v634 = vand.u32 %v633, 4294901760
        %v635 = vsub.f32 %v633, %v634
        %v636 = vand.u32 %v635, 4294901760
        %637 = vmatpush1.msra.mxu0 %v636
        %638 = vmatprep.subr.mxu0 0.0
        %v639 = vand.u32 %v476, 4294901760
        %v640 = vsub.f32 %v476, %v639
        %v641 = vand.u32 %v640, 4294901760
        %v642 = vsub.f32 %v640, %v641
        %v643 = vand.u32 %v642, 4294901760
        %644 = vmatpush1.msra.mxu0 %v643
        %645 = vmatprep.subr.mxu0 0.0
        %v646 = vand.u32 %v477, 4294901760
        %v647 = vsub.f32 %v477, %v646
        %v648 = vand.u32 %v647, 4294901760
        %v649 = vsub.f32 %v647, %v648
        %v650 = vand.u32 %v649, 4294901760
        %651 = vmatpush1.msra.mxu0 %v650
        %652 = vmatprep.subr.mxu0 0.0
        %v653 = vand.u32 %v478, 4294901760
        %v654 = vsub.f32 %v478, %v653
        %v655 = vand.u32 %v654, 4294901760
        %v656 = vsub.f32 %v654, %v655
        %v657 = vand.u32 %v656, 4294901760
        %658 = vmatpush1.msra.mxu0 %v657
        %659 = vmatprep.subr.mxu0 0.0
        %v660 = vand.u32 %v479, 4294901760
        %v661 = vsub.f32 %v479, %v660
        %v662 = vand.u32 %v661, 4294901760
        %v663 = vsub.f32 %v661, %v662
        %v664 = vand.u32 %v663, 4294901760
        %665 = vmatpush1.msra.mxu0 %v664
        %666 = vmatprep.subr.mxu0 0.0
        %667 = vmatpush1.msra.mxu0 0.0
        %668 = vmatprep.subr.mxu0 0.0
        %669 = vmatpush1.msra.mxu0 0.0
        %670 = vmatprep.subr.mxu0 0.0
        %671 = vmatpush1.msra.mxu0 0.0
        %672 = vmatprep.subr.mxu0 0.0
        %673 = vmatpush1.msra.mxu0 0.0
        %674 = vmatprep.subr.mxu0 0.0
        %675 = vmatpush1.msra.mxu0 0.0
        %676 = vmatprep.subr.mxu0 0.0
        %677 = vmatpush1.msra.mxu0 0.0
        %678 = vmatprep.subr.mxu0 0.0
        %679 = vmatpush1.msra.mxu0 0.0
        %680 = vmatprep.subr.mxu0 0.0
        %681 = vmatpush1.msra.mxu0 0.0
        %682 = vmatprep.subr.mxu0 0.0
        %683 = vmatpush1.msra.mxu0 0.0
        %684 = vmatprep.subr.mxu0 0.0
        %685 = vmatpush1.msra.mxu0 0.0
        %686 = vmatprep.subr.mxu0 0.0
        %687 = vmatpush1.msra.mxu0 0.0
        %688 = vmatprep.subr.mxu0 0.0
        %689 = vmatpush1.msra.mxu0 0.0
        %690 = vmatprep.subr.mxu0 0.0
        %691 = vmatpush1.msra.mxu0 0.0
        %692 = vmatprep.subr.mxu0 0.0
        %693 = vmatpush1.msra.mxu0 0.0
        %694 = vmatprep.subr.mxu0 0.0
        %695 = vmatpush1.msra.mxu0 0.0
        %696 = vmatprep.subr.mxu0 0.0
        %697 = vmatpush1.msra.mxu0 0.0
        %698 = vmatprep.subr.mxu0 0.0
        %699 = vmatpush1.msra.mxu0 0.0
        %700 = vmatprep.subr.mxu0 0.0
        %701 = vmatpush1.msra.mxu0 0.0
        %702 = vmatprep.subr.mxu0 0.0
        %703 = vmatpush1.msra.mxu0 0.0
        %704 = vmatprep.subr.mxu0 0.0
        %705 = vmatpush1.msra.mxu0 0.0
        %706 = vmatprep.subr.mxu0 0.0
        %707 = vmatpush1.msra.mxu0 0.0
        %708 = vmatprep.subr.mxu0 0.0
        %709 = vmatpush1.msra.mxu0 0.0
        %710 = vmatprep.subr.mxu0 0.0
        %711 = vmatpush1.msra.mxu0 0.0
        %712 = vmatprep.mubr.f32.mxu0 0.0
        %v713 = vand.u32 %v481, 4294901760
        %714 = vmatmul.mubr.f32.gmra.mrb[0].mxu0 %v713
        %v715 = vpop.f32.mrb[0].mxu0
        %v716 = vadd.f32 %v570, %v715
        %v717 = vpop.f32.mrb[0].mxu0
        %718 = vmatprep.mubr.f32.mxu0 0.0
        %v719 = vand.u32 %v483, 4294901760
        %720 = vmatmul.mubr.f32.gmra.mrb[0].mxu0 %v719
        %v721 = vpop.f32.mrb[0].mxu0
        %v722 = vadd.f32 %v580, %v721
        %v723 = vpop.f32.mrb[0].mxu0
        %724 = vmatprep.mubr.f32.mxu0 0.0
        %v725 = vand.u32 %v485, 4294901760
        %726 = vmatmul.mubr.f32.gmra.mrb[0].mxu0 %v725
        %v727 = vpop.f32.mrb[0].mxu0
        %v728 = vadd.f32 %v590, %v727
        %v729 = vpop.f32.mrb[0].mxu0
        %730 = vmatprep.mubr.f32.mxu0 0.0
        %v731 = vand.u32 %v487, 4294901760
        %732 = vmatmul.mubr.f32.gmra.mrb[0].mxu0 %v731
        %v733 = vpop.f32.mrb[0].mxu0
        %v734 = vadd.f32 %v600, %v733
        %v735 = vpop.f32.mrb[0].mxu0
        %736 = vdwg.mxu0
        %737 = vmatprep.subr.mxu0 0.0
        %v738 = vand.u32 %v471, 4294901760
        %v739 = vsub.f32 %v471, %v738
        %740 = vmatpush1.msra.mxu0 %v739
        %741 = vmatprep.subr.mxu0 0.0
        %v742 = vand.u32 %v472, 4294901760
        %v743 = vsub.f32 %v472, %v742
        %744 = vmatpush1.msra.mxu0 %v743
        %745 = vmatprep.subr.mxu0 0.0
        %v746 = vand.u32 %v473, 4294901760
        %v747 = vsub.f32 %v473, %v746
        %748 = vmatpush1.msra.mxu0 %v747
        %749 = vmatprep.subr.mxu0 0.0
        %v750 = vand.u32 %v474, 4294901760
        %v751 = vsub.f32 %v474, %v750
        %752 = vmatpush1.msra.mxu0 %v751
        %753 = vmatprep.subr.mxu0 0.0
        %v754 = vand.u32 %v475, 4294901760
        %v755 = vsub.f32 %v475, %v754
        %756 = vmatpush1.msra.mxu0 %v755
        %757 = vmatprep.subr.mxu0 0.0
        %v758 = vand.u32 %v476, 4294901760
        %v759 = vsub.f32 %v476, %v758
        %760 = vmatpush1.msra.mxu0 %v759
        %761 = vmatprep.subr.mxu0 0.0
        %v762 = vand.u32 %v477, 4294901760
        %v763 = vsub.f32 %v477, %v762
        %764 = vmatpush1.msra.mxu0 %v763
        %765 = vmatprep.subr.mxu0 0.0
        %v766 = vand.u32 %v478, 4294901760
        %v767 = vsub.f32 %v478, %v766
        %768 = vmatpush1.msra.mxu0 %v767
        %769 = vmatprep.subr.mxu0 0.0
        %v770 = vand.u32 %v479, 4294901760
        %v771 = vsub.f32 %v479, %v770
        %772 = vmatpush1.msra.mxu0 %v771
        %773 = vmatprep.subr.mxu0 0.0
        %774 = vmatpush1.msra.mxu0 0.0
        %775 = vmatprep.subr.mxu0 0.0
        %776 = vmatpush1.msra.mxu0 0.0
        %777 = vmatprep.subr.mxu0 0.0
        %778 = vmatpush1.msra.mxu0 0.0
        %779 = vmatprep.subr.mxu0 0.0
        %780 = vmatpush1.msra.mxu0 0.0
        %781 = vmatprep.subr.mxu0 0.0
        %782 = vmatpush1.msra.mxu0 0.0
        %783 = vmatprep.subr.mxu0 0.0
        %784 = vmatpush1.msra.mxu0 0.0
        %785 = vmatprep.subr.mxu0 0.0
        %786 = vmatpush1.msra.mxu0 0.0
        %787 = vmatprep.subr.mxu0 0.0
        %788 = vmatpush1.msra.mxu0 0.0
        %789 = vmatprep.subr.mxu0 0.0
        %790 = vmatpush1.msra.mxu0 0.0
        %791 = vmatprep.subr.mxu0 0.0
        %792 = vmatpush1.msra.mxu0 0.0
        %793 = vmatprep.subr.mxu0 0.0
        %794 = vmatpush1.msra.mxu0 0.0
        %795 = vmatprep.subr.mxu0 0.0
        %796 = vmatpush1.msra.mxu0 0.0
        %797 = vmatprep.subr.mxu0 0.0
        %798 = vmatpush1.msra.mxu0 0.0
        %799 = vmatprep.subr.mxu0 0.0
        %800 = vmatpush1.msra.mxu0 0.0
        %801 = vmatprep.subr.mxu0 0.0
        %802 = vmatpush1.msra.mxu0 0.0
        %803 = vmatprep.subr.mxu0 0.0
        %804 = vmatpush1.msra.mxu0 0.0
        %805 = vmatprep.subr.mxu0 0.0
        %806 = vmatpush1.msra.mxu0 0.0
        %807 = vmatprep.subr.mxu0 0.0
        %808 = vmatpush1.msra.mxu0 0.0
        %809 = vmatprep.subr.mxu0 0.0
        %810 = vmatpush1.msra.mxu0 0.0
        %811 = vmatprep.subr.mxu0 0.0
        %812 = vmatpush1.msra.mxu0 0.0
        %813 = vmatprep.subr.mxu0 0.0
        %814 = vmatpush1.msra.mxu0 0.0
        %815 = vmatprep.subr.mxu0 0.0
        %816 = vmatpush1.msra.mxu0 0.0
        %817 = vmatprep.subr.mxu0 0.0
        %818 = vmatpush1.msra.mxu0 0.0
        %819 = vmatprep.mubr.f32.mxu0 0.0
        %v820 = vand.u32 %v481, 4294901760
        %v821 = vsub.f32 %v481, %v820
        %822 = vmatmul.mubr.f32.gmra.mrb[0].mxu0 %v821
        %v823 = vpop.f32.mrb[0].mxu0
        %v824 = vadd.f32 %v716, %v823
        %v825 = vpop.f32.mrb[0].mxu0
        %826 = vmatprep.mubr.f32.mxu0 0.0
        %v827 = vand.u32 %v483, 4294901760
        %v828 = vsub.f32 %v483, %v827
        %829 = vmatmul.mubr.f32.gmra.mrb[0].mxu0 %v828
        %v830 = vpop.f32.mrb[0].mxu0
        %v831 = vadd.f32 %v722, %v830
        %v832 = vpop.f32.mrb[0].mxu0
        %833 = vmatprep.mubr.f32.mxu0 0.0
        %v834 = vand.u32 %v485, 4294901760
        %v835 = vsub.f32 %v485, %v834
        %836 = vmatmul.mubr.f32.gmra.mrb[0].mxu0 %v835
        %v837 = vpop.f32.mrb[0].mxu0
        %v838 = vadd.f32 %v728, %v837
        %v839 = vpop.f32.mrb[0].mxu0
        %840 = vmatprep.mubr.f32.mxu0 0.0
        %v841 = vand.u32 %v487, 4294901760
        %v842 = vsub.f32 %v487, %v841
        %843 = vmatmul.mubr.f32.gmra.mrb[0].mxu0 %v842
        %v844 = vpop.f32.mrb[0].mxu0
        %v845 = vadd.f32 %v734, %v844
        %v846 = vpop.f32.mrb[0].mxu0
        %847 = vdwg.mxu0
        %848 = vmatprep.subr.mxu0 0.0
        %v849 = vand.u32 %v471, 4294901760
        %850 = vmatpush1.msra.mxu0 %v849
        %851 = vmatprep.subr.mxu0 0.0
        %v852 = vand.u32 %v472, 4294901760
        %853 = vmatpush1.msra.mxu0 %v852
        %854 = vmatprep.subr.mxu0 0.0
        %v855 = vand.u32 %v473, 4294901760
        %856 = vmatpush1.msra.mxu0 %v855
        %857 = vmatprep.subr.mxu0 0.0
        %v858 = vand.u32 %v474, 4294901760
        %859 = vmatpush1.msra.mxu0 %v858
        %860 = vmatprep.subr.mxu0 0.0
        %v861 = vand.u32 %v475, 4294901760
        %862 = vmatpush1.msra.mxu0 %v861
        %863 = vmatprep.subr.mxu0 0.0
        %v864 = vand.u32 %v476, 4294901760
        %865 = vmatpush1.msra.mxu0 %v864
        %866 = vmatprep.subr.mxu0 0.0
        %v867 = vand.u32 %v477, 4294901760
        %868 = vmatpush1.msra.mxu0 %v867
        %869 = vmatprep.subr.mxu0 0.0
        %v870 = vand.u32 %v478, 4294901760
        %871 = vmatpush1.msra.mxu0 %v870
        %872 = vmatprep.subr.mxu0 0.0
        %v873 = vand.u32 %v479, 4294901760
        %874 = vmatpush1.msra.mxu0 %v873
        %875 = vmatprep.subr.mxu0 0.0
        %876 = vmatpush1.msra.mxu0 0.0
        %877 = vmatprep.subr.mxu0 0.0
        %878 = vmatpush1.msra.mxu0 0.0
        %879 = vmatprep.subr.mxu0 0.0
        %880 = vmatpush1.msra.mxu0 0.0
        %881 = vmatprep.subr.mxu0 0.0
        %882 = vmatpush1.msra.mxu0 0.0
        %883 = vmatprep.subr.mxu0 0.0
        %884 = vmatpush1.msra.mxu0 0.0
        %885 = vmatprep.subr.mxu0 0.0
        %886 = vmatpush1.msra.mxu0 0.0
        %887 = vmatprep.subr.mxu0 0.0
        %888 = vmatpush1.msra.mxu0 0.0
        %889 = vmatprep.subr.mxu0 0.0
        %890 = vmatpush1.msra.mxu0 0.0
        %891 = vmatprep.subr.mxu0 0.0
        %892 = vmatpush1.msra.mxu0 0.0
        %893 = vmatprep.subr.mxu0 0.0
        %894 = vmatpush1.msra.mxu0 0.0
        %895 = vmatprep.subr.mxu0 0.0
        %896 = vmatpush1.msra.mxu0 0.0
        %897 = vmatprep.subr.mxu0 0.0
        %898 = vmatpush1.msra.mxu0 0.0
        %899 = vmatprep.subr.mxu0 0.0
        %900 = vmatpush1.msra.mxu0 0.0
        %901 = vmatprep.subr.mxu0 0.0
        %902 = vmatpush1.msra.mxu0 0.0
        %903 = vmatprep.subr.mxu0 0.0
        %904 = vmatpush1.msra.mxu0 0.0
        %905 = vmatprep.subr.mxu0 0.0
        %906 = vmatpush1.msra.mxu0 0.0
        %907 = vmatprep.subr.mxu0 0.0
        %908 = vmatpush1.msra.mxu0 0.0
        %909 = vmatprep.subr.mxu0 0.0
        %910 = vmatpush1.msra.mxu0 0.0
        %911 = vmatprep.subr.mxu0 0.0
        %912 = vmatpush1.msra.mxu0 0.0
        %913 = vmatprep.subr.mxu0 0.0
        %914 = vmatpush1.msra.mxu0 0.0
        %915 = vmatprep.subr.mxu0 0.0
        %916 = vmatpush1.msra.mxu0 0.0
        %917 = vmatprep.subr.mxu0 0.0
        %918 = vmatpush1.msra.mxu0 0.0
        %919 = vmatprep.subr.mxu0 0.0
        %920 = vmatpush1.msra.mxu0 0.0
        %921 = vmatprep.mubr.f32.mxu0 0.0
        %v922 = vand.u32 %v481, 4294901760
        %v923 = vsub.f32 %v481, %v922
        %v924 = vand.u32 %v923, 4294901760
        %925 = vmatmul.mubr.f32.gmra.mrb[0].mxu0 %v924
        %v926 = vpop.f32.mrb[0].mxu0
        %v927 = vadd.f32 %v824, %v926
        %v928 = vpop.f32.mrb[0].mxu0
        %929 = vmatprep.mubr.f32.mxu0 0.0
        %v930 = vand.u32 %v483, 4294901760
        %v931 = vsub.f32 %v483, %v930
        %v932 = vand.u32 %v931, 4294901760
        %933 = vmatmul.mubr.f32.gmra.mrb[0].mxu0 %v932
        %v934 = vpop.f32.mrb[0].mxu0
        %v935 = vadd.f32 %v831, %v934
        %v936 = vpop.f32.mrb[0].mxu0
        %937 = vmatprep.mubr.f32.mxu0 0.0
        %v938 = vand.u32 %v485, 4294901760
        %v939 = vsub.f32 %v485, %v938
        %v940 = vand.u32 %v939, 4294901760
        %941 = vmatmul.mubr.f32.gmra.mrb[0].mxu0 %v940
        %v942 = vpop.f32.mrb[0].mxu0
        %v943 = vadd.f32 %v838, %v942
        %v944 = vpop.f32.mrb[0].mxu0
        %945 = vmatprep.mubr.f32.mxu0 0.0
        %v946 = vand.u32 %v487, 4294901760
        %v947 = vsub.f32 %v487, %v946
        %v948 = vand.u32 %v947, 4294901760
        %949 = vmatmul.mubr.f32.gmra.mrb[0].mxu0 %v948
        %v950 = vpop.f32.mrb[0].mxu0
        %v951 = vadd.f32 %v845, %v950
        %v952 = vpop.f32.mrb[0].mxu0
        %953 = vdwg.mxu0
        %954 = vmatprep.subr.mxu0 0.0
        %v955 = vand.u32 %v471, 4294901760
        %v956 = vsub.f32 %v471, %v955
        %v957 = vand.u32 %v956, 4294901760
        %958 = vmatpush1.msra.mxu0 %v957
        %959 = vmatprep.subr.mxu0 0.0
        %v960 = vand.u32 %v472, 4294901760
        %v961 = vsub.f32 %v472, %v960
        %v962 = vand.u32 %v961, 4294901760
        %963 = vmatpush1.msra.mxu0 %v962
        %964 = vmatprep.subr.mxu0 0.0
        %v965 = vand.u32 %v473, 4294901760
        %v966 = vsub.f32 %v473, %v965
        %v967 = vand.u32 %v966, 4294901760
        %968 = vmatpush1.msra.mxu0 %v967
        %969 = vmatprep.subr.mxu0 0.0
        %v970 = vand.u32 %v474, 4294901760
        %v971 = vsub.f32 %v474, %v970
        %v972 = vand.u32 %v971, 4294901760
        %973 = vmatpush1.msra.mxu0 %v972
        %974 = vmatprep.subr.mxu0 0.0
        %v975 = vand.u32 %v475, 4294901760
        %v976 = vsub.f32 %v475, %v975
        %v977 = vand.u32 %v976, 4294901760
        %978 = vmatpush1.msra.mxu0 %v977
        %979 = vmatprep.subr.mxu0 0.0
        %v980 = vand.u32 %v476, 4294901760
        %v981 = vsub.f32 %v476, %v980
        %v982 = vand.u32 %v981, 4294901760
        %983 = vmatpush1.msra.mxu0 %v982
        %984 = vmatprep.subr.mxu0 0.0
        %v985 = vand.u32 %v477, 4294901760
        %v986 = vsub.f32 %v477, %v985
        %v987 = vand.u32 %v986, 4294901760
        %988 = vmatpush1.msra.mxu0 %v987
        %989 = vmatprep.subr.mxu0 0.0
        %v990 = vand.u32 %v478, 4294901760
        %v991 = vsub.f32 %v478, %v990
        %v992 = vand.u32 %v991, 4294901760
        %993 = vmatpush1.msra.mxu0 %v992
        %994 = vmatprep.subr.mxu0 0.0
        %v995 = vand.u32 %v479, 4294901760
        %v996 = vsub.f32 %v479, %v995
        %v997 = vand.u32 %v996, 4294901760
        %998 = vmatpush1.msra.mxu0 %v997
        %999 = vmatprep.subr.mxu0 0.0
        %1000 = vmatpush1.msra.mxu0 0.0
        %1001 = vmatprep.subr.mxu0 0.0
        %1002 = vmatpush1.msra.mxu0 0.0
        %1003 = vmatprep.subr.mxu0 0.0
        %1004 = vmatpush1.msra.mxu0 0.0
        %1005 = vmatprep.subr.mxu0 0.0
        %1006 = vmatpush1.msra.mxu0 0.0
        %1007 = vmatprep.subr.mxu0 0.0
        %1008 = vmatpush1.msra.mxu0 0.0
        %1009 = vmatprep.subr.mxu0 0.0
        %1010 = vmatpush1.msra.mxu0 0.0
        %1011 = vmatprep.subr.mxu0 0.0
        %1012 = vmatpush1.msra.mxu0 0.0
        %1013 = vmatprep.subr.mxu0 0.0
        %1014 = vmatpush1.msra.mxu0 0.0
        %1015 = vmatprep.subr.mxu0 0.0
        %1016 = vmatpush1.msra.mxu0 0.0
        %1017 = vmatprep.subr.mxu0 0.0
        %1018 = vmatpush1.msra.mxu0 0.0
        %1019 = vmatprep.subr.mxu0 0.0
        %1020 = vmatpush1.msra.mxu0 0.0
        %1021 = vmatprep.subr.mxu0 0.0
        %1022 = vmatpush1.msra.mxu0 0.0
        %1023 = vmatprep.subr.mxu0 0.0
        %1024 = vmatpush1.msra.mxu0 0.0
        %1025 = vmatprep.subr.mxu0 0.0
        %1026 = vmatpush1.msra.mxu0 0.0
        %1027 = vmatprep.subr.mxu0 0.0
        %1028 = vmatpush1.msra.mxu0 0.0
        %1029 = vmatprep.subr.mxu0 0.0
        %1030 = vmatpush1.msra.mxu0 0.0
        %1031 = vmatprep.subr.mxu0 0.0
        %1032 = vmatpush1.msra.mxu0 0.0
        %1033 = vmatprep.subr.mxu0 0.0
        %1034 = vmatpush1.msra.mxu0 0.0
        %1035 = vmatprep.subr.mxu0 0.0
        %1036 = vmatpush1.msra.mxu0 0.0
        %1037 = vmatprep.subr.mxu0 0.0
        %1038 = vmatpush1.msra.mxu0 0.0
        %1039 = vmatprep.subr.mxu0 0.0
        %1040 = vmatpush1.msra.mxu0 0.0
        %1041 = vmatprep.subr.mxu0 0.0
        %1042 = vmatpush1.msra.mxu0 0.0
        %1043 = vmatprep.subr.mxu0 0.0
        %1044 = vmatpush1.msra.mxu0 0.0
        %1045 = vmatprep.mubr.f32.mxu0 0.0
        %v1046 = vand.u32 %v481, 4294901760
        %1047 = vmatmul.mubr.f32.gmra.mrb[0].mxu0 %v1046
        %v1048 = vpop.f32.mrb[0].mxu0
        %v1049 = vadd.f32 %v927, %v1048
        %v1050 = vpop.f32.mrb[0].mxu0
        %1051 = vmatprep.mubr.f32.mxu0 0.0
        %v1052 = vand.u32 %v483, 4294901760
        %1053 = vmatmul.mubr.f32.gmra.mrb[0].mxu0 %v1052
        %v1054 = vpop.f32.mrb[0].mxu0
        %v1055 = vadd.f32 %v935, %v1054
        %v1056 = vpop.f32.mrb[0].mxu0
        %1057 = vmatprep.mubr.f32.mxu0 0.0
        %v1058 = vand.u32 %v485, 4294901760
        %1059 = vmatmul.mubr.f32.gmra.mrb[0].mxu0 %v1058
        %v1060 = vpop.f32.mrb[0].mxu0
        %v1061 = vadd.f32 %v943, %v1060
        %v1062 = vpop.f32.mrb[0].mxu0
        %1063 = vmatprep.mubr.f32.mxu0 0.0
        %v1064 = vand.u32 %v487, 4294901760
        %1065 = vmatmul.mubr.f32.gmra.mrb[0].mxu0 %v1064
        %v1066 = vpop.f32.mrb[0].mxu0
        %v1067 = vadd.f32 %v951, %v1066
        %v1068 = vpop.f32.mrb[0].mxu0
        %1069 = vdwg.mxu0
        %1070 = vmatprep.subr.mxu0 0.0
        %v1071 = vand.u32 %v471, 4294901760
        %1072 = vmatpush1.msra.mxu0 %v1071
        %1073 = vmatprep.subr.mxu0 0.0
        %v1074 = vand.u32 %v472, 4294901760
        %1075 = vmatpush1.msra.mxu0 %v1074
        %1076 = vmatprep.subr.mxu0 0.0
        %v1077 = vand.u32 %v473, 4294901760
        %1078 = vmatpush1.msra.mxu0 %v1077
        %1079 = vmatprep.subr.mxu0 0.0
        %v1080 = vand.u32 %v474, 4294901760
        %1081 = vmatpush1.msra.mxu0 %v1080
        %1082 = vmatprep.subr.mxu0 0.0
        %v1083 = vand.u32 %v475, 4294901760
        %1084 = vmatpush1.msra.mxu0 %v1083
        %1085 = vmatprep.subr.mxu0 0.0
        %v1086 = vand.u32 %v476, 4294901760
        %1087 = vmatpush1.msra.mxu0 %v1086
        %1088 = vmatprep.subr.mxu0 0.0
        %v1089 = vand.u32 %v477, 4294901760
        %1090 = vmatpush1.msra.mxu0 %v1089
        %1091 = vmatprep.subr.mxu0 0.0
        %v1092 = vand.u32 %v478, 4294901760
        %1093 = vmatpush1.msra.mxu0 %v1092
        %1094 = vmatprep.subr.mxu0 0.0
        %v1095 = vand.u32 %v479, 4294901760
        %1096 = vmatpush1.msra.mxu0 %v1095
        %1097 = vmatprep.subr.mxu0 0.0
        %1098 = vmatpush1.msra.mxu0 0.0
        %1099 = vmatprep.subr.mxu0 0.0
        %1100 = vmatpush1.msra.mxu0 0.0
        %1101 = vmatprep.subr.mxu0 0.0
        %1102 = vmatpush1.msra.mxu0 0.0
        %1103 = vmatprep.subr.mxu0 0.0
        %1104 = vmatpush1.msra.mxu0 0.0
        %1105 = vmatprep.subr.mxu0 0.0
        %1106 = vmatpush1.msra.mxu0 0.0
        %1107 = vmatprep.subr.mxu0 0.0
        %1108 = vmatpush1.msra.mxu0 0.0
        %1109 = vmatprep.subr.mxu0 0.0
        %1110 = vmatpush1.msra.mxu0 0.0
        %1111 = vmatprep.subr.mxu0 0.0
        %1112 = vmatpush1.msra.mxu0 0.0
        %1113 = vmatprep.subr.mxu0 0.0
        %1114 = vmatpush1.msra.mxu0 0.0
        %1115 = vmatprep.subr.mxu0 0.0
        %1116 = vmatpush1.msra.mxu0 0.0
        %1117 = vmatprep.subr.mxu0 0.0
        %1118 = vmatpush1.msra.mxu0 0.0
        %1119 = vmatprep.subr.mxu0 0.0
        %1120 = vmatpush1.msra.mxu0 0.0
        %1121 = vmatprep.subr.mxu0 0.0
        %1122 = vmatpush1.msra.mxu0 0.0
        %1123 = vmatprep.subr.mxu0 0.0
        %1124 = vmatpush1.msra.mxu0 0.0
        %1125 = vmatprep.subr.mxu0 0.0
        %1126 = vmatpush1.msra.mxu0 0.0
        %1127 = vmatprep.subr.mxu0 0.0
        %1128 = vmatpush1.msra.mxu0 0.0
        %1129 = vmatprep.subr.mxu0 0.0
        %1130 = vmatpush1.msra.mxu0 0.0
        %1131 = vmatprep.subr.mxu0 0.0
        %1132 = vmatpush1.msra.mxu0 0.0
        %1133 = vmatprep.subr.mxu0 0.0
        %1134 = vmatpush1.msra.mxu0 0.0
        %1135 = vmatprep.subr.mxu0 0.0
        %1136 = vmatpush1.msra.mxu0 0.0
        %1137 = vmatprep.subr.mxu0 0.0
        %1138 = vmatpush1.msra.mxu0 0.0
        %1139 = vmatprep.subr.mxu0 0.0
        %1140 = vmatpush1.msra.mxu0 0.0
        %1141 = vmatprep.subr.mxu0 0.0
        %1142 = vmatpush1.msra.mxu0 0.0
        %1143 = vmatprep.mubr.f32.mxu0 0.0
        %v1144 = vand.u32 %v481, 4294901760
        %1145 = vmatmul.mubr.f32.gmra.mrb[0].mxu0 %v1144
        %v1146 = vpop.f32.mrb[0].mxu0
        %v1147 = vadd.f32 %v1049, %v1146
        %v1148 = vpop.f32.mrb[0].mxu0
        %1149 = vmatprep.mubr.f32.mxu0 0.0
        %v1150 = vand.u32 %v483, 4294901760
        %1151 = vmatmul.mubr.f32.gmra.mrb[0].mxu0 %v1150
        %v1152 = vpop.f32.mrb[0].mxu0
        %v1153 = vadd.f32 %v1055, %v1152
        %v1154 = vpop.f32.mrb[0].mxu0
        %1155 = vmatprep.mubr.f32.mxu0 0.0
        %v1156 = vand.u32 %v485, 4294901760
        %1157 = vmatmul.mubr.f32.gmra.mrb[0].mxu0 %v1156
        %v1158 = vpop.f32.mrb[0].mxu0
        %v1159 = vadd.f32 %v1061, %v1158
        %v1160 = vpop.f32.mrb[0].mxu0
        %1161 = vmatprep.mubr.f32.mxu0 0.0
        %v1162 = vand.u32 %v487, 4294901760
        %1163 = vmatmul.mubr.f32.gmra.mrb[0].mxu0 %v1162
        %v1164 = vpop.f32.mrb[0].mxu0
        %v1165 = vadd.f32 %v1067, %v1164
        %v1166 = vpop.f32.mrb[0].mxu0
        %1167 = vdwg.mxu0
        %v1168 = vsel %vm480, %v442, 0
        %v1170 = vsel %vm480, %v434, 0
        %v1172 = vsel %vm480, %v443, 0
        %v1174 = vsel %vm480, %v437, 0
        %1176 = vmatprep.subr.mxu0 0.0
        %v1177 = vand.u32 %v446, 4294901760
        %1178 = vmatpush1.msra.mxu0 %v1177
        %1179 = vmatprep.subr.mxu0 0.0
        %v1180 = vand.u32 %v447, 4294901760
        %1181 = vmatpush1.msra.mxu0 %v1180
        %1182 = vmatprep.subr.mxu0 0.0
        %v1183 = vand.u32 %v448, 4294901760
        %1184 = vmatpush1.msra.mxu0 %v1183
        %1185 = vmatprep.subr.mxu0 0.0
        %v1186 = vand.u32 %v449, 4294901760
        %1187 = vmatpush1.msra.mxu0 %v1186
        %1188 = vmatprep.subr.mxu0 0.0
        %v1189 = vand.u32 %v450, 4294901760
        %1190 = vmatpush1.msra.mxu0 %v1189
        %1191 = vmatprep.subr.mxu0 0.0
        %v1192 = vand.u32 %v451, 4294901760
        %1193 = vmatpush1.msra.mxu0 %v1192
        %1194 = vmatprep.subr.mxu0 0.0
        %v1195 = vand.u32 %v452, 4294901760
        %1196 = vmatpush1.msra.mxu0 %v1195
        %1197 = vmatprep.subr.mxu0 0.0
        %v1198 = vand.u32 %v453, 4294901760
        %1199 = vmatpush1.msra.mxu0 %v1198
        %1200 = vmatprep.subr.mxu0 0.0
        %v1201 = vand.u32 %v454, 4294901760
        %1202 = vmatpush1.msra.mxu0 %v1201
        %1203 = vmatprep.subr.mxu0 0.0
        %1204 = vmatpush1.msra.mxu0 0.0
        %1205 = vmatprep.subr.mxu0 0.0
        %1206 = vmatpush1.msra.mxu0 0.0
        %1207 = vmatprep.subr.mxu0 0.0
        %1208 = vmatpush1.msra.mxu0 0.0
        %1209 = vmatprep.subr.mxu0 0.0
        %1210 = vmatpush1.msra.mxu0 0.0
        %1211 = vmatprep.subr.mxu0 0.0
        %1212 = vmatpush1.msra.mxu0 0.0
        %1213 = vmatprep.subr.mxu0 0.0
        %1214 = vmatpush1.msra.mxu0 0.0
        %1215 = vmatprep.subr.mxu0 0.0
        %1216 = vmatpush1.msra.mxu0 0.0
        %1217 = vmatprep.subr.mxu0 0.0
        %1218 = vmatpush1.msra.mxu0 0.0
        %1219 = vmatprep.subr.mxu0 0.0
        %1220 = vmatpush1.msra.mxu0 0.0
        %1221 = vmatprep.subr.mxu0 0.0
        %1222 = vmatpush1.msra.mxu0 0.0
        %1223 = vmatprep.subr.mxu0 0.0
        %1224 = vmatpush1.msra.mxu0 0.0
        %1225 = vmatprep.subr.mxu0 0.0
        %1226 = vmatpush1.msra.mxu0 0.0
        %1227 = vmatprep.subr.mxu0 0.0
        %1228 = vmatpush1.msra.mxu0 0.0
        %1229 = vmatprep.subr.mxu0 0.0
        %1230 = vmatpush1.msra.mxu0 0.0
        %1231 = vmatprep.subr.mxu0 0.0
        %1232 = vmatpush1.msra.mxu0 0.0
        %1233 = vmatprep.subr.mxu0 0.0
        %1234 = vmatpush1.msra.mxu0 0.0
        %1235 = vmatprep.subr.mxu0 0.0
        %1236 = vmatpush1.msra.mxu0 0.0
        %1237 = vmatprep.subr.mxu0 0.0
        %1238 = vmatpush1.msra.mxu0 0.0
        %1239 = vmatprep.subr.mxu0 0.0
        %1240 = vmatpush1.msra.mxu0 0.0
        %1241 = vmatprep.subr.mxu0 0.0
        %1242 = vmatpush1.msra.mxu0 0.0
        %1243 = vmatprep.subr.mxu0 0.0
        %1244 = vmatpush1.msra.mxu0 0.0
        %1245 = vmatprep.subr.mxu0 0.0
        %1246 = vmatpush1.msra.mxu0 0.0
        %1247 = vmatprep.subr.mxu0 0.0
        %1248 = vmatpush1.msra.mxu0 0.0
        %1249 = vmatprep.mubr.f32.mxu0 0.0
        %v1250 = vand.u32 %v1168, 4294901760
        %v1251 = vsub.f32 %v1168, %v1250
        %v1252 = vand.u32 %v1251, 4294901760
        %v1253 = vsub.f32 %v1251, %v1252
        %v1254 = vand.u32 %v1253, 4294901760
        %1255 = vmatmul.mubr.f32.gmra.mrb[0].mxu0 %v1254
        %v1256 = vpop.f32.mrb[0].mxu0
        %v1257 = vadd.f32 %v1147, %v1256
        %v1258 = vpop.f32.mrb[0].mxu0
        %1259 = vmatprep.mubr.f32.mxu0 0.0
        %v1260 = vand.u32 %v1170, 4294901760
        %v1261 = vsub.f32 %v1170, %v1260
        %v1262 = vand.u32 %v1261, 4294901760
        %v1263 = vsub.f32 %v1261, %v1262
        %v1264 = vand.u32 %v1263, 4294901760
        %1265 = vmatmul.mubr.f32.gmra.mrb[0].mxu0 %v1264
        %v1266 = vpop.f32.mrb[0].mxu0
        %v1267 = vadd.f32 %v1153, %v1266
        %v1268 = vpop.f32.mrb[0].mxu0
        %1269 = vmatprep.mubr.f32.mxu0 0.0
        %v1270 = vand.u32 %v1172, 4294901760
        %v1271 = vsub.f32 %v1172, %v1270
        %v1272 = vand.u32 %v1271, 4294901760
        %v1273 = vsub.f32 %v1271, %v1272
        %v1274 = vand.u32 %v1273, 4294901760
        %1275 = vmatmul.mubr.f32.gmra.mrb[0].mxu0 %v1274
        %v1276 = vpop.f32.mrb[0].mxu0
        %v1277 = vadd.f32 %v1159, %v1276
        %v1278 = vpop.f32.mrb[0].mxu0
        %1279 = vmatprep.mubr.f32.mxu0 0.0
        %v1280 = vand.u32 %v1174, 4294901760
        %v1281 = vsub.f32 %v1174, %v1280
        %v1282 = vand.u32 %v1281, 4294901760
        %v1283 = vsub.f32 %v1281, %v1282
        %v1284 = vand.u32 %v1283, 4294901760
        %1285 = vmatmul.mubr.f32.gmra.mrb[0].mxu0 %v1284
        %v1286 = vpop.f32.mrb[0].mxu0
        %v1287 = vadd.f32 %v1165, %v1286
        %v1288 = vpop.f32.mrb[0].mxu0
        %1289 = vdwg.mxu0
        %1290 = vmatprep.subr.mxu0 0.0
        %v1291 = vand.u32 %v446, 4294901760
        %v1292 = vsub.f32 %v446, %v1291
        %v1293 = vand.u32 %v1292, 4294901760
        %v1294 = vsub.f32 %v1292, %v1293
        %v1295 = vand.u32 %v1294, 4294901760
        %1296 = vmatpush1.msra.mxu0 %v1295
        %1297 = vmatprep.subr.mxu0 0.0
        %v1298 = vand.u32 %v447, 4294901760
        %v1299 = vsub.f32 %v447, %v1298
        %v1300 = vand.u32 %v1299, 4294901760
        %v1301 = vsub.f32 %v1299, %v1300
        %v1302 = vand.u32 %v1301, 4294901760
        %1303 = vmatpush1.msra.mxu0 %v1302
        %1304 = vmatprep.subr.mxu0 0.0
        %v1305 = vand.u32 %v448, 4294901760
        %v1306 = vsub.f32 %v448, %v1305
        %v1307 = vand.u32 %v1306, 4294901760
        %v1308 = vsub.f32 %v1306, %v1307
        %v1309 = vand.u32 %v1308, 4294901760
        %1310 = vmatpush1.msra.mxu0 %v1309
        %1311 = vmatprep.subr.mxu0 0.0
        %v1312 = vand.u32 %v449, 4294901760
        %v1313 = vsub.f32 %v449, %v1312
        %v1314 = vand.u32 %v1313, 4294901760
        %v1315 = vsub.f32 %v1313, %v1314
        %v1316 = vand.u32 %v1315, 4294901760
        %1317 = vmatpush1.msra.mxu0 %v1316
        %1318 = vmatprep.subr.mxu0 0.0
        %v1319 = vand.u32 %v450, 4294901760
        %v1320 = vsub.f32 %v450, %v1319
        %v1321 = vand.u32 %v1320, 4294901760
        %v1322 = vsub.f32 %v1320, %v1321
        %v1323 = vand.u32 %v1322, 4294901760
        %1324 = vmatpush1.msra.mxu0 %v1323
        %1325 = vmatprep.subr.mxu0 0.0
        %v1326 = vand.u32 %v451, 4294901760
        %v1327 = vsub.f32 %v451, %v1326
        %v1328 = vand.u32 %v1327, 4294901760
        %v1329 = vsub.f32 %v1327, %v1328
        %v1330 = vand.u32 %v1329, 4294901760
        %1331 = vmatpush1.msra.mxu0 %v1330
        %1332 = vmatprep.subr.mxu0 0.0
        %v1333 = vand.u32 %v452, 4294901760
        %v1334 = vsub.f32 %v452, %v1333
        %v1335 = vand.u32 %v1334, 4294901760
        %v1336 = vsub.f32 %v1334, %v1335
        %v1337 = vand.u32 %v1336, 4294901760
        %1338 = vmatpush1.msra.mxu0 %v1337
        %1339 = vmatprep.subr.mxu0 0.0
        %v1340 = vand.u32 %v453, 4294901760
        %v1341 = vsub.f32 %v453, %v1340
        %v1342 = vand.u32 %v1341, 4294901760
        %v1343 = vsub.f32 %v1341, %v1342
        %v1344 = vand.u32 %v1343, 4294901760
        %1345 = vmatpush1.msra.mxu0 %v1344
        %1346 = vmatprep.subr.mxu0 0.0
        %v1347 = vand.u32 %v454, 4294901760
        %v1348 = vsub.f32 %v454, %v1347
        %v1349 = vand.u32 %v1348, 4294901760
        %v1350 = vsub.f32 %v1348, %v1349
        %v1351 = vand.u32 %v1350, 4294901760
        %1352 = vmatpush1.msra.mxu0 %v1351
        %1353 = vmatprep.subr.mxu0 0.0
        %1354 = vmatpush1.msra.mxu0 0.0
        %1355 = vmatprep.subr.mxu0 0.0
        %1356 = vmatpush1.msra.mxu0 0.0
        %1357 = vmatprep.subr.mxu0 0.0
        %1358 = vmatpush1.msra.mxu0 0.0
        %1359 = vmatprep.subr.mxu0 0.0
        %1360 = vmatpush1.msra.mxu0 0.0
        %1361 = vmatprep.subr.mxu0 0.0
        %1362 = vmatpush1.msra.mxu0 0.0
        %1363 = vmatprep.subr.mxu0 0.0
        %1364 = vmatpush1.msra.mxu0 0.0
        %1365 = vmatprep.subr.mxu0 0.0
        %1366 = vmatpush1.msra.mxu0 0.0
        %1367 = vmatprep.subr.mxu0 0.0
        %1368 = vmatpush1.msra.mxu0 0.0
        %1369 = vmatprep.subr.mxu0 0.0
        %1370 = vmatpush1.msra.mxu0 0.0
        %1371 = vmatprep.subr.mxu0 0.0
        %1372 = vmatpush1.msra.mxu0 0.0
        %1373 = vmatprep.subr.mxu0 0.0
        %1374 = vmatpush1.msra.mxu0 0.0
        %1375 = vmatprep.subr.mxu0 0.0
        %1376 = vmatpush1.msra.mxu0 0.0
        %1377 = vmatprep.subr.mxu0 0.0
        %1378 = vmatpush1.msra.mxu0 0.0
        %1379 = vmatprep.subr.mxu0 0.0
        %1380 = vmatpush1.msra.mxu0 0.0
        %1381 = vmatprep.subr.mxu0 0.0
        %1382 = vmatpush1.msra.mxu0 0.0
        %1383 = vmatprep.subr.mxu0 0.0
        %1384 = vmatpush1.msra.mxu0 0.0
        %1385 = vmatprep.subr.mxu0 0.0
        %1386 = vmatpush1.msra.mxu0 0.0
        %1387 = vmatprep.subr.mxu0 0.0
        %1388 = vmatpush1.msra.mxu0 0.0
        %1389 = vmatprep.subr.mxu0 0.0
        %1390 = vmatpush1.msra.mxu0 0.0
        %1391 = vmatprep.subr.mxu0 0.0
        %1392 = vmatpush1.msra.mxu0 0.0
        %1393 = vmatprep.subr.mxu0 0.0
        %1394 = vmatpush1.msra.mxu0 0.0
        %1395 = vmatprep.subr.mxu0 0.0
        %1396 = vmatpush1.msra.mxu0 0.0
        %1397 = vmatprep.subr.mxu0 0.0
        %1398 = vmatpush1.msra.mxu0 0.0
        %1399 = vmatprep.mubr.f32.mxu0 0.0
        %v1400 = vand.u32 %v1168, 4294901760
        %1401 = vmatmul.mubr.f32.gmra.mrb[0].mxu0 %v1400
        %v1402 = vpop.f32.mrb[0].mxu0
        %v1403 = vadd.f32 %v1257, %v1402
        %v1404 = vpop.f32.mrb[0].mxu0
        %1405 = vmatprep.mubr.f32.mxu0 0.0
        %v1406 = vand.u32 %v1170, 4294901760
        %1407 = vmatmul.mubr.f32.gmra.mrb[0].mxu0 %v1406
        %v1408 = vpop.f32.mrb[0].mxu0
        %v1409 = vadd.f32 %v1267, %v1408
        %v1410 = vpop.f32.mrb[0].mxu0
        %1411 = vmatprep.mubr.f32.mxu0 0.0
        %v1412 = vand.u32 %v1172, 4294901760
        %1413 = vmatmul.mubr.f32.gmra.mrb[0].mxu0 %v1412
        %v1414 = vpop.f32.mrb[0].mxu0
        %v1415 = vadd.f32 %v1277, %v1414
        %v1416 = vpop.f32.mrb[0].mxu0
        %1417 = vmatprep.mubr.f32.mxu0 0.0
        %v1418 = vand.u32 %v1174, 4294901760
        %1419 = vmatmul.mubr.f32.gmra.mrb[0].mxu0 %v1418
        %v1420 = vpop.f32.mrb[0].mxu0
        %v1421 = vadd.f32 %v1287, %v1420
        %v1422 = vpop.f32.mrb[0].mxu0
        %1423 = vdwg.mxu0
        %1424 = vmatprep.subr.mxu0 0.0
        %v1425 = vand.u32 %v446, 4294901760
        %v1426 = vsub.f32 %v446, %v1425
        %1427 = vmatpush1.msra.mxu0 %v1426
        %1428 = vmatprep.subr.mxu0 0.0
        %v1429 = vand.u32 %v447, 4294901760
        %v1430 = vsub.f32 %v447, %v1429
        %1431 = vmatpush1.msra.mxu0 %v1430
        %1432 = vmatprep.subr.mxu0 0.0
        %v1433 = vand.u32 %v448, 4294901760
        %v1434 = vsub.f32 %v448, %v1433
        %1435 = vmatpush1.msra.mxu0 %v1434
        %1436 = vmatprep.subr.mxu0 0.0
        %v1437 = vand.u32 %v449, 4294901760
        %v1438 = vsub.f32 %v449, %v1437
        %1439 = vmatpush1.msra.mxu0 %v1438
        %1440 = vmatprep.subr.mxu0 0.0
        %v1441 = vand.u32 %v450, 4294901760
        %v1442 = vsub.f32 %v450, %v1441
        %1443 = vmatpush1.msra.mxu0 %v1442
        %1444 = vmatprep.subr.mxu0 0.0
        %v1445 = vand.u32 %v451, 4294901760
        %v1446 = vsub.f32 %v451, %v1445
        %1447 = vmatpush1.msra.mxu0 %v1446
        %1448 = vmatprep.subr.mxu0 0.0
        %v1449 = vand.u32 %v452, 4294901760
        %v1450 = vsub.f32 %v452, %v1449
        %1451 = vmatpush1.msra.mxu0 %v1450
        %1452 = vmatprep.subr.mxu0 0.0
        %v1453 = vand.u32 %v453, 4294901760
        %v1454 = vsub.f32 %v453, %v1453
        %1455 = vmatpush1.msra.mxu0 %v1454
        %1456 = vmatprep.subr.mxu0 0.0
        %v1457 = vand.u32 %v454, 4294901760
        %v1458 = vsub.f32 %v454, %v1457
        %1459 = vmatpush1.msra.mxu0 %v1458
        %1460 = vmatprep.subr.mxu0 0.0
        %1461 = vmatpush1.msra.mxu0 0.0
        %1462 = vmatprep.subr.mxu0 0.0
        %1463 = vmatpush1.msra.mxu0 0.0
        %1464 = vmatprep.subr.mxu0 0.0
        %1465 = vmatpush1.msra.mxu0 0.0
        %1466 = vmatprep.subr.mxu0 0.0
        %1467 = vmatpush1.msra.mxu0 0.0
        %1468 = vmatprep.subr.mxu0 0.0
        %1469 = vmatpush1.msra.mxu0 0.0
        %1470 = vmatprep.subr.mxu0 0.0
        %1471 = vmatpush1.msra.mxu0 0.0
        %1472 = vmatprep.subr.mxu0 0.0
        %1473 = vmatpush1.msra.mxu0 0.0
        %1474 = vmatprep.subr.mxu0 0.0
        %1475 = vmatpush1.msra.mxu0 0.0
        %1476 = vmatprep.subr.mxu0 0.0
        %1477 = vmatpush1.msra.mxu0 0.0
        %1478 = vmatprep.subr.mxu0 0.0
        %1479 = vmatpush1.msra.mxu0 0.0
        %1480 = vmatprep.subr.mxu0 0.0
        %1481 = vmatpush1.msra.mxu0 0.0
        %1482 = vmatprep.subr.mxu0 0.0
        %1483 = vmatpush1.msra.mxu0 0.0
        %1484 = vmatprep.subr.mxu0 0.0
        %1485 = vmatpush1.msra.mxu0 0.0
        %1486 = vmatprep.subr.mxu0 0.0
        %1487 = vmatpush1.msra.mxu0 0.0
        %1488 = vmatprep.subr.mxu0 0.0
        %1489 = vmatpush1.msra.mxu0 0.0
        %1490 = vmatprep.subr.mxu0 0.0
        %1491 = vmatpush1.msra.mxu0 0.0
        %1492 = vmatprep.subr.mxu0 0.0
        %1493 = vmatpush1.msra.mxu0 0.0
        %1494 = vmatprep.subr.mxu0 0.0
        %1495 = vmatpush1.msra.mxu0 0.0
        %1496 = vmatprep.subr.mxu0 0.0
        %1497 = vmatpush1.msra.mxu0 0.0
        %1498 = vmatprep.subr.mxu0 0.0
        %1499 = vmatpush1.msra.mxu0 0.0
        %1500 = vmatprep.subr.mxu0 0.0
        %1501 = vmatpush1.msra.mxu0 0.0
        %1502 = vmatprep.subr.mxu0 0.0
        %1503 = vmatpush1.msra.mxu0 0.0
        %1504 = vmatprep.subr.mxu0 0.0
        %1505 = vmatpush1.msra.mxu0 0.0
        %1506 = vmatprep.mubr.f32.mxu0 0.0
        %v1507 = vand.u32 %v1168, 4294901760
        %v1508 = vsub.f32 %v1168, %v1507
        %1509 = vmatmul.mubr.f32.gmra.mrb[0].mxu0 %v1508
        %v1510 = vpop.f32.mrb[0].mxu0
        %v1511 = vadd.f32 %v1403, %v1510
        %v1512 = vpop.f32.mrb[0].mxu0
        %1513 = vmatprep.mubr.f32.mxu0 0.0
        %v1514 = vand.u32 %v1170, 4294901760
        %v1515 = vsub.f32 %v1170, %v1514
        %1516 = vmatmul.mubr.f32.gmra.mrb[0].mxu0 %v1515
        %v1517 = vpop.f32.mrb[0].mxu0
        %v1518 = vadd.f32 %v1409, %v1517
        %v1519 = vpop.f32.mrb[0].mxu0
        %1520 = vmatprep.mubr.f32.mxu0 0.0
        %v1521 = vand.u32 %v1172, 4294901760
        %v1522 = vsub.f32 %v1172, %v1521
        %1523 = vmatmul.mubr.f32.gmra.mrb[0].mxu0 %v1522
        %v1524 = vpop.f32.mrb[0].mxu0
        %v1525 = vadd.f32 %v1415, %v1524
        %v1526 = vpop.f32.mrb[0].mxu0
        %1527 = vmatprep.mubr.f32.mxu0 0.0
        %v1528 = vand.u32 %v1174, 4294901760
        %v1529 = vsub.f32 %v1174, %v1528
        %1530 = vmatmul.mubr.f32.gmra.mrb[0].mxu0 %v1529
        %v1531 = vpop.f32.mrb[0].mxu0
        %v1532 = vadd.f32 %v1421, %v1531
        %v1533 = vpop.f32.mrb[0].mxu0
        %1534 = vdwg.mxu0
        %1535 = vmatprep.subr.mxu0 0.0
        %v1536 = vand.u32 %v446, 4294901760
        %1537 = vmatpush1.msra.mxu0 %v1536
        %1538 = vmatprep.subr.mxu0 0.0
        %v1539 = vand.u32 %v447, 4294901760
        %1540 = vmatpush1.msra.mxu0 %v1539
        %1541 = vmatprep.subr.mxu0 0.0
        %v1542 = vand.u32 %v448, 4294901760
        %1543 = vmatpush1.msra.mxu0 %v1542
        %1544 = vmatprep.subr.mxu0 0.0
        %v1545 = vand.u32 %v449, 4294901760
        %1546 = vmatpush1.msra.mxu0 %v1545
        %1547 = vmatprep.subr.mxu0 0.0
        %v1548 = vand.u32 %v450, 4294901760
        %1549 = vmatpush1.msra.mxu0 %v1548
        %1550 = vmatprep.subr.mxu0 0.0
        %v1551 = vand.u32 %v451, 4294901760
        %1552 = vmatpush1.msra.mxu0 %v1551
        %1553 = vmatprep.subr.mxu0 0.0
        %v1554 = vand.u32 %v452, 4294901760
        %1555 = vmatpush1.msra.mxu0 %v1554
        %1556 = vmatprep.subr.mxu0 0.0
        %v1557 = vand.u32 %v453, 4294901760
        %1558 = vmatpush1.msra.mxu0 %v1557
        %1559 = vmatprep.subr.mxu0 0.0
        %v1560 = vand.u32 %v454, 4294901760
        %1561 = vmatpush1.msra.mxu0 %v1560
        %1562 = vmatprep.subr.mxu0 0.0
        %1563 = vmatpush1.msra.mxu0 0.0
        %1564 = vmatprep.subr.mxu0 0.0
        %1565 = vmatpush1.msra.mxu0 0.0
        %1566 = vmatprep.subr.mxu0 0.0
        %1567 = vmatpush1.msra.mxu0 0.0
        %1568 = vmatprep.subr.mxu0 0.0
        %1569 = vmatpush1.msra.mxu0 0.0
        %1570 = vmatprep.subr.mxu0 0.0
        %1571 = vmatpush1.msra.mxu0 0.0
        %1572 = vmatprep.subr.mxu0 0.0
        %1573 = vmatpush1.msra.mxu0 0.0
        %1574 = vmatprep.subr.mxu0 0.0
        %1575 = vmatpush1.msra.mxu0 0.0
        %1576 = vmatprep.subr.mxu0 0.0
        %1577 = vmatpush1.msra.mxu0 0.0
        %1578 = vmatprep.subr.mxu0 0.0
        %1579 = vmatpush1.msra.mxu0 0.0
        %1580 = vmatprep.subr.mxu0 0.0
        %1581 = vmatpush1.msra.mxu0 0.0
        %1582 = vmatprep.subr.mxu0 0.0
        %1583 = vmatpush1.msra.mxu0 0.0
        %1584 = vmatprep.subr.mxu0 0.0
        %1585 = vmatpush1.msra.mxu0 0.0
        %1586 = vmatprep.subr.mxu0 0.0
        %1587 = vmatpush1.msra.mxu0 0.0
        %1588 = vmatprep.subr.mxu0 0.0
        %1589 = vmatpush1.msra.mxu0 0.0
        %1590 = vmatprep.subr.mxu0 0.0
        %1591 = vmatpush1.msra.mxu0 0.0
        %1592 = vmatprep.subr.mxu0 0.0
        %1593 = vmatpush1.msra.mxu0 0.0
        %1594 = vmatprep.subr.mxu0 0.0
        %1595 = vmatpush1.msra.mxu0 0.0
        %1596 = vmatprep.subr.mxu0 0.0
        %1597 = vmatpush1.msra.mxu0 0.0
        %1598 = vmatprep.subr.mxu0 0.0
        %1599 = vmatpush1.msra.mxu0 0.0
        %1600 = vmatprep.subr.mxu0 0.0
        %1601 = vmatpush1.msra.mxu0 0.0
        %1602 = vmatprep.subr.mxu0 0.0
        %1603 = vmatpush1.msra.mxu0 0.0
        %1604 = vmatprep.subr.mxu0 0.0
        %1605 = vmatpush1.msra.mxu0 0.0
        %1606 = vmatprep.subr.mxu0 0.0
        %1607 = vmatpush1.msra.mxu0 0.0
        %1608 = vmatprep.mubr.f32.mxu0 0.0
        %v1609 = vand.u32 %v1168, 4294901760
        %v1610 = vsub.f32 %v1168, %v1609
        %v1611 = vand.u32 %v1610, 4294901760
        %1612 = vmatmul.mubr.f32.gmra.mrb[0].mxu0 %v1611
        %v1613 = vpop.f32.mrb[0].mxu0
        %v1614 = vadd.f32 %v1511, %v1613
        %v1615 = vpop.f32.mrb[0].mxu0
        %1616 = vmatprep.mubr.f32.mxu0 0.0
        %v1617 = vand.u32 %v1170, 4294901760
        %v1618 = vsub.f32 %v1170, %v1617
        %v1619 = vand.u32 %v1618, 4294901760
        %1620 = vmatmul.mubr.f32.gmra.mrb[0].mxu0 %v1619
        %v1621 = vpop.f32.mrb[0].mxu0
        %v1622 = vadd.f32 %v1518, %v1621
        %v1623 = vpop.f32.mrb[0].mxu0
        %1624 = vmatprep.mubr.f32.mxu0 0.0
        %v1625 = vand.u32 %v1172, 4294901760
        %v1626 = vsub.f32 %v1172, %v1625
        %v1627 = vand.u32 %v1626, 4294901760
        %1628 = vmatmul.mubr.f32.gmra.mrb[0].mxu0 %v1627
        %v1629 = vpop.f32.mrb[0].mxu0
        %v1630 = vadd.f32 %v1525, %v1629
        %v1631 = vpop.f32.mrb[0].mxu0
        %1632 = vmatprep.mubr.f32.mxu0 0.0
        %v1633 = vand.u32 %v1174, 4294901760
        %v1634 = vsub.f32 %v1174, %v1633
        %v1635 = vand.u32 %v1634, 4294901760
        %1636 = vmatmul.mubr.f32.gmra.mrb[0].mxu0 %v1635
        %v1637 = vpop.f32.mrb[0].mxu0
        %v1638 = vadd.f32 %v1532, %v1637
        %v1639 = vpop.f32.mrb[0].mxu0
        %1640 = vdwg.mxu0
        %1641 = vmatprep.subr.mxu0 0.0
        %v1642 = vand.u32 %v446, 4294901760
        %v1643 = vsub.f32 %v446, %v1642
        %v1644 = vand.u32 %v1643, 4294901760
        %1645 = vmatpush1.msra.mxu0 %v1644
        %1646 = vmatprep.subr.mxu0 0.0
        %v1647 = vand.u32 %v447, 4294901760
        %v1648 = vsub.f32 %v447, %v1647
        %v1649 = vand.u32 %v1648, 4294901760
        %1650 = vmatpush1.msra.mxu0 %v1649
        %1651 = vmatprep.subr.mxu0 0.0
        %v1652 = vand.u32 %v448, 4294901760
        %v1653 = vsub.f32 %v448, %v1652
        %v1654 = vand.u32 %v1653, 4294901760
        %1655 = vmatpush1.msra.mxu0 %v1654
        %1656 = vmatprep.subr.mxu0 0.0
        %v1657 = vand.u32 %v449, 4294901760
        %v1658 = vsub.f32 %v449, %v1657
        %v1659 = vand.u32 %v1658, 4294901760
        %1660 = vmatpush1.msra.mxu0 %v1659
        %1661 = vmatprep.subr.mxu0 0.0
        %v1662 = vand.u32 %v450, 4294901760
        %v1663 = vsub.f32 %v450, %v1662
        %v1664 = vand.u32 %v1663, 4294901760
        %1665 = vmatpush1.msra.mxu0 %v1664
        %1666 = vmatprep.subr.mxu0 0.0
        %v1667 = vand.u32 %v451, 4294901760
        %v1668 = vsub.f32 %v451, %v1667
        %v1669 = vand.u32 %v1668, 4294901760
        %1670 = vmatpush1.msra.mxu0 %v1669
        %1671 = vmatprep.subr.mxu0 0.0
        %v1672 = vand.u32 %v452, 4294901760
        %v1673 = vsub.f32 %v452, %v1672
        %v1674 = vand.u32 %v1673, 4294901760
        %1675 = vmatpush1.msra.mxu0 %v1674
        %1676 = vmatprep.subr.mxu0 0.0
        %v1677 = vand.u32 %v453, 4294901760
        %v1678 = vsub.f32 %v453, %v1677
        %v1679 = vand.u32 %v1678, 4294901760
        %1680 = vmatpush1.msra.mxu0 %v1679
        %1681 = vmatprep.subr.mxu0 0.0
        %v1682 = vand.u32 %v454, 4294901760
        %v1683 = vsub.f32 %v454, %v1682
        %v1684 = vand.u32 %v1683, 4294901760
        %1685 = vmatpush1.msra.mxu0 %v1684
        %1686 = vmatprep.subr.mxu0 0.0
        %1687 = vmatpush1.msra.mxu0 0.0
        %1688 = vmatprep.subr.mxu0 0.0
        %1689 = vmatpush1.msra.mxu0 0.0
        %1690 = vmatprep.subr.mxu0 0.0
        %1691 = vmatpush1.msra.mxu0 0.0
        %1692 = vmatprep.subr.mxu0 0.0
        %1693 = vmatpush1.msra.mxu0 0.0
        %1694 = vmatprep.subr.mxu0 0.0
        %1695 = vmatpush1.msra.mxu0 0.0
        %1696 = vmatprep.subr.mxu0 0.0
        %1697 = vmatpush1.msra.mxu0 0.0
        %1698 = vmatprep.subr.mxu0 0.0
        %1699 = vmatpush1.msra.mxu0 0.0
        %1700 = vmatprep.subr.mxu0 0.0
        %1701 = vmatpush1.msra.mxu0 0.0
        %1702 = vmatprep.subr.mxu0 0.0
        %1703 = vmatpush1.msra.mxu0 0.0
        %1704 = vmatprep.subr.mxu0 0.0
        %1705 = vmatpush1.msra.mxu0 0.0
        %1706 = vmatprep.subr.mxu0 0.0
        %1707 = vmatpush1.msra.mxu0 0.0
        %1708 = vmatprep.subr.mxu0 0.0
        %1709 = vmatpush1.msra.mxu0 0.0
        %1710 = vmatprep.subr.mxu0 0.0
        %1711 = vmatpush1.msra.mxu0 0.0
        %1712 = vmatprep.subr.mxu0 0.0
        %1713 = vmatpush1.msra.mxu0 0.0
        %1714 = vmatprep.subr.mxu0 0.0
        %1715 = vmatpush1.msra.mxu0 0.0
        %1716 = vmatprep.subr.mxu0 0.0
        %1717 = vmatpush1.msra.mxu0 0.0
        %1718 = vmatprep.subr.mxu0 0.0
        %1719 = vmatpush1.msra.mxu0 0.0
        %1720 = vmatprep.subr.mxu0 0.0
        %1721 = vmatpush1.msra.mxu0 0.0
        %1722 = vmatprep.subr.mxu0 0.0
        %1723 = vmatpush1.msra.mxu0 0.0
        %1724 = vmatprep.subr.mxu0 0.0
        %1725 = vmatpush1.msra.mxu0 0.0
        %1726 = vmatprep.subr.mxu0 0.0
        %1727 = vmatpush1.msra.mxu0 0.0
        %1728 = vmatprep.subr.mxu0 0.0
        %1729 = vmatpush1.msra.mxu0 0.0
        %1730 = vmatprep.subr.mxu0 0.0
        %1731 = vmatpush1.msra.mxu0 0.0
        %1732 = vmatprep.mubr.f32.mxu0 0.0
        %v1733 = vand.u32 %v1168, 4294901760
        %1734 = vmatmul.mubr.f32.gmra.mrb[0].mxu0 %v1733
        %v1735 = vpop.f32.mrb[0].mxu0
        %v1736 = vadd.f32 %v1614, %v1735
        %v1737 = vpop.f32.mrb[0].mxu0
        %1738 = vmatprep.mubr.f32.mxu0 0.0
        %v1739 = vand.u32 %v1170, 4294901760
        %1740 = vmatmul.mubr.f32.gmra.mrb[0].mxu0 %v1739
        %v1741 = vpop.f32.mrb[0].mxu0
        %v1742 = vadd.f32 %v1622, %v1741
        %v1743 = vpop.f32.mrb[0].mxu0
        %1744 = vmatprep.mubr.f32.mxu0 0.0
        %v1745 = vand.u32 %v1172, 4294901760
        %1746 = vmatmul.mubr.f32.gmra.mrb[0].mxu0 %v1745
        %v1747 = vpop.f32.mrb[0].mxu0
        %v1748 = vadd.f32 %v1630, %v1747
        %v1749 = vpop.f32.mrb[0].mxu0
        %1750 = vmatprep.mubr.f32.mxu0 0.0
        %v1751 = vand.u32 %v1174, 4294901760
        %1752 = vmatmul.mubr.f32.gmra.mrb[0].mxu0 %v1751
        %v1753 = vpop.f32.mrb[0].mxu0
        %v1754 = vadd.f32 %v1638, %v1753
        %v1755 = vpop.f32.mrb[0].mxu0
        %1756 = vdwg.mxu0
        %1757 = vmatprep.subr.mxu0 0.0
        %v1758 = vand.u32 %v446, 4294901760
        %1759 = vmatpush1.msra.mxu0 %v1758
        %1760 = vmatprep.subr.mxu0 0.0
        %v1761 = vand.u32 %v447, 4294901760
        %1762 = vmatpush1.msra.mxu0 %v1761
        %1763 = vmatprep.subr.mxu0 0.0
        %v1764 = vand.u32 %v448, 4294901760
        %1765 = vmatpush1.msra.mxu0 %v1764
        %1766 = vmatprep.subr.mxu0 0.0
        %v1767 = vand.u32 %v449, 4294901760
        %1768 = vmatpush1.msra.mxu0 %v1767
        %1769 = vmatprep.subr.mxu0 0.0
        %v1770 = vand.u32 %v450, 4294901760
        %1771 = vmatpush1.msra.mxu0 %v1770
        %1772 = vmatprep.subr.mxu0 0.0
        %v1773 = vand.u32 %v451, 4294901760
        %1774 = vmatpush1.msra.mxu0 %v1773
        %1775 = vmatprep.subr.mxu0 0.0
        %v1776 = vand.u32 %v452, 4294901760
        %1777 = vmatpush1.msra.mxu0 %v1776
        %1778 = vmatprep.subr.mxu0 0.0
        %v1779 = vand.u32 %v453, 4294901760
        %1780 = vmatpush1.msra.mxu0 %v1779
        %1781 = vmatprep.subr.mxu0 0.0
        %v1782 = vand.u32 %v454, 4294901760
        %1783 = vmatpush1.msra.mxu0 %v1782
        %1784 = vmatprep.subr.mxu0 0.0
        %1785 = vmatpush1.msra.mxu0 0.0
        %1786 = vmatprep.subr.mxu0 0.0
        %1787 = vmatpush1.msra.mxu0 0.0
        %1788 = vmatprep.subr.mxu0 0.0
        %1789 = vmatpush1.msra.mxu0 0.0
        %1790 = vmatprep.subr.mxu0 0.0
        %1791 = vmatpush1.msra.mxu0 0.0
        %1792 = vmatprep.subr.mxu0 0.0
        %1793 = vmatpush1.msra.mxu0 0.0
        %1794 = vmatprep.subr.mxu0 0.0
        %1795 = vmatpush1.msra.mxu0 0.0
        %1796 = vmatprep.subr.mxu0 0.0
        %1797 = vmatpush1.msra.mxu0 0.0
        %1798 = vmatprep.subr.mxu0 0.0
        %1799 = vmatpush1.msra.mxu0 0.0
        %1800 = vmatprep.subr.mxu0 0.0
        %1801 = vmatpush1.msra.mxu0 0.0
        %1802 = vmatprep.subr.mxu0 0.0
        %1803 = vmatpush1.msra.mxu0 0.0
        %1804 = vmatprep.subr.mxu0 0.0
        %1805 = vmatpush1.msra.mxu0 0.0
        %1806 = vmatprep.subr.mxu0 0.0
        %1807 = vmatpush1.msra.mxu0 0.0
        %1808 = vmatprep.subr.mxu0 0.0
        %1809 = vmatpush1.msra.mxu0 0.0
        %1810 = vmatprep.subr.mxu0 0.0
        %1811 = vmatpush1.msra.mxu0 0.0
        %1812 = vmatprep.subr.mxu0 0.0
        %1813 = vmatpush1.msra.mxu0 0.0
        %1814 = vmatprep.subr.mxu0 0.0
        %1815 = vmatpush1.msra.mxu0 0.0
        %1816 = vmatprep.subr.mxu0 0.0
        %1817 = vmatpush1.msra.mxu0 0.0
        %1818 = vmatprep.subr.mxu0 0.0
        %1819 = vmatpush1.msra.mxu0 0.0
        %1820 = vmatprep.subr.mxu0 0.0
        %1821 = vmatpush1.msra.mxu0 0.0
        %1822 = vmatprep.subr.mxu0 0.0
        %1823 = vmatpush1.msra.mxu0 0.0
        %1824 = vmatprep.subr.mxu0 0.0
        %1825 = vmatpush1.msra.mxu0 0.0
        %1826 = vmatprep.subr.mxu0 0.0
        %1827 = vmatpush1.msra.mxu0 0.0
        %1828 = vmatprep.subr.mxu0 0.0
        %1829 = vmatpush1.msra.mxu0 0.0
        %1830 = vmatprep.mubr.f32.mxu0 0.0
        %v1831 = vand.u32 %v1168, 4294901760
        %1832 = vmatmul.mubr.f32.gmra.mrb[0].mxu0 %v1831
        %v1833 = vpop.f32.mrb[0].mxu0
        %v1834 = vadd.f32 %v1736, %v1833
        %v1835 = vpop.f32.mrb[0].mxu0
        %1836 = vmatprep.mubr.f32.mxu0 0.0
        %v1837 = vand.u32 %v1170, 4294901760
        %1838 = vmatmul.mubr.f32.gmra.mrb[0].mxu0 %v1837
        %v1839 = vpop.f32.mrb[0].mxu0
        %v1840 = vadd.f32 %v1742, %v1839
        %v1841 = vpop.f32.mrb[0].mxu0
        %1842 = vmatprep.mubr.f32.mxu0 0.0
        %v1843 = vand.u32 %v1172, 4294901760
        %1844 = vmatmul.mubr.f32.gmra.mrb[0].mxu0 %v1843
        %v1845 = vpop.f32.mrb[0].mxu0
        %v1846 = vadd.f32 %v1748, %v1845
        %v1847 = vpop.f32.mrb[0].mxu0
        %1848 = vmatprep.mubr.f32.mxu0 0.0
        %v1849 = vand.u32 %v1174, 4294901760
        %1850 = vmatmul.mubr.f32.gmra.mrb[0].mxu0 %v1849
        %v1851 = vpop.f32.mrb[0].mxu0
        %v1852 = vadd.f32 %v1754, %v1851
        %v1853 = vpop.f32.mrb[0].mxu0
        %1854 = vdwg.mxu0
        %vm1855 = vcmask 1045504
        %v1856 = vrot.slane %v442, 2
        %v1857 = vrot.slane %v434, 2
        %v1858 = vsel %vm1855, %v1856, %v1857
        %v1859 = vrot.slane %v444, 2
        %v1860 = vsel %vm1855, %v1857, %v1859
        %v1861 = vrot.slane %v443, 2
        %v1862 = vrot.slane %v437, 2
        %v1863 = vsel %vm1855, %v1861, %v1862
        %v1864 = vrot.slane %v445, 2
        %v1865 = vsel %vm1855, %v1862, %v1864
        %s1866 = scalar_lea.vmem [#allocation5], 144
        %v1867 = vld [vmem:[%s1866] sm:$0xff]
        %v1868 = vld [vmem:[%s1866 + $0x8] sm:$0xff]
        %v1869 = vld [vmem:[%s1866 + $0x10] sm:$0xff]
        %v1870 = vld [vmem:[%s1866 + $0x18] sm:$0xff]
        %v1871 = vld [vmem:[%s1866 + $0x20] sm:$0xff]
        %v1872 = vld [vmem:[%s1866 + $0x28] sm:$0xff]
        %v1873 = vld [vmem:[%s1866 + $0x30] sm:$0xff]
        %v1874 = vld [vmem:[%s1866 + $0x38] sm:$0xff]
        %v1875 = vld [vmem:[%s1866 + $0x40] sm:$0xff]
        %v1876 = vsel %vm480, %v1858, 0
        %v1878 = vsel %vm480, %v1860, 0
        %v1880 = vsel %vm480, %v1863, 0
        %v1882 = vsel %vm480, %v1865, 0
        %1884 = vmatprep.subr.mxu0 0.0
        %v1885 = vand.u32 %v1867, 4294901760
        %1886 = vmatpush1.msra.mxu0 %v1885
        %1887 = vmatprep.subr.mxu0 0.0
        %v1888 = vand.u32 %v1868, 4294901760
        %1889 = vmatpush1.msra.mxu0 %v1888
        %1890 = vmatprep.subr.mxu0 0.0
        %v1891 = vand.u32 %v1869, 4294901760
        %1892 = vmatpush1.msra.mxu0 %v1891
        %1893 = vmatprep.subr.mxu0 0.0
        %v1894 = vand.u32 %v1870, 4294901760
        %1895 = vmatpush1.msra.mxu0 %v1894
        %1896 = vmatprep.subr.mxu0 0.0
        %v1897 = vand.u32 %v1871, 4294901760
        %1898 = vmatpush1.msra.mxu0 %v1897
        %1899 = vmatprep.subr.mxu0 0.0
        %v1900 = vand.u32 %v1872, 4294901760
        %1901 = vmatpush1.msra.mxu0 %v1900
        %1902 = vmatprep.subr.mxu0 0.0
        %v1903 = vand.u32 %v1873, 4294901760
        %1904 = vmatpush1.msra.mxu0 %v1903
        %1905 = vmatprep.subr.mxu0 0.0
        %v1906 = vand.u32 %v1874, 4294901760
        %1907 = vmatpush1.msra.mxu0 %v1906
        %1908 = vmatprep.subr.mxu0 0.0
        %v1909 = vand.u32 %v1875, 4294901760
        %1910 = vmatpush1.msra.mxu0 %v1909
        %1911 = vmatprep.subr.mxu0 0.0
        %1912 = vmatpush1.msra.mxu0 0.0
        %1913 = vmatprep.subr.mxu0 0.0
        %1914 = vmatpush1.msra.mxu0 0.0
        %1915 = vmatprep.subr.mxu0 0.0
        %1916 = vmatpush1.msra.mxu0 0.0
        %1917 = vmatprep.subr.mxu0 0.0
        %1918 = vmatpush1.msra.mxu0 0.0
        %1919 = vmatprep.subr.mxu0 0.0
        %1920 = vmatpush1.msra.mxu0 0.0
        %1921 = vmatprep.subr.mxu0 0.0
        %1922 = vmatpush1.msra.mxu0 0.0
        %1923 = vmatprep.subr.mxu0 0.0
        %1924 = vmatpush1.msra.mxu0 0.0
        %1925 = vmatprep.subr.mxu0 0.0
        %1926 = vmatpush1.msra.mxu0 0.0
        %1927 = vmatprep.subr.mxu0 0.0
        %1928 = vmatpush1.msra.mxu0 0.0
        %1929 = vmatprep.subr.mxu0 0.0
        %1930 = vmatpush1.msra.mxu0 0.0
        %1931 = vmatprep.subr.mxu0 0.0
        %1932 = vmatpush1.msra.mxu0 0.0
        %1933 = vmatprep.subr.mxu0 0.0
        %1934 = vmatpush1.msra.mxu0 0.0
        %1935 = vmatprep.subr.mxu0 0.0
        %1936 = vmatpush1.msra.mxu0 0.0
        %1937 = vmatprep.subr.mxu0 0.0
        %1938 = vmatpush1.msra.mxu0 0.0
        %1939 = vmatprep.subr.mxu0 0.0
        %1940 = vmatpush1.msra.mxu0 0.0
        %1941 = vmatprep.subr.mxu0 0.0
        %1942 = vmatpush1.msra.mxu0 0.0
        %1943 = vmatprep.subr.mxu0 0.0
        %1944 = vmatpush1.msra.mxu0 0.0
        %1945 = vmatprep.subr.mxu0 0.0
        %1946 = vmatpush1.msra.mxu0 0.0
        %1947 = vmatprep.subr.mxu0 0.0
        %1948 = vmatpush1.msra.mxu0 0.0
        %1949 = vmatprep.subr.mxu0 0.0
        %1950 = vmatpush1.msra.mxu0 0.0
        %1951 = vmatprep.subr.mxu0 0.0
        %1952 = vmatpush1.msra.mxu0 0.0
        %1953 = vmatprep.subr.mxu0 0.0
        %1954 = vmatpush1.msra.mxu0 0.0
        %1955 = vmatprep.subr.mxu0 0.0
        %1956 = vmatpush1.msra.mxu0 0.0
        %1957 = vmatprep.mubr.f32.mxu0 0.0
        %v1958 = vand.u32 %v1876, 4294901760
        %v1959 = vsub.f32 %v1876, %v1958
        %v1960 = vand.u32 %v1959, 4294901760
        %v1961 = vsub.f32 %v1959, %v1960
        %v1962 = vand.u32 %v1961, 4294901760
        %1963 = vmatmul.mubr.f32.gmra.mrb[0].mxu0 %v1962
        %v1964 = vpop.f32.mrb[0].mxu0
        %v1965 = vadd.f32 0.0, %v1964
        %v1966 = vpop.f32.mrb[0].mxu0
        %1967 = vmatprep.mubr.f32.mxu0 0.0
        %v1968 = vand.u32 %v1878, 4294901760
        %v1969 = vsub.f32 %v1878, %v1968
        %v1970 = vand.u32 %v1969, 4294901760
        %v1971 = vsub.f32 %v1969, %v1970
        %v1972 = vand.u32 %v1971, 4294901760
        %1973 = vmatmul.mubr.f32.gmra.mrb[0].mxu0 %v1972
        %v1974 = vpop.f32.mrb[0].mxu0
        %v1975 = vadd.f32 0.0, %v1974
        %v1976 = vpop.f32.mrb[0].mxu0
        %1977 = vmatprep.mubr.f32.mxu0 0.0
        %v1978 = vand.u32 %v1880, 4294901760
        %v1979 = vsub.f32 %v1880, %v1978
        %v1980 = vand.u32 %v1979, 4294901760
        %v1981 = vsub.f32 %v1979, %v1980
        %v1982 = vand.u32 %v1981, 4294901760
        %1983 = vmatmul.mubr.f32.gmra.mrb[0].mxu0 %v1982
        %v1984 = vpop.f32.mrb[0].mxu0
        %v1985 = vadd.f32 0.0, %v1984
        %v1986 = vpop.f32.mrb[0].mxu0
        %1987 = vmatprep.mubr.f32.mxu0 0.0
        %v1988 = vand.u32 %v1882, 4294901760
        %v1989 = vsub.f32 %v1882, %v1988
        %v1990 = vand.u32 %v1989, 4294901760
        %v1991 = vsub.f32 %v1989, %v1990
        %v1992 = vand.u32 %v1991, 4294901760
        %1993 = vmatmul.mubr.f32.gmra.mrb[0].mxu0 %v1992
        %v1994 = vpop.f32.mrb[0].mxu0
        %v1995 = vadd.f32 0.0, %v1994
        %v1996 = vpop.f32.mrb[0].mxu0
        %1997 = vdwg.mxu0
        %1998 = vmatprep.subr.mxu0 0.0
        %v1999 = vand.u32 %v1867, 4294901760
        %v2000 = vsub.f32 %v1867, %v1999
        %v2001 = vand.u32 %v2000, 4294901760
        %v2002 = vsub.f32 %v2000, %v2001
        %v2003 = vand.u32 %v2002, 4294901760
        %2004 = vmatpush1.msra.mxu0 %v2003
        %2005 = vmatprep.subr.mxu0 0.0
        %v2006 = vand.u32 %v1868, 4294901760
        %v2007 = vsub.f32 %v1868, %v2006
        %v2008 = vand.u32 %v2007, 4294901760
        %v2009 = vsub.f32 %v2007, %v2008
        %v2010 = vand.u32 %v2009, 4294901760
        %2011 = vmatpush1.msra.mxu0 %v2010
        %2012 = vmatprep.subr.mxu0 0.0
        %v2013 = vand.u32 %v1869, 4294901760
        %v2014 = vsub.f32 %v1869, %v2013
        %v2015 = vand.u32 %v2014, 4294901760
        %v2016 = vsub.f32 %v2014, %v2015
        %v2017 = vand.u32 %v2016, 4294901760
        %2018 = vmatpush1.msra.mxu0 %v2017
        %2019 = vmatprep.subr.mxu0 0.0
        %v2020 = vand.u32 %v1870, 4294901760
        %v2021 = vsub.f32 %v1870, %v2020
        %v2022 = vand.u32 %v2021, 4294901760
        %v2023 = vsub.f32 %v2021, %v2022
        %v2024 = vand.u32 %v2023, 4294901760
        %2025 = vmatpush1.msra.mxu0 %v2024
        %2026 = vmatprep.subr.mxu0 0.0
        %v2027 = vand.u32 %v1871, 4294901760
        %v2028 = vsub.f32 %v1871, %v2027
        %v2029 = vand.u32 %v2028, 4294901760
        %v2030 = vsub.f32 %v2028, %v2029
        %v2031 = vand.u32 %v2030, 4294901760
        %2032 = vmatpush1.msra.mxu0 %v2031
        %2033 = vmatprep.subr.mxu0 0.0
        %v2034 = vand.u32 %v1872, 4294901760
        %v2035 = vsub.f32 %v1872, %v2034
        %v2036 = vand.u32 %v2035, 4294901760
        %v2037 = vsub.f32 %v2035, %v2036
        %v2038 = vand.u32 %v2037, 4294901760
        %2039 = vmatpush1.msra.mxu0 %v2038
        %2040 = vmatprep.subr.mxu0 0.0
        %v2041 = vand.u32 %v1873, 4294901760
        %v2042 = vsub.f32 %v1873, %v2041
        %v2043 = vand.u32 %v2042, 4294901760
        %v2044 = vsub.f32 %v2042, %v2043
        %v2045 = vand.u32 %v2044, 4294901760
        %2046 = vmatpush1.msra.mxu0 %v2045
        %2047 = vmatprep.subr.mxu0 0.0
        %v2048 = vand.u32 %v1874, 4294901760
        %v2049 = vsub.f32 %v1874, %v2048
        %v2050 = vand.u32 %v2049, 4294901760
        %v2051 = vsub.f32 %v2049, %v2050
        %v2052 = vand.u32 %v2051, 4294901760
        %2053 = vmatpush1.msra.mxu0 %v2052
        %2054 = vmatprep.subr.mxu0 0.0
        %v2055 = vand.u32 %v1875, 4294901760
        %v2056 = vsub.f32 %v1875, %v2055
        %v2057 = vand.u32 %v2056, 4294901760
        %v2058 = vsub.f32 %v2056, %v2057
        %v2059 = vand.u32 %v2058, 4294901760
        %2060 = vmatpush1.msra.mxu0 %v2059
        %2061 = vmatprep.subr.mxu0 0.0
        %2062 = vmatpush1.msra.mxu0 0.0
        %2063 = vmatprep.subr.mxu0 0.0
        %2064 = vmatpush1.msra.mxu0 0.0
        %2065 = vmatprep.subr.mxu0 0.0
        %2066 = vmatpush1.msra.mxu0 0.0
        %2067 = vmatprep.subr.mxu0 0.0
        %2068 = vmatpush1.msra.mxu0 0.0
        %2069 = vmatprep.subr.mxu0 0.0
        %2070 = vmatpush1.msra.mxu0 0.0
        %2071 = vmatprep.subr.mxu0 0.0
        %2072 = vmatpush1.msra.mxu0 0.0
        %2073 = vmatprep.subr.mxu0 0.0
        %2074 = vmatpush1.msra.mxu0 0.0
        %2075 = vmatprep.subr.mxu0 0.0
        %2076 = vmatpush1.msra.mxu0 0.0
        %2077 = vmatprep.subr.mxu0 0.0
        %2078 = vmatpush1.msra.mxu0 0.0
        %2079 = vmatprep.subr.mxu0 0.0
        %2080 = vmatpush1.msra.mxu0 0.0
        %2081 = vmatprep.subr.mxu0 0.0
        %2082 = vmatpush1.msra.mxu0 0.0
        %2083 = vmatprep.subr.mxu0 0.0
        %2084 = vmatpush1.msra.mxu0 0.0
        %2085 = vmatprep.subr.mxu0 0.0
        %2086 = vmatpush1.msra.mxu0 0.0
        %2087 = vmatprep.subr.mxu0 0.0
        %2088 = vmatpush1.msra.mxu0 0.0
        %2089 = vmatprep.subr.mxu0 0.0
        %2090 = vmatpush1.msra.mxu0 0.0
        %2091 = vmatprep.subr.mxu0 0.0
        %2092 = vmatpush1.msra.mxu0 0.0
        %2093 = vmatprep.subr.mxu0 0.0
        %2094 = vmatpush1.msra.mxu0 0.0
        %2095 = vmatprep.subr.mxu0 0.0
        %2096 = vmatpush1.msra.mxu0 0.0
        %2097 = vmatprep.subr.mxu0 0.0
        %2098 = vmatpush1.msra.mxu0 0.0
        %2099 = vmatprep.subr.mxu0 0.0
        %2100 = vmatpush1.msra.mxu0 0.0
        %2101 = vmatprep.subr.mxu0 0.0
        %2102 = vmatpush1.msra.mxu0 0.0
        %2103 = vmatprep.subr.mxu0 0.0
        %2104 = vmatpush1.msra.mxu0 0.0
        %2105 = vmatprep.subr.mxu0 0.0
        %2106 = vmatpush1.msra.mxu0 0.0
        %2107 = vmatprep.mubr.f32.mxu0 0.0
        %v2108 = vand.u32 %v1876, 4294901760
        %2109 = vmatmul.mubr.f32.gmra.mrb[0].mxu0 %v2108
        %v2110 = vpop.f32.mrb[0].mxu0
        %v2111 = vadd.f32 %v1965, %v2110
        %v2112 = vpop.f32.mrb[0].mxu0
        %2113 = vmatprep.mubr.f32.mxu0 0.0
        %v2114 = vand.u32 %v1878, 4294901760
        %2115 = vmatmul.mubr.f32.gmra.mrb[0].mxu0 %v2114
        %v2116 = vpop.f32.mrb[0].mxu0
        %v2117 = vadd.f32 %v1975, %v2116
        %v2118 = vpop.f32.mrb[0].mxu0
        %2119 = vmatprep.mubr.f32.mxu0 0.0
        %v2120 = vand.u32 %v1880, 4294901760
        %2121 = vmatmul.mubr.f32.gmra.mrb[0].mxu0 %v2120
        %v2122 = vpop.f32.mrb[0].mxu0
        %v2123 = vadd.f32 %v1985, %v2122
        %v2124 = vpop.f32.mrb[0].mxu0
        %2125 = vmatprep.mubr.f32.mxu0 0.0
        %v2126 = vand.u32 %v1882, 4294901760
        %2127 = vmatmul.mubr.f32.gmra.mrb[0].mxu0 %v2126
        %v2128 = vpop.f32.mrb[0].mxu0
        %v2129 = vadd.f32 %v1995, %v2128
        %v2130 = vpop.f32.mrb[0].mxu0
        %2131 = vdwg.mxu0
        %2132 = vmatprep.subr.mxu0 0.0
        %v2133 = vand.u32 %v1867, 4294901760
        %v2134 = vsub.f32 %v1867, %v2133
        %2135 = vmatpush1.msra.mxu0 %v2134
        %2136 = vmatprep.subr.mxu0 0.0
        %v2137 = vand.u32 %v1868, 4294901760
        %v2138 = vsub.f32 %v1868, %v2137
        %2139 = vmatpush1.msra.mxu0 %v2138
        %2140 = vmatprep.subr.mxu0 0.0
        %v2141 = vand.u32 %v1869, 4294901760
        %v2142 = vsub.f32 %v1869, %v2141
        %2143 = vmatpush1.msra.mxu0 %v2142
        %2144 = vmatprep.subr.mxu0 0.0
        %v2145 = vand.u32 %v1870, 4294901760
        %v2146 = vsub.f32 %v1870, %v2145
        %2147 = vmatpush1.msra.mxu0 %v2146
        %2148 = vmatprep.subr.mxu0 0.0
        %v2149 = vand.u32 %v1871, 4294901760
        %v2150 = vsub.f32 %v1871, %v2149
        %2151 = vmatpush1.msra.mxu0 %v2150
        %2152 = vmatprep.subr.mxu0 0.0
        %v2153 = vand.u32 %v1872, 4294901760
        %v2154 = vsub.f32 %v1872, %v2153
        %2155 = vmatpush1.msra.mxu0 %v2154
        %2156 = vmatprep.subr.mxu0 0.0
        %v2157 = vand.u32 %v1873, 4294901760
        %v2158 = vsub.f32 %v1873, %v2157
        %2159 = vmatpush1.msra.mxu0 %v2158
        %2160 = vmatprep.subr.mxu0 0.0
        %v2161 = vand.u32 %v1874, 4294901760
        %v2162 = vsub.f32 %v1874, %v2161
        %2163 = vmatpush1.msra.mxu0 %v2162
        %2164 = vmatprep.subr.mxu0 0.0
        %v2165 = vand.u32 %v1875, 4294901760
        %v2166 = vsub.f32 %v1875, %v2165
        %2167 = vmatpush1.msra.mxu0 %v2166
        %2168 = vmatprep.subr.mxu0 0.0
        %2169 = vmatpush1.msra.mxu0 0.0
        %2170 = vmatprep.subr.mxu0 0.0
        %2171 = vmatpush1.msra.mxu0 0.0
        %2172 = vmatprep.subr.mxu0 0.0
        %2173 = vmatpush1.msra.mxu0 0.0
        %2174 = vmatprep.subr.mxu0 0.0
        %2175 = vmatpush1.msra.mxu0 0.0
        %2176 = vmatprep.subr.mxu0 0.0
        %2177 = vmatpush1.msra.mxu0 0.0
        %2178 = vmatprep.subr.mxu0 0.0
        %2179 = vmatpush1.msra.mxu0 0.0
        %2180 = vmatprep.subr.mxu0 0.0
        %2181 = vmatpush1.msra.mxu0 0.0
        %2182 = vmatprep.subr.mxu0 0.0
        %2183 = vmatpush1.msra.mxu0 0.0
        %2184 = vmatprep.subr.mxu0 0.0
        %2185 = vmatpush1.msra.mxu0 0.0
        %2186 = vmatprep.subr.mxu0 0.0
        %2187 = vmatpush1.msra.mxu0 0.0
        %2188 = vmatprep.subr.mxu0 0.0
        %2189 = vmatpush1.msra.mxu0 0.0
        %2190 = vmatprep.subr.mxu0 0.0
        %2191 = vmatpush1.msra.mxu0 0.0
        %2192 = vmatprep.subr.mxu0 0.0
        %2193 = vmatpush1.msra.mxu0 0.0
        %2194 = vmatprep.subr.mxu0 0.0
        %2195 = vmatpush1.msra.mxu0 0.0
        %2196 = vmatprep.subr.mxu0 0.0
        %2197 = vmatpush1.msra.mxu0 0.0
        %2198 = vmatprep.subr.mxu0 0.0
        %2199 = vmatpush1.msra.mxu0 0.0
        %2200 = vmatprep.subr.mxu0 0.0
        %2201 = vmatpush1.msra.mxu0 0.0
        %2202 = vmatprep.subr.mxu0 0.0
        %2203 = vmatpush1.msra.mxu0 0.0
        %2204 = vmatprep.subr.mxu0 0.0
        %2205 = vmatpush1.msra.mxu0 0.0
        %2206 = vmatprep.subr.mxu0 0.0
        %2207 = vmatpush1.msra.mxu0 0.0
        %2208 = vmatprep.subr.mxu0 0.0
        %2209 = vmatpush1.msra.mxu0 0.0
        %2210 = vmatprep.subr.mxu0 0.0
        %2211 = vmatpush1.msra.mxu0 0.0
        %2212 = vmatprep.subr.mxu0 0.0
        %2213 = vmatpush1.msra.mxu0 0.0
        %2214 = vmatprep.mubr.f32.mxu0 0.0
        %v2215 = vand.u32 %v1876, 4294901760
        %v2216 = vsub.f32 %v1876, %v2215
        %2217 = vmatmul.mubr.f32.gmra.mrb[0].mxu0 %v2216
        %v2218 = vpop.f32.mrb[0].mxu0
        %v2219 = vadd.f32 %v2111, %v2218
        %v2220 = vpop.f32.mrb[0].mxu0
        %2221 = vmatprep.mubr.f32.mxu0 0.0
        %v2222 = vand.u32 %v1878, 4294901760
        %v2223 = vsub.f32 %v1878, %v2222
        %2224 = vmatmul.mubr.f32.gmra.mrb[0].mxu0 %v2223
        %v2225 = vpop.f32.mrb[0].mxu0
        %v2226 = vadd.f32 %v2117, %v2225
        %v2227 = vpop.f32.mrb[0].mxu0
        %2228 = vmatprep.mubr.f32.mxu0 0.0
        %v2229 = vand.u32 %v1880, 4294901760
        %v2230 = vsub.f32 %v1880, %v2229
        %2231 = vmatmul.mubr.f32.gmra.mrb[0].mxu0 %v2230
        %v2232 = vpop.f32.mrb[0].mxu0
        %v2233 = vadd.f32 %v2123, %v2232
        %v2234 = vpop.f32.mrb[0].mxu0
        %2235 = vmatprep.mubr.f32.mxu0 0.0
        %v2236 = vand.u32 %v1882, 4294901760
        %v2237 = vsub.f32 %v1882, %v2236
        %2238 = vmatmul.mubr.f32.gmra.mrb[0].mxu0 %v2237
        %v2239 = vpop.f32.mrb[0].mxu0
        %v2240 = vadd.f32 %v2129, %v2239
        %v2241 = vpop.f32.mrb[0].mxu0
        %2242 = vdwg.mxu0
        %2243 = vmatprep.subr.mxu0 0.0
        %v2244 = vand.u32 %v1867, 4294901760
        %2245 = vmatpush1.msra.mxu0 %v2244
        %2246 = vmatprep.subr.mxu0 0.0
        %v2247 = vand.u32 %v1868, 4294901760
        %2248 = vmatpush1.msra.mxu0 %v2247
        %2249 = vmatprep.subr.mxu0 0.0
        %v2250 = vand.u32 %v1869, 4294901760
        %2251 = vmatpush1.msra.mxu0 %v2250
        %2252 = vmatprep.subr.mxu0 0.0
        %v2253 = vand.u32 %v1870, 4294901760
        %2254 = vmatpush1.msra.mxu0 %v2253
        %2255 = vmatprep.subr.mxu0 0.0
        %v2256 = vand.u32 %v1871, 4294901760
        %2257 = vmatpush1.msra.mxu0 %v2256
        %2258 = vmatprep.subr.mxu0 0.0
        %v2259 = vand.u32 %v1872, 4294901760
        %2260 = vmatpush1.msra.mxu0 %v2259
        %2261 = vmatprep.subr.mxu0 0.0
        %v2262 = vand.u32 %v1873, 4294901760
        %2263 = vmatpush1.msra.mxu0 %v2262
        %2264 = vmatprep.subr.mxu0 0.0
        %v2265 = vand.u32 %v1874, 4294901760
        %2266 = vmatpush1.msra.mxu0 %v2265
        %2267 = vmatprep.subr.mxu0 0.0
        %v2268 = vand.u32 %v1875, 4294901760
        %2269 = vmatpush1.msra.mxu0 %v2268
        %2270 = vmatprep.subr.mxu0 0.0
        %2271 = vmatpush1.msra.mxu0 0.0
        %2272 = vmatprep.subr.mxu0 0.0
        %2273 = vmatpush1.msra.mxu0 0.0
        %2274 = vmatprep.subr.mxu0 0.0
        %2275 = vmatpush1.msra.mxu0 0.0
        %2276 = vmatprep.subr.mxu0 0.0
        %2277 = vmatpush1.msra.mxu0 0.0
        %2278 = vmatprep.subr.mxu0 0.0
        %2279 = vmatpush1.msra.mxu0 0.0
        %2280 = vmatprep.subr.mxu0 0.0
        %2281 = vmatpush1.msra.mxu0 0.0
        %2282 = vmatprep.subr.mxu0 0.0
        %2283 = vmatpush1.msra.mxu0 0.0
        %2284 = vmatprep.subr.mxu0 0.0
        %2285 = vmatpush1.msra.mxu0 0.0
        %2286 = vmatprep.subr.mxu0 0.0
        %2287 = vmatpush1.msra.mxu0 0.0
        %2288 = vmatprep.subr.mxu0 0.0
        %2289 = vmatpush1.msra.mxu0 0.0
        %2290 = vmatprep.subr.mxu0 0.0
        %2291 = vmatpush1.msra.mxu0 0.0
        %2292 = vmatprep.subr.mxu0 0.0
        %2293 = vmatpush1.msra.mxu0 0.0
        %2294 = vmatprep.subr.mxu0 0.0
        %2295 = vmatpush1.msra.mxu0 0.0
        %2296 = vmatprep.subr.mxu0 0.0
        %2297 = vmatpush1.msra.mxu0 0.0
        %2298 = vmatprep.subr.mxu0 0.0
        %2299 = vmatpush1.msra.mxu0 0.0
        %2300 = vmatprep.subr.mxu0 0.0
        %2301 = vmatpush1.msra.mxu0 0.0
        %2302 = vmatprep.subr.mxu0 0.0
        %2303 = vmatpush1.msra.mxu0 0.0
        %2304 = vmatprep.subr.mxu0 0.0
        %2305 = vmatpush1.msra.mxu0 0.0
        %2306 = vmatprep.subr.mxu0 0.0
        %2307 = vmatpush1.msra.mxu0 0.0
        %2308 = vmatprep.subr.mxu0 0.0
        %2309 = vmatpush1.msra.mxu0 0.0
        %2310 = vmatprep.subr.mxu0 0.0
        %2311 = vmatpush1.msra.mxu0 0.0
        %2312 = vmatprep.subr.mxu0 0.0
        %2313 = vmatpush1.msra.mxu0 0.0
        %2314 = vmatprep.subr.mxu0 0.0
        %2315 = vmatpush1.msra.mxu0 0.0
        %2316 = vmatprep.mubr.f32.mxu0 0.0
        %v2317 = vand.u32 %v1876, 4294901760
        %v2318 = vsub.f32 %v1876, %v2317
        %v2319 = vand.u32 %v2318, 4294901760
        %2320 = vmatmul.mubr.f32.gmra.mrb[0].mxu0 %v2319
        %v2321 = vpop.f32.mrb[0].mxu0
        %v2322 = vadd.f32 %v2219, %v2321
        %v2323 = vpop.f32.mrb[0].mxu0
        %2324 = vmatprep.mubr.f32.mxu0 0.0
        %v2325 = vand.u32 %v1878, 4294901760
        %v2326 = vsub.f32 %v1878, %v2325
        %v2327 = vand.u32 %v2326, 4294901760
        %2328 = vmatmul.mubr.f32.gmra.mrb[0].mxu0 %v2327
        %v2329 = vpop.f32.mrb[0].mxu0
        %v2330 = vadd.f32 %v2226, %v2329
        %v2331 = vpop.f32.mrb[0].mxu0
        %2332 = vmatprep.mubr.f32.mxu0 0.0
        %v2333 = vand.u32 %v1880, 4294901760
        %v2334 = vsub.f32 %v1880, %v2333
        %v2335 = vand.u32 %v2334, 4294901760
        %2336 = vmatmul.mubr.f32.gmra.mrb[0].mxu0 %v2335
        %v2337 = vpop.f32.mrb[0].mxu0
        %v2338 = vadd.f32 %v2233, %v2337
        %v2339 = vpop.f32.mrb[0].mxu0
        %2340 = vmatprep.mubr.f32.mxu0 0.0
        %v2341 = vand.u32 %v1882, 4294901760
        %v2342 = vsub.f32 %v1882, %v2341
        %v2343 = vand.u32 %v2342, 4294901760
        %2344 = vmatmul.mubr.f32.gmra.mrb[0].mxu0 %v2343
        %v2345 = vpop.f32.mrb[0].mxu0
        %v2346 = vadd.f32 %v2240, %v2345
        %v2347 = vpop.f32.mrb[0].mxu0
        %2348 = vdwg.mxu0
        %2349 = vmatprep.subr.mxu0 0.0
        %v2350 = vand.u32 %v1867, 4294901760
        %v2351 = vsub.f32 %v1867, %v2350
        %v2352 = vand.u32 %v2351, 4294901760
        %2353 = vmatpush1.msra.mxu0 %v2352
        %2354 = vmatprep.subr.mxu0 0.0
        %v2355 = vand.u32 %v1868, 4294901760
        %v2356 = vsub.f32 %v1868, %v2355
        %v2357 = vand.u32 %v2356, 4294901760
        %2358 = vmatpush1.msra.mxu0 %v2357
        %2359 = vmatprep.subr.mxu0 0.0
        %v2360 = vand.u32 %v1869, 4294901760
        %v2361 = vsub.f32 %v1869, %v2360
        %v2362 = vand.u32 %v2361, 4294901760
        %2363 = vmatpush1.msra.mxu0 %v2362
        %2364 = vmatprep.subr.mxu0 0.0
        %v2365 = vand.u32 %v1870, 4294901760
        %v2366 = vsub.f32 %v1870, %v2365
        %v2367 = vand.u32 %v2366, 4294901760
        %2368 = vmatpush1.msra.mxu0 %v2367
        %2369 = vmatprep.subr.mxu0 0.0
        %v2370 = vand.u32 %v1871, 4294901760
        %v2371 = vsub.f32 %v1871, %v2370
        %v2372 = vand.u32 %v2371, 4294901760
        %2373 = vmatpush1.msra.mxu0 %v2372
        %2374 = vmatprep.subr.mxu0 0.0
        %v2375 = vand.u32 %v1872, 4294901760
        %v2376 = vsub.f32 %v1872, %v2375
        %v2377 = vand.u32 %v2376, 4294901760
        %2378 = vmatpush1.msra.mxu0 %v2377
        %2379 = vmatprep.subr.mxu0 0.0
        %v2380 = vand.u32 %v1873, 4294901760
        %v2381 = vsub.f32 %v1873, %v2380
        %v2382 = vand.u32 %v2381, 4294901760
        %2383 = vmatpush1.msra.mxu0 %v2382
        %2384 = vmatprep.subr.mxu0 0.0
        %v2385 = vand.u32 %v1874, 4294901760
        %v2386 = vsub.f32 %v1874, %v2385
        %v2387 = vand.u32 %v2386, 4294901760
        %2388 = vmatpush1.msra.mxu0 %v2387
        %2389 = vmatprep.subr.mxu0 0.0
        %v2390 = vand.u32 %v1875, 4294901760
        %v2391 = vsub.f32 %v1875, %v2390
        %v2392 = vand.u32 %v2391, 4294901760
        %2393 = vmatpush1.msra.mxu0 %v2392
        %2394 = vmatprep.subr.mxu0 0.0
        %2395 = vmatpush1.msra.mxu0 0.0
        %2396 = vmatprep.subr.mxu0 0.0
        %2397 = vmatpush1.msra.mxu0 0.0
        %2398 = vmatprep.subr.mxu0 0.0
        %2399 = vmatpush1.msra.mxu0 0.0
        %2400 = vmatprep.subr.mxu0 0.0
        %2401 = vmatpush1.msra.mxu0 0.0
        %2402 = vmatprep.subr.mxu0 0.0
        %2403 = vmatpush1.msra.mxu0 0.0
        %2404 = vmatprep.subr.mxu0 0.0
        %2405 = vmatpush1.msra.mxu0 0.0
        %2406 = vmatprep.subr.mxu0 0.0
        %2407 = vmatpush1.msra.mxu0 0.0
        %2408 = vmatprep.subr.mxu0 0.0
        %2409 = vmatpush1.msra.mxu0 0.0
        %2410 = vmatprep.subr.mxu0 0.0
        %2411 = vmatpush1.msra.mxu0 0.0
        %2412 = vmatprep.subr.mxu0 0.0
        %2413 = vmatpush1.msra.mxu0 0.0
        %2414 = vmatprep.subr.mxu0 0.0
        %2415 = vmatpush1.msra.mxu0 0.0
        %2416 = vmatprep.subr.mxu0 0.0
        %2417 = vmatpush1.msra.mxu0 0.0
        %2418 = vmatprep.subr.mxu0 0.0
        %2419 = vmatpush1.msra.mxu0 0.0
        %2420 = vmatprep.subr.mxu0 0.0
        %2421 = vmatpush1.msra.mxu0 0.0
        %2422 = vmatprep.subr.mxu0 0.0
        %2423 = vmatpush1.msra.mxu0 0.0
        %2424 = vmatprep.subr.mxu0 0.0
        %2425 = vmatpush1.msra.mxu0 0.0
        %2426 = vmatprep.subr.mxu0 0.0
        %2427 = vmatpush1.msra.mxu0 0.0
        %2428 = vmatprep.subr.mxu0 0.0
        %2429 = vmatpush1.msra.mxu0 0.0
        %2430 = vmatprep.subr.mxu0 0.0
        %2431 = vmatpush1.msra.mxu0 0.0
        %2432 = vmatprep.subr.mxu0 0.0
        %2433 = vmatpush1.msra.mxu0 0.0
        %2434 = vmatprep.subr.mxu0 0.0
        %2435 = vmatpush1.msra.mxu0 0.0
        %2436 = vmatprep.subr.mxu0 0.0
        %2437 = vmatpush1.msra.mxu0 0.0
        %2438 = vmatprep.subr.mxu0 0.0
        %2439 = vmatpush1.msra.mxu0 0.0
        %2440 = vmatprep.mubr.f32.mxu0 0.0
        %v2441 = vand.u32 %v1876, 4294901760
        %2442 = vmatmul.mubr.f32.gmra.mrb[0].mxu0 %v2441
        %v2443 = vpop.f32.mrb[0].mxu0
        %v2444 = vadd.f32 %v2322, %v2443
        %v2445 = vpop.f32.mrb[0].mxu0
        %2446 = vmatprep.mubr.f32.mxu0 0.0
        %v2447 = vand.u32 %v1878, 4294901760
        %2448 = vmatmul.mubr.f32.gmra.mrb[0].mxu0 %v2447
        %v2449 = vpop.f32.mrb[0].mxu0
        %v2450 = vadd.f32 %v2330, %v2449
        %v2451 = vpop.f32.mrb[0].mxu0
        %2452 = vmatprep.mubr.f32.mxu0 0.0
        %v2453 = vand.u32 %v1880, 4294901760
        %2454 = vmatmul.mubr.f32.gmra.mrb[0].mxu0 %v2453
        %v2455 = vpop.f32.mrb[0].mxu0
        %v2456 = vadd.f32 %v2338, %v2455
        %v2457 = vpop.f32.mrb[0].mxu0
        %2458 = vmatprep.mubr.f32.mxu0 0.0
        %v2459 = vand.u32 %v1882, 4294901760
        %2460 = vmatmul.mubr.f32.gmra.mrb[0].mxu0 %v2459
        %v2461 = vpop.f32.mrb[0].mxu0
        %v2462 = vadd.f32 %v2346, %v2461
        %v2463 = vpop.f32.mrb[0].mxu0
        %2464 = vdwg.mxu0
        %2465 = vmatprep.subr.mxu0 0.0
        %v2466 = vand.u32 %v1867, 4294901760
        %2467 = vmatpush1.msra.mxu0 %v2466
        %2468 = vmatprep.subr.mxu0 0.0
        %v2469 = vand.u32 %v1868, 4294901760
        %2470 = vmatpush1.msra.mxu0 %v2469
        %2471 = vmatprep.subr.mxu0 0.0
        %v2472 = vand.u32 %v1869, 4294901760
        %2473 = vmatpush1.msra.mxu0 %v2472
        %2474 = vmatprep.subr.mxu0 0.0
        %v2475 = vand.u32 %v1870, 4294901760
        %2476 = vmatpush1.msra.mxu0 %v2475
        %2477 = vmatprep.subr.mxu0 0.0
        %v2478 = vand.u32 %v1871, 4294901760
        %2479 = vmatpush1.msra.mxu0 %v2478
        %2480 = vmatprep.subr.mxu0 0.0
        %v2481 = vand.u32 %v1872, 4294901760
        %2482 = vmatpush1.msra.mxu0 %v2481
        %2483 = vmatprep.subr.mxu0 0.0
        %v2484 = vand.u32 %v1873, 4294901760
        %2485 = vmatpush1.msra.mxu0 %v2484
        %2486 = vmatprep.subr.mxu0 0.0
        %v2487 = vand.u32 %v1874, 4294901760
        %2488 = vmatpush1.msra.mxu0 %v2487
        %2489 = vmatprep.subr.mxu0 0.0
        %v2490 = vand.u32 %v1875, 4294901760
        %2491 = vmatpush1.msra.mxu0 %v2490
        %2492 = vmatprep.subr.mxu0 0.0
        %2493 = vmatpush1.msra.mxu0 0.0
        %2494 = vmatprep.subr.mxu0 0.0
        %2495 = vmatpush1.msra.mxu0 0.0
        %2496 = vmatprep.subr.mxu0 0.0
        %2497 = vmatpush1.msra.mxu0 0.0
        %2498 = vmatprep.subr.mxu0 0.0
        %2499 = vmatpush1.msra.mxu0 0.0
        %2500 = vmatprep.subr.mxu0 0.0
        %2501 = vmatpush1.msra.mxu0 0.0
        %2502 = vmatprep.subr.mxu0 0.0
        %2503 = vmatpush1.msra.mxu0 0.0
        %2504 = vmatprep.subr.mxu0 0.0
        %2505 = vmatpush1.msra.mxu0 0.0
        %2506 = vmatprep.subr.mxu0 0.0
        %2507 = vmatpush1.msra.mxu0 0.0
        %2508 = vmatprep.subr.mxu0 0.0
        %2509 = vmatpush1.msra.mxu0 0.0
        %2510 = vmatprep.subr.mxu0 0.0
        %2511 = vmatpush1.msra.mxu0 0.0
        %2512 = vmatprep.subr.mxu0 0.0
        %2513 = vmatpush1.msra.mxu0 0.0
        %2514 = vmatprep.subr.mxu0 0.0
        %2515 = vmatpush1.msra.mxu0 0.0
        %2516 = vmatprep.subr.mxu0 0.0
        %2517 = vmatpush1.msra.mxu0 0.0
        %2518 = vmatprep.subr.mxu0 0.0
        %2519 = vmatpush1.msra.mxu0 0.0
        %2520 = vmatprep.subr.mxu0 0.0
        %2521 = vmatpush1.msra.mxu0 0.0
        %2522 = vmatprep.subr.mxu0 0.0
        %2523 = vmatpush1.msra.mxu0 0.0
        %2524 = vmatprep.subr.mxu0 0.0
        %2525 = vmatpush1.msra.mxu0 0.0
        %2526 = vmatprep.subr.mxu0 0.0
        %2527 = vmatpush1.msra.mxu0 0.0
        %2528 = vmatprep.subr.mxu0 0.0
        %2529 = vmatpush1.msra.mxu0 0.0
        %2530 = vmatprep.subr.mxu0 0.0
        %2531 = vmatpush1.msra.mxu0 0.0
        %2532 = vmatprep.subr.mxu0 0.0
        %2533 = vmatpush1.msra.mxu0 0.0
        %2534 = vmatprep.subr.mxu0 0.0
        %2535 = vmatpush1.msra.mxu0 0.0
        %2536 = vmatprep.subr.mxu0 0.0
        %2537 = vmatpush1.msra.mxu0 0.0
        %2538 = vmatprep.mubr.f32.mxu0 0.0
        %v2539 = vand.u32 %v1876, 4294901760
        %2540 = vmatmul.mubr.f32.gmra.mrb[0].mxu0 %v2539
        %v2541 = vpop.f32.mrb[0].mxu0
        %v2542 = vadd.f32 %v2444, %v2541
        %v2543 = vpop.f32.mrb[0].mxu0
        %2544 = vmatprep.mubr.f32.mxu0 0.0
        %v2545 = vand.u32 %v1878, 4294901760
        %2546 = vmatmul.mubr.f32.gmra.mrb[0].mxu0 %v2545
        %v2547 = vpop.f32.mrb[0].mxu0
        %v2548 = vadd.f32 %v2450, %v2547
        %v2549 = vpop.f32.mrb[0].mxu0
        %2550 = vmatprep.mubr.f32.mxu0 0.0
        %v2551 = vand.u32 %v1880, 4294901760
        %2552 = vmatmul.mubr.f32.gmra.mrb[0].mxu0 %v2551
        %v2553 = vpop.f32.mrb[0].mxu0
        %v2554 = vadd.f32 %v2456, %v2553
        %v2555 = vpop.f32.mrb[0].mxu0
        %2556 = vmatprep.mubr.f32.mxu0 0.0
        %v2557 = vand.u32 %v1882, 4294901760
        %2558 = vmatmul.mubr.f32.gmra.mrb[0].mxu0 %v2557
        %v2559 = vpop.f32.mrb[0].mxu0
        %v2560 = vadd.f32 %v2462, %v2559
        %v2561 = vpop.f32.mrb[0].mxu0
        %2562 = vdwg.mxu0
        %v2563 = vadd.f32 %v1834, %v2542
        %v2564 = vadd.f32 %v1840, %v2548
        %v2565 = vadd.f32 %v1846, %v2554
        %v2566 = vadd.f32 %v1852, %v2560
        %v2567 = vld [vmem:[%s4] sm:$0x1]
        %v2569 = vlaneseq
        %v2570 = vshrl.u32 %v2569, 7
        %v2571 = vsub.s32 0, %v2570
        %v2572 = vrot.slane %v2567, %v2571
        %v2574 = vmul.f32 %v2563, %v2572
        %v2575 = vmul.f32 %v2564, %v2572
        %v2576 = vmul.f32 %v2565, %v2572
        %v2577 = vmul.f32 %v2566, %v2572
        %v2578 = vld [vmem:[%s5] sm:$0x1]
        %v2580 = vlaneseq
        %v2581 = vshrl.u32 %v2580, 7
        %v2582 = vsub.s32 0, %v2581
        %v2583 = vrot.slane %v2578, %v2582
        %v2585 = vadd.f32 %v2574, %v2583
        %v2586 = vadd.f32 %v2575, %v2583
        %v2587 = vadd.f32 %v2576, %v2583
        %v2588 = vadd.f32 %v2577, %v2583
        %v2589 = vmax.f32 %v2585, 0.0
        %v2590 = vmax.f32 %v2586, 0.0
        %v2591 = vmax.f32 %v2587, 0.0
        %v2592 = vmax.f32 %v2588, 0.0
        %2597 = vrot.lane.b32.xlu0 %v2589, 8
        %v2598 = vpop.permute.xlu0 %2597
        %2599 = vrot.lane.b32.xlu0 %v2590, 8
        %v2600 = vpop.permute.xlu0 %2599
        %2601 = vrot.lane.b32.xlu0 %v2591, 8
        %v2602 = vpop.permute.xlu0 %2601
        %2603 = vrot.lane.b32.xlu0 %v2592, 8
        %v2604 = vpop.permute.xlu0 %2603
        %vm2609 = vcmask 64512
        %v2610 = vsel %vm2609, 0.0, %v2598
        %v2611 = vsel %vm2609, 0.0, %v2600
        %v2612 = vsel %vm2609, 0.0, %v2602
        %v2613 = vsel %vm2609, 0.0, %v2604
        %v2614 = vsel %vm2609, %v2598, 0.0
        %v2615 = vsel %vm2609, %v2600, 0.0
        %v2616 = vsel %vm2609, %v2602, 0.0
        %v2617 = vsel %vm2609, %v2604, 0.0
        %v2626 = vrot.slane %v2610, 7
        %v2627 = vrot.slane %v2614, 7
        %v2628 = vrot.slane %v2611, 7
        %v2629 = vsel %vm431, %v2626, %v2628
        %v2630 = vrot.slane %v2615, 7
        %v2631 = vsel %vm431, %v2627, %v2630
        %v2632 = vrot.slane %v2612, 7
        %v2633 = vrot.slane %v2616, 7
        %v2634 = vrot.slane %v2613, 7
        %v2635 = vsel %vm431, %v2632, %v2634
        %v2636 = vrot.slane %v2617, 7
        %v2637 = vsel %vm431, %v2633, %v2636
        %v2648 = vsel %vm431, 0.0, %v2626
        %v2649 = vsel %vm431, 0.0, %v2627
        %v2650 = vsel %vm431, 0.0, %v2632
        %v2651 = vsel %vm431, 0.0, %v2633
        %v2652 = vsel %vm431, %v2628, 0.0
        %v2653 = vsel %vm431, %v2630, 0.0
        %v2654 = vsel %vm431, %v2634, 0.0
        %v2655 = vsel %vm431, %v2636, 0.0
        %v2656 = vld [vmem:[#allocation7] sm:$0xff]
        %v2657 = vld [vmem:[#allocation7 + $0x8] sm:$0xff]
        %v2658 = vld [vmem:[#allocation7 + $0x10] sm:$0xff]
        %v2659 = vld [vmem:[#allocation7 + $0x18] sm:$0xff]
        %v2660 = vld [vmem:[#allocation7 + $0x20] sm:$0xff]
        %v2661 = vld [vmem:[#allocation7 + $0x28] sm:$0xff]
        %v2662 = vld [vmem:[#allocation7 + $0x30] sm:$0xff]
        %v2663 = vld [vmem:[#allocation7 + $0x38] sm:$0xff]
        %v2664 = vld [vmem:[#allocation7 + $0x40] sm:$0xff]
        %v2665 = vld [vmem:[#allocation7 + $0x48] sm:$0xff]
        %v2666 = vld [vmem:[#allocation7 + $0x50] sm:$0xff]
        %v2667 = vld [vmem:[#allocation7 + $0x58] sm:$0xff]
        %v2668 = vld [vmem:[#allocation7 + $0x60] sm:$0xff]
        %v2669 = vld [vmem:[#allocation7 + $0x68] sm:$0xff]
        %v2670 = vld [vmem:[#allocation7 + $0x70] sm:$0xff]
        %v2671 = vld [vmem:[#allocation7 + $0x78] sm:$0xff]
        %v2672 = vld [vmem:[#allocation7 + $0x80] sm:$0xff]
        %v2673 = vld [vmem:[#allocation7 + $0x88] sm:$0xff]
        %v2682 = vrot.slane %v2648, 1
        %v2683 = vrot.slane %v2629, 1
        %v2684 = vsel %vm459, %v2682, %v2683
        %v2685 = vrot.slane %v2649, 1
        %v2686 = vrot.slane %v2631, 1
        %v2687 = vsel %vm459, %v2685, %v2686
        %v2688 = vrot.slane %v2652, 1
        %v2689 = vsel %vm459, %v2683, %v2688
        %v2690 = vrot.slane %v2653, 1
        %v2691 = vsel %vm459, %v2686, %v2690
        %v2692 = vrot.slane %v2650, 1
        %v2693 = vrot.slane %v2635, 1
        %v2694 = vsel %vm459, %v2692, %v2693
        %v2695 = vrot.slane %v2651, 1
        %v2696 = vrot.slane %v2637, 1
        %v2697 = vsel %vm459, %v2695, %v2696
        %v2698 = vrot.slane %v2654, 1
        %v2699 = vsel %vm459, %v2693, %v2698
        %v2700 = vrot.slane %v2655, 1
        %v2701 = vsel %vm459, %v2696, %v2700
        %s2706 = scalar_lea.vmem [#allocation7], 144
        %v2707 = vld [vmem:[%s2706] sm:$0xff]
        %v2708 = vld [vmem:[%s2706 + $0x8] sm:$0xff]
        %v2709 = vld [vmem:[%s2706 + $0x10] sm:$0xff]
        %v2710 = vld [vmem:[%s2706 + $0x18] sm:$0xff]
        %v2711 = vld [vmem:[%s2706 + $0x20] sm:$0xff]
        %v2712 = vld [vmem:[%s2706 + $0x28] sm:$0xff]
        %v2713 = vld [vmem:[%s2706 + $0x30] sm:$0xff]
        %v2714 = vld [vmem:[%s2706 + $0x38] sm:$0xff]
        %v2715 = vld [vmem:[%s2706 + $0x40] sm:$0xff]
        %v2716 = vld [vmem:[%s2706 + $0x48] sm:$0xff]
        %v2717 = vld [vmem:[%s2706 + $0x50] sm:$0xff]
        %v2718 = vld [vmem:[%s2706 + $0x58] sm:$0xff]
        %v2719 = vld [vmem:[%s2706 + $0x60] sm:$0xff]
        %v2720 = vld [vmem:[%s2706 + $0x68] sm:$0xff]
        %v2721 = vld [vmem:[%s2706 + $0x70] sm:$0xff]
        %v2722 = vld [vmem:[%s2706 + $0x78] sm:$0xff]
        %v2723 = vld [vmem:[%s2706 + $0x80] sm:$0xff]
        %v2724 = vld [vmem:[%s2706 + $0x88] sm:$0xff]
        %vm2725 = vcmask 130048
        %v2726 = vsel %vm2725, %v2687, 0
        %v2728 = vsel %vm2725, %v2691, 0
        %v2730 = vsel %vm2725, %v2697, 0
        %v2732 = vsel %vm2725, %v2701, 0
        %2734 = vmatprep.subr.mxu0 0.0
        %v2735 = vand.u32 %v2707, 4294901760
        %2736 = vmatpush1.msra.mxu0 %v2735
        %2737 = vmatprep.subr.mxu0 0.0
        %v2738 = vand.u32 %v2708, 4294901760
        %2739 = vmatpush1.msra.mxu0 %v2738
        %2740 = vmatprep.subr.mxu0 0.0
        %v2741 = vand.u32 %v2709, 4294901760
        %2742 = vmatpush1.msra.mxu0 %v2741
        %2743 = vmatprep.subr.mxu0 0.0
        %v2744 = vand.u32 %v2710, 4294901760
        %2745 = vmatpush1.msra.mxu0 %v2744
        %2746 = vmatprep.subr.mxu0 0.0
        %v2747 = vand.u32 %v2711, 4294901760
        %2748 = vmatpush1.msra.mxu0 %v2747
        %2749 = vmatprep.subr.mxu0 0.0
        %v2750 = vand.u32 %v2712, 4294901760
        %2751 = vmatpush1.msra.mxu0 %v2750
        %2752 = vmatprep.subr.mxu0 0.0
        %v2753 = vand.u32 %v2713, 4294901760
        %2754 = vmatpush1.msra.mxu0 %v2753
        %2755 = vmatprep.subr.mxu0 0.0
        %v2756 = vand.u32 %v2714, 4294901760
        %2757 = vmatpush1.msra.mxu0 %v2756
        %2758 = vmatprep.subr.mxu0 0.0
        %v2759 = vand.u32 %v2715, 4294901760
        %2760 = vmatpush1.msra.mxu0 %v2759
        %2761 = vmatprep.subr.mxu0 0.0
        %v2762 = vand.u32 %v2716, 4294901760
        %2763 = vmatpush1.msra.mxu0 %v2762
        %2764 = vmatprep.subr.mxu0 0.0
        %v2765 = vand.u32 %v2717, 4294901760
        %2766 = vmatpush1.msra.mxu0 %v2765
        %2767 = vmatprep.subr.mxu0 0.0
        %v2768 = vand.u32 %v2718, 4294901760
        %2769 = vmatpush1.msra.mxu0 %v2768
        %2770 = vmatprep.subr.mxu0 0.0
        %v2771 = vand.u32 %v2719, 4294901760
        %2772 = vmatpush1.msra.mxu0 %v2771
        %2773 = vmatprep.subr.mxu0 0.0
        %v2774 = vand.u32 %v2720, 4294901760
        %2775 = vmatpush1.msra.mxu0 %v2774
        %2776 = vmatprep.subr.mxu0 0.0
        %v2777 = vand.u32 %v2721, 4294901760
        %2778 = vmatpush1.msra.mxu0 %v2777
        %2779 = vmatprep.subr.mxu0 0.0
        %v2780 = vand.u32 %v2722, 4294901760
        %2781 = vmatpush1.msra.mxu0 %v2780
        %2782 = vmatprep.subr.mxu0 0.0
        %v2783 = vand.u32 %v2723, 4294901760
        %2784 = vmatpush1.msra.mxu0 %v2783
        %2785 = vmatprep.subr.mxu0 0.0
        %v2786 = vand.u32 %v2724, 4294901760
        %2787 = vmatpush1.msra.mxu0 %v2786
        %2788 = vmatprep.subr.mxu0 0.0
        %2789 = vmatpush1.msra.mxu0 0.0
        %2790 = vmatprep.subr.mxu0 0.0
        %2791 = vmatpush1.msra.mxu0 0.0
        %2792 = vmatprep.subr.mxu0 0.0
        %2793 = vmatpush1.msra.mxu0 0.0
        %2794 = vmatprep.subr.mxu0 0.0
        %2795 = vmatpush1.msra.mxu0 0.0
        %2796 = vmatprep.subr.mxu0 0.0
        %2797 = vmatpush1.msra.mxu0 0.0
        %2798 = vmatprep.subr.mxu0 0.0
        %2799 = vmatpush1.msra.mxu0 0.0
        %2800 = vmatprep.subr.mxu0 0.0
        %2801 = vmatpush1.msra.mxu0 0.0
        %2802 = vmatprep.subr.mxu0 0.0
        %2803 = vmatpush1.msra.mxu0 0.0
        %2804 = vmatprep.subr.mxu0 0.0
        %2805 = vmatpush1.msra.mxu0 0.0
        %2806 = vmatprep.subr.mxu0 0.0
        %2807 = vmatpush1.msra.mxu0 0.0
        %2808 = vmatprep.subr.mxu0 0.0
        %2809 = vmatpush1.msra.mxu0 0.0
        %2810 = vmatprep.subr.mxu0 0.0
        %2811 = vmatpush1.msra.mxu0 0.0
        %2812 = vmatprep.subr.mxu0 0.0
        %2813 = vmatpush1.msra.mxu0 0.0
        %2814 = vmatprep.subr.mxu0 0.0
        %2815 = vmatpush1.msra.mxu0 0.0
        %v2816 = vand.u32 %v2726, 4294901760
        %v2817 = vsub.f32 %v2726, %v2816
        %v2818 = vand.u32 %v2817, 4294901760
        %v2819 = vsub.f32 %v2817, %v2818
        %v2820 = vand.u32 %v2819, 4294901760
        %2821 = vmatprep.mubr.f32.mxu0 %v2820
        %v2822 = vand.u32 %v2684, 4294901760
        %v2823 = vsub.f32 %v2684, %v2822
        %v2824 = vand.u32 %v2823, 4294901760
        %v2825 = vsub.f32 %v2823, %v2824
        %v2826 = vand.u32 %v2825, 4294901760
        %2827 = vmatmul.mubr.f32.gmra.mrb[0].mxu0 %v2826
        %v2828 = vpop.f32.mrb[0].mxu0
        %v2829 = vadd.f32 0.0, %v2828
        %v2830 = vpop.f32.mrb[0].mxu0
        %v2831 = vand.u32 %v2728, 4294901760
        %v2832 = vsub.f32 %v2728, %v2831
        %v2833 = vand.u32 %v2832, 4294901760
        %v2834 = vsub.f32 %v2832, %v2833
        %v2835 = vand.u32 %v2834, 4294901760
        %2836 = vmatprep.mubr.f32.mxu0 %v2835
        %v2837 = vand.u32 %v2689, 4294901760
        %v2838 = vsub.f32 %v2689, %v2837
        %v2839 = vand.u32 %v2838, 4294901760
        %v2840 = vsub.f32 %v2838, %v2839
        %v2841 = vand.u32 %v2840, 4294901760
        %2842 = vmatmul.mubr.f32.gmra.mrb[0].mxu0 %v2841
        %v2843 = vpop.f32.mrb[0].mxu0
        %v2844 = vadd.f32 0.0, %v2843
        %v2845 = vpop.f32.mrb[0].mxu0
        %v2846 = vand.u32 %v2730, 4294901760
        %v2847 = vsub.f32 %v2730, %v2846
        %v2848 = vand.u32 %v2847, 4294901760
        %v2849 = vsub.f32 %v2847, %v2848
        %v2850 = vand.u32 %v2849, 4294901760
        %2851 = vmatprep.mubr.f32.mxu0 %v2850
        %v2852 = vand.u32 %v2694, 4294901760
        %v2853 = vsub.f32 %v2694, %v2852
        %v2854 = vand.u32 %v2853, 4294901760
        %v2855 = vsub.f32 %v2853, %v2854
        %v2856 = vand.u32 %v2855, 4294901760
        %2857 = vmatmul.mubr.f32.gmra.mrb[0].mxu0 %v2856
        %v2858 = vpop.f32.mrb[0].mxu0
        %v2859 = vadd.f32 0.0, %v2858
        %v2860 = vpop.f32.mrb[0].mxu0
        %v2861 = vand.u32 %v2732, 4294901760
        %v2862 = vsub.f32 %v2732, %v2861
        %v2863 = vand.u32 %v2862, 4294901760
        %v2864 = vsub.f32 %v2862, %v2863
        %v2865 = vand.u32 %v2864, 4294901760
        %2866 = vmatprep.mubr.f32.mxu0 %v2865
        %v2867 = vand.u32 %v2699, 4294901760
        %v2868 = vsub.f32 %v2699, %v2867
        %v2869 = vand.u32 %v2868, 4294901760
        %v2870 = vsub.f32 %v2868, %v2869
        %v2871 = vand.u32 %v2870, 4294901760
        %2872 = vmatmul.mubr.f32.gmra.mrb[0].mxu0 %v2871
        %v2873 = vpop.f32.mrb[0].mxu0
        %v2874 = vadd.f32 0.0, %v2873
        %v2875 = vpop.f32.mrb[0].mxu0
        %2876 = vdwg.mxu0
        %2877 = vmatprep.subr.mxu0 0.0
        %v2878 = vand.u32 %v2707, 4294901760
        %v2879 = vsub.f32 %v2707, %v2878
        %v2880 = vand.u32 %v2879, 4294901760
        %v2881 = vsub.f32 %v2879, %v2880
        %v2882 = vand.u32 %v2881, 4294901760
        %2883 = vmatpush1.msra.mxu0 %v2882
        %2884 = vmatprep.subr.mxu0 0.0
        %v2885 = vand.u32 %v2708, 4294901760
        %v2886 = vsub.f32 %v2708, %v2885
        %v2887 = vand.u32 %v2886, 4294901760
        %v2888 = vsub.f32 %v2886, %v2887
        %v2889 = vand.u32 %v2888, 4294901760
        %2890 = vmatpush1.msra.mxu0 %v2889
        %2891 = vmatprep.subr.mxu0 0.0
        %v2892 = vand.u32 %v2709, 4294901760
        %v2893 = vsub.f32 %v2709, %v2892
        %v2894 = vand.u32 %v2893, 4294901760
        %v2895 = vsub.f32 %v2893, %v2894
        %v2896 = vand.u32 %v2895, 4294901760
        %2897 = vmatpush1.msra.mxu0 %v2896
        %2898 = vmatprep.subr.mxu0 0.0
        %v2899 = vand.u32 %v2710, 4294901760
        %v2900 = vsub.f32 %v2710, %v2899
        %v2901 = vand.u32 %v2900, 4294901760
        %v2902 = vsub.f32 %v2900, %v2901
        %v2903 = vand.u32 %v2902, 4294901760
        %2904 = vmatpush1.msra.mxu0 %v2903
        %2905 = vmatprep.subr.mxu0 0.0
        %v2906 = vand.u32 %v2711, 4294901760
        %v2907 = vsub.f32 %v2711, %v2906
        %v2908 = vand.u32 %v2907, 4294901760
        %v2909 = vsub.f32 %v2907, %v2908
        %v2910 = vand.u32 %v2909, 4294901760
        %2911 = vmatpush1.msra.mxu0 %v2910
        %2912 = vmatprep.subr.mxu0 0.0
        %v2913 = vand.u32 %v2712, 4294901760
        %v2914 = vsub.f32 %v2712, %v2913
        %v2915 = vand.u32 %v2914, 4294901760
        %v2916 = vsub.f32 %v2914, %v2915
        %v2917 = vand.u32 %v2916, 4294901760
        %2918 = vmatpush1.msra.mxu0 %v2917
        %2919 = vmatprep.subr.mxu0 0.0
        %v2920 = vand.u32 %v2713, 4294901760
        %v2921 = vsub.f32 %v2713, %v2920
        %v2922 = vand.u32 %v2921, 4294901760
        %v2923 = vsub.f32 %v2921, %v2922
        %v2924 = vand.u32 %v2923, 4294901760
        %2925 = vmatpush1.msra.mxu0 %v2924
        %2926 = vmatprep.subr.mxu0 0.0
        %v2927 = vand.u32 %v2714, 4294901760
        %v2928 = vsub.f32 %v2714, %v2927
        %v2929 = vand.u32 %v2928, 4294901760
        %v2930 = vsub.f32 %v2928, %v2929
        %v2931 = vand.u32 %v2930, 4294901760
        %2932 = vmatpush1.msra.mxu0 %v2931
        %2933 = vmatprep.subr.mxu0 0.0
        %v2934 = vand.u32 %v2715, 4294901760
        %v2935 = vsub.f32 %v2715, %v2934
        %v2936 = vand.u32 %v2935, 4294901760
        %v2937 = vsub.f32 %v2935, %v2936
        %v2938 = vand.u32 %v2937, 4294901760
        %2939 = vmatpush1.msra.mxu0 %v2938
        %2940 = vmatprep.subr.mxu0 0.0
        %v2941 = vand.u32 %v2716, 4294901760
        %v2942 = vsub.f32 %v2716, %v2941
        %v2943 = vand.u32 %v2942, 4294901760
        %v2944 = vsub.f32 %v2942, %v2943
        %v2945 = vand.u32 %v2944, 4294901760
        %2946 = vmatpush1.msra.mxu0 %v2945
        %2947 = vmatprep.subr.mxu0 0.0
        %v2948 = vand.u32 %v2717, 4294901760
        %v2949 = vsub.f32 %v2717, %v2948
        %v2950 = vand.u32 %v2949, 4294901760
        %v2951 = vsub.f32 %v2949, %v2950
        %v2952 = vand.u32 %v2951, 4294901760
        %2953 = vmatpush1.msra.mxu0 %v2952
        %2954 = vmatprep.subr.mxu0 0.0
        %v2955 = vand.u32 %v2718, 4294901760
        %v2956 = vsub.f32 %v2718, %v2955
        %v2957 = vand.u32 %v2956, 4294901760
        %v2958 = vsub.f32 %v2956, %v2957
        %v2959 = vand.u32 %v2958, 4294901760
        %2960 = vmatpush1.msra.mxu0 %v2959
        %2961 = vmatprep.subr.mxu0 0.0
        %v2962 = vand.u32 %v2719, 4294901760
        %v2963 = vsub.f32 %v2719, %v2962
        %v2964 = vand.u32 %v2963, 4294901760
        %v2965 = vsub.f32 %v2963, %v2964
        %v2966 = vand.u32 %v2965, 4294901760
        %2967 = vmatpush1.msra.mxu0 %v2966
        %2968 = vmatprep.subr.mxu0 0.0
        %v2969 = vand.u32 %v2720, 4294901760
        %v2970 = vsub.f32 %v2720, %v2969
        %v2971 = vand.u32 %v2970, 4294901760
        %v2972 = vsub.f32 %v2970, %v2971
        %v2973 = vand.u32 %v2972, 4294901760
        %2974 = vmatpush1.msra.mxu0 %v2973
        %2975 = vmatprep.subr.mxu0 0.0
        %v2976 = vand.u32 %v2721, 4294901760
        %v2977 = vsub.f32 %v2721, %v2976
        %v2978 = vand.u32 %v2977, 4294901760
        %v2979 = vsub.f32 %v2977, %v2978
        %v2980 = vand.u32 %v2979, 4294901760
        %2981 = vmatpush1.msra.mxu0 %v2980
        %2982 = vmatprep.subr.mxu0 0.0
        %v2983 = vand.u32 %v2722, 4294901760
        %v2984 = vsub.f32 %v2722, %v2983
        %v2985 = vand.u32 %v2984, 4294901760
        %v2986 = vsub.f32 %v2984, %v2985
        %v2987 = vand.u32 %v2986, 4294901760
        %2988 = vmatpush1.msra.mxu0 %v2987
        %2989 = vmatprep.subr.mxu0 0.0
        %v2990 = vand.u32 %v2723, 4294901760
        %v2991 = vsub.f32 %v2723, %v2990
        %v2992 = vand.u32 %v2991, 4294901760
        %v2993 = vsub.f32 %v2991, %v2992
        %v2994 = vand.u32 %v2993, 4294901760
        %2995 = vmatpush1.msra.mxu0 %v2994
        %2996 = vmatprep.subr.mxu0 0.0
        %v2997 = vand.u32 %v2724, 4294901760
        %v2998 = vsub.f32 %v2724, %v2997
        %v2999 = vand.u32 %v2998, 4294901760
        %v3000 = vsub.f32 %v2998, %v2999
        %v3001 = vand.u32 %v3000, 4294901760
        %3002 = vmatpush1.msra.mxu0 %v3001
        %3003 = vmatprep.subr.mxu0 0.0
        %3004 = vmatpush1.msra.mxu0 0.0
        %3005 = vmatprep.subr.mxu0 0.0
        %3006 = vmatpush1.msra.mxu0 0.0
        %3007 = vmatprep.subr.mxu0 0.0
        %3008 = vmatpush1.msra.mxu0 0.0
        %3009 = vmatprep.subr.mxu0 0.0
        %3010 = vmatpush1.msra.mxu0 0.0
        %3011 = vmatprep.subr.mxu0 0.0
        %3012 = vmatpush1.msra.mxu0 0.0
        %3013 = vmatprep.subr.mxu0 0.0
        %3014 = vmatpush1.msra.mxu0 0.0
        %3015 = vmatprep.subr.mxu0 0.0
        %3016 = vmatpush1.msra.mxu0 0.0
        %3017 = vmatprep.subr.mxu0 0.0
        %3018 = vmatpush1.msra.mxu0 0.0
        %3019 = vmatprep.subr.mxu0 0.0
        %3020 = vmatpush1.msra.mxu0 0.0
        %3021 = vmatprep.subr.mxu0 0.0
        %3022 = vmatpush1.msra.mxu0 0.0
        %3023 = vmatprep.subr.mxu0 0.0
        %3024 = vmatpush1.msra.mxu0 0.0
        %3025 = vmatprep.subr.mxu0 0.0
        %3026 = vmatpush1.msra.mxu0 0.0
        %3027 = vmatprep.subr.mxu0 0.0
        %3028 = vmatpush1.msra.mxu0 0.0
        %3029 = vmatprep.subr.mxu0 0.0
        %3030 = vmatpush1.msra.mxu0 0.0
        %v3031 = vand.u32 %v2726, 4294901760
        %3032 = vmatprep.mubr.f32.mxu0 %v3031
        %v3033 = vand.u32 %v2684, 4294901760
        %3034 = vmatmul.mubr.f32.gmra.mrb[0].mxu0 %v3033
        %v3035 = vpop.f32.mrb[0].mxu0
        %v3036 = vadd.f32 %v2829, %v3035
        %v3037 = vpop.f32.mrb[0].mxu0
        %v3038 = vand.u32 %v2728, 4294901760
        %3039 = vmatprep.mubr.f32.mxu0 %v3038
        %v3040 = vand.u32 %v2689, 4294901760
        %3041 = vmatmul.mubr.f32.gmra.mrb[0].mxu0 %v3040
        %v3042 = vpop.f32.mrb[0].mxu0
        %v3043 = vadd.f32 %v2844, %v3042
        %v3044 = vpop.f32.mrb[0].mxu0
        %v3045 = vand.u32 %v2730, 4294901760
        %3046 = vmatprep.mubr.f32.mxu0 %v3045
        %v3047 = vand.u32 %v2694, 4294901760
        %3048 = vmatmul.mubr.f32.gmra.mrb[0].mxu0 %v3047
        %v3049 = vpop.f32.mrb[0].mxu0
        %v3050 = vadd.f32 %v2859, %v3049
        %v3051 = vpop.f32.mrb[0].mxu0
        %v3052 = vand.u32 %v2732, 4294901760
        %3053 = vmatprep.mubr.f32.mxu0 %v3052
        %v3054 = vand.u32 %v2699, 4294901760
        %3055 = vmatmul.mubr.f32.gmra.mrb[0].mxu0 %v3054
        %v3056 = vpop.f32.mrb[0].mxu0
        %v3057 = vadd.f32 %v2874, %v3056
        %v3058 = vpop.f32.mrb[0].mxu0
        %3059 = vdwg.mxu0
        %3060 = vmatprep.subr.mxu0 0.0
        %v3061 = vand.u32 %v2707, 4294901760
        %v3062 = vsub.f32 %v2707, %v3061
        %3063 = vmatpush1.msra.mxu0 %v3062
        %3064 = vmatprep.subr.mxu0 0.0
        %v3065 = vand.u32 %v2708, 4294901760
        %v3066 = vsub.f32 %v2708, %v3065
        %3067 = vmatpush1.msra.mxu0 %v3066
        %3068 = vmatprep.subr.mxu0 0.0
        %v3069 = vand.u32 %v2709, 4294901760
        %v3070 = vsub.f32 %v2709, %v3069
        %3071 = vmatpush1.msra.mxu0 %v3070
        %3072 = vmatprep.subr.mxu0 0.0
        %v3073 = vand.u32 %v2710, 4294901760
        %v3074 = vsub.f32 %v2710, %v3073
        %3075 = vmatpush1.msra.mxu0 %v3074
        %3076 = vmatprep.subr.mxu0 0.0
        %v3077 = vand.u32 %v2711, 4294901760
        %v3078 = vsub.f32 %v2711, %v3077
        %3079 = vmatpush1.msra.mxu0 %v3078
        %3080 = vmatprep.subr.mxu0 0.0
        %v3081 = vand.u32 %v2712, 4294901760
        %v3082 = vsub.f32 %v2712, %v3081
        %3083 = vmatpush1.msra.mxu0 %v3082
        %3084 = vmatprep.subr.mxu0 0.0
        %v3085 = vand.u32 %v2713, 4294901760
        %v3086 = vsub.f32 %v2713, %v3085
        %3087 = vmatpush1.msra.mxu0 %v3086
        %3088 = vmatprep.subr.mxu0 0.0
        %v3089 = vand.u32 %v2714, 4294901760
        %v3090 = vsub.f32 %v2714, %v3089
        %3091 = vmatpush1.msra.mxu0 %v3090
        %3092 = vmatprep.subr.mxu0 0.0
        %v3093 = vand.u32 %v2715, 4294901760
        %v3094 = vsub.f32 %v2715, %v3093
        %3095 = vmatpush1.msra.mxu0 %v3094
        %3096 = vmatprep.subr.mxu0 0.0
        %v3097 = vand.u32 %v2716, 4294901760
        %v3098 = vsub.f32 %v2716, %v3097
        %3099 = vmatpush1.msra.mxu0 %v3098
        %3100 = vmatprep.subr.mxu0 0.0
        %v3101 = vand.u32 %v2717, 4294901760
        %v3102 = vsub.f32 %v2717, %v3101
        %3103 = vmatpush1.msra.mxu0 %v3102
        %3104 = vmatprep.subr.mxu0 0.0
        %v3105 = vand.u32 %v2718, 4294901760
        %v3106 = vsub.f32 %v2718, %v3105
        %3107 = vmatpush1.msra.mxu0 %v3106
        %3108 = vmatprep.subr.mxu0 0.0
        %v3109 = vand.u32 %v2719, 4294901760
        %v3110 = vsub.f32 %v2719, %v3109
        %3111 = vmatpush1.msra.mxu0 %v3110
        %3112 = vmatprep.subr.mxu0 0.0
        %v3113 = vand.u32 %v2720, 4294901760
        %v3114 = vsub.f32 %v2720, %v3113
        %3115 = vmatpush1.msra.mxu0 %v3114
        %3116 = vmatprep.subr.mxu0 0.0
        %v3117 = vand.u32 %v2721, 4294901760
        %v3118 = vsub.f32 %v2721, %v3117
        %3119 = vmatpush1.msra.mxu0 %v3118
        %3120 = vmatprep.subr.mxu0 0.0
        %v3121 = vand.u32 %v2722, 4294901760
        %v3122 = vsub.f32 %v2722, %v3121
        %3123 = vmatpush1.msra.mxu0 %v3122
        %3124 = vmatprep.subr.mxu0 0.0
        %v3125 = vand.u32 %v2723, 4294901760
        %v3126 = vsub.f32 %v2723, %v3125
        %3127 = vmatpush1.msra.mxu0 %v3126
        %3128 = vmatprep.subr.mxu0 0.0
        %v3129 = vand.u32 %v2724, 4294901760
        %v3130 = vsub.f32 %v2724, %v3129
        %3131 = vmatpush1.msra.mxu0 %v3130
        %3132 = vmatprep.subr.mxu0 0.0
        %3133 = vmatpush1.msra.mxu0 0.0
        %3134 = vmatprep.subr.mxu0 0.0
        %3135 = vmatpush1.msra.mxu0 0.0
        %3136 = vmatprep.subr.mxu0 0.0
        %3137 = vmatpush1.msra.mxu0 0.0
        %3138 = vmatprep.subr.mxu0 0.0
        %3139 = vmatpush1.msra.mxu0 0.0
        %3140 = vmatprep.subr.mxu0 0.0
        %3141 = vmatpush1.msra.mxu0 0.0
        %3142 = vmatprep.subr.mxu0 0.0
        %3143 = vmatpush1.msra.mxu0 0.0
        %3144 = vmatprep.subr.mxu0 0.0
        %3145 = vmatpush1.msra.mxu0 0.0
        %3146 = vmatprep.subr.mxu0 0.0
        %3147 = vmatpush1.msra.mxu0 0.0
        %3148 = vmatprep.subr.mxu0 0.0
        %3149 = vmatpush1.msra.mxu0 0.0
        %3150 = vmatprep.subr.mxu0 0.0
        %3151 = vmatpush1.msra.mxu0 0.0
        %3152 = vmatprep.subr.mxu0 0.0
        %3153 = vmatpush1.msra.mxu0 0.0
        %3154 = vmatprep.subr.mxu0 0.0
        %3155 = vmatpush1.msra.mxu0 0.0
        %3156 = vmatprep.subr.mxu0 0.0
        %3157 = vmatpush1.msra.mxu0 0.0
        %3158 = vmatprep.subr.mxu0 0.0
        %3159 = vmatpush1.msra.mxu0 0.0
        %v3160 = vand.u32 %v2726, 4294901760
        %v3161 = vsub.f32 %v2726, %v3160
        %3162 = vmatprep.mubr.f32.mxu0 %v3161
        %v3163 = vand.u32 %v2684, 4294901760
        %v3164 = vsub.f32 %v2684, %v3163
        %3165 = vmatmul.mubr.f32.gmra.mrb[0].mxu0 %v3164
        %v3166 = vpop.f32.mrb[0].mxu0
        %v3167 = vadd.f32 %v3036, %v3166
        %v3168 = vpop.f32.mrb[0].mxu0
        %v3169 = vand.u32 %v2728, 4294901760
        %v3170 = vsub.f32 %v2728, %v3169
        %3171 = vmatprep.mubr.f32.mxu0 %v3170
        %v3172 = vand.u32 %v2689, 4294901760
        %v3173 = vsub.f32 %v2689, %v3172
        %3174 = vmatmul.mubr.f32.gmra.mrb[0].mxu0 %v3173
        %v3175 = vpop.f32.mrb[0].mxu0
        %v3176 = vadd.f32 %v3043, %v3175
        %v3177 = vpop.f32.mrb[0].mxu0
        %v3178 = vand.u32 %v2730, 4294901760
        %v3179 = vsub.f32 %v2730, %v3178
        %3180 = vmatprep.mubr.f32.mxu0 %v3179
        %v3181 = vand.u32 %v2694, 4294901760
        %v3182 = vsub.f32 %v2694, %v3181
        %3183 = vmatmul.mubr.f32.gmra.mrb[0].mxu0 %v3182
        %v3184 = vpop.f32.mrb[0].mxu0
        %v3185 = vadd.f32 %v3050, %v3184
        %v3186 = vpop.f32.mrb[0].mxu0
        %v3187 = vand.u32 %v2732, 4294901760
        %v3188 = vsub.f32 %v2732, %v3187
        %3189 = vmatprep.mubr.f32.mxu0 %v3188
        %v3190 = vand.u32 %v2699, 4294901760
        %v3191 = vsub.f32 %v2699, %v3190
        %3192 = vmatmul.mubr.f32.gmra.mrb[0].mxu0 %v3191
        %v3193 = vpop.f32.mrb[0].mxu0
        %v3194 = vadd.f32 %v3057, %v3193
        %v3195 = vpop.f32.mrb[0].mxu0
        %3196 = vdwg.mxu0
        %3197 = vmatprep.subr.mxu0 0.0
        %v3198 = vand.u32 %v2707, 4294901760
        %3199 = vmatpush1.msra.mxu0 %v3198
        %3200 = vmatprep.subr.mxu0 0.0
        %v3201 = vand.u32 %v2708, 4294901760
        %3202 = vmatpush1.msra.mxu0 %v3201
        %3203 = vmatprep.subr.mxu0 0.0
        %v3204 = vand.u32 %v2709, 4294901760
        %3205 = vmatpush1.msra.mxu0 %v3204
        %3206 = vmatprep.subr.mxu0 0.0
        %v3207 = vand.u32 %v2710, 4294901760
        %3208 = vmatpush1.msra.mxu0 %v3207
        %3209 = vmatprep.subr.mxu0 0.0
        %v3210 = vand.u32 %v2711, 4294901760
        %3211 = vmatpush1.msra.mxu0 %v3210
        %3212 = vmatprep.subr.mxu0 0.0
        %v3213 = vand.u32 %v2712, 4294901760
        %3214 = vmatpush1.msra.mxu0 %v3213
        %3215 = vmatprep.subr.mxu0 0.0
        %v3216 = vand.u32 %v2713, 4294901760
        %3217 = vmatpush1.msra.mxu0 %v3216
        %3218 = vmatprep.subr.mxu0 0.0
        %v3219 = vand.u32 %v2714, 4294901760
        %3220 = vmatpush1.msra.mxu0 %v3219
        %3221 = vmatprep.subr.mxu0 0.0
        %v3222 = vand.u32 %v2715, 4294901760
        %3223 = vmatpush1.msra.mxu0 %v3222
        %3224 = vmatprep.subr.mxu0 0.0
        %v3225 = vand.u32 %v2716, 4294901760
        %3226 = vmatpush1.msra.mxu0 %v3225
        %3227 = vmatprep.subr.mxu0 0.0
        %v3228 = vand.u32 %v2717, 4294901760
        %3229 = vmatpush1.msra.mxu0 %v3228
        %3230 = vmatprep.subr.mxu0 0.0
        %v3231 = vand.u32 %v2718, 4294901760
        %3232 = vmatpush1.msra.mxu0 %v3231
        %3233 = vmatprep.subr.mxu0 0.0
        %v3234 = vand.u32 %v2719, 4294901760
        %3235 = vmatpush1.msra.mxu0 %v3234
        %3236 = vmatprep.subr.mxu0 0.0
        %v3237 = vand.u32 %v2720, 4294901760
        %3238 = vmatpush1.msra.mxu0 %v3237
        %3239 = vmatprep.subr.mxu0 0.0
        %v3240 = vand.u32 %v2721, 4294901760
        %3241 = vmatpush1.msra.mxu0 %v3240
        %3242 = vmatprep.subr.mxu0 0.0
        %v3243 = vand.u32 %v2722, 4294901760
        %3244 = vmatpush1.msra.mxu0 %v3243
        %3245 = vmatprep.subr.mxu0 0.0
        %v3246 = vand.u32 %v2723, 4294901760
        %3247 = vmatpush1.msra.mxu0 %v3246
        %3248 = vmatprep.subr.mxu0 0.0
        %v3249 = vand.u32 %v2724, 4294901760
        %3250 = vmatpush1.msra.mxu0 %v3249
        %3251 = vmatprep.subr.mxu0 0.0
        %3252 = vmatpush1.msra.mxu0 0.0
        %3253 = vmatprep.subr.mxu0 0.0
        %3254 = vmatpush1.msra.mxu0 0.0
        %3255 = vmatprep.subr.mxu0 0.0
        %3256 = vmatpush1.msra.mxu0 0.0
        %3257 = vmatprep.subr.mxu0 0.0
        %3258 = vmatpush1.msra.mxu0 0.0
        %3259 = vmatprep.subr.mxu0 0.0
        %3260 = vmatpush1.msra.mxu0 0.0
        %3261 = vmatprep.subr.mxu0 0.0
        %3262 = vmatpush1.msra.mxu0 0.0
        %3263 = vmatprep.subr.mxu0 0.0
        %3264 = vmatpush1.msra.mxu0 0.0
        %3265 = vmatprep.subr.mxu0 0.0
        %3266 = vmatpush1.msra.mxu0 0.0
        %3267 = vmatprep.subr.mxu0 0.0
        %3268 = vmatpush1.msra.mxu0 0.0
        %3269 = vmatprep.subr.mxu0 0.0
        %3270 = vmatpush1.msra.mxu0 0.0
        %3271 = vmatprep.subr.mxu0 0.0
        %3272 = vmatpush1.msra.mxu0 0.0
        %3273 = vmatprep.subr.mxu0 0.0
        %3274 = vmatpush1.msra.mxu0 0.0
        %3275 = vmatprep.subr.mxu0 0.0
        %3276 = vmatpush1.msra.mxu0 0.0
        %3277 = vmatprep.subr.mxu0 0.0
        %3278 = vmatpush1.msra.mxu0 0.0
        %v3279 = vand.u32 %v2726, 4294901760
        %v3280 = vsub.f32 %v2726, %v3279
        %v3281 = vand.u32 %v3280, 4294901760
        %3282 = vmatprep.mubr.f32.mxu0 %v3281
        %v3283 = vand.u32 %v2684, 4294901760
        %v3284 = vsub.f32 %v2684, %v3283
        %v3285 = vand.u32 %v3284, 4294901760
        %3286 = vmatmul.mubr.f32.gmra.mrb[0].mxu0 %v3285
        %v3287 = vpop.f32.mrb[0].mxu0
        %v3288 = vadd.f32 %v3167, %v3287
        %v3289 = vpop.f32.mrb[0].mxu0
        %v3290 = vand.u32 %v2728, 4294901760
        %v3291 = vsub.f32 %v2728, %v3290
        %v3292 = vand.u32 %v3291, 4294901760
        %3293 = vmatprep.mubr.f32.mxu0 %v3292
        %v3294 = vand.u32 %v2689, 4294901760
        %v3295 = vsub.f32 %v2689, %v3294
        %v3296 = vand.u32 %v3295, 4294901760
        %3297 = vmatmul.mubr.f32.gmra.mrb[0].mxu0 %v3296
        %v3298 = vpop.f32.mrb[0].mxu0
        %v3299 = vadd.f32 %v3176, %v3298
        %v3300 = vpop.f32.mrb[0].mxu0
        %v3301 = vand.u32 %v2730, 4294901760
        %v3302 = vsub.f32 %v2730, %v3301
        %v3303 = vand.u32 %v3302, 4294901760
        %3304 = vmatprep.mubr.f32.mxu0 %v3303
        %v3305 = vand.u32 %v2694, 4294901760
        %v3306 = vsub.f32 %v2694, %v3305
        %v3307 = vand.u32 %v3306, 4294901760
        %3308 = vmatmul.mubr.f32.gmra.mrb[0].mxu0 %v3307
        %v3309 = vpop.f32.mrb[0].mxu0
        %v3310 = vadd.f32 %v3185, %v3309
        %v3311 = vpop.f32.mrb[0].mxu0
        %v3312 = vand.u32 %v2732, 4294901760
        %v3313 = vsub.f32 %v2732, %v3312
        %v3314 = vand.u32 %v3313, 4294901760
        %3315 = vmatprep.mubr.f32.mxu0 %v3314
        %v3316 = vand.u32 %v2699, 4294901760
        %v3317 = vsub.f32 %v2699, %v3316
        %v3318 = vand.u32 %v3317, 4294901760
        %3319 = vmatmul.mubr.f32.gmra.mrb[0].mxu0 %v3318
        %v3320 = vpop.f32.mrb[0].mxu0
        %v3321 = vadd.f32 %v3194, %v3320
        %v3322 = vpop.f32.mrb[0].mxu0
        %3323 = vdwg.mxu0
        %3324 = vmatprep.subr.mxu0 0.0
        %v3325 = vand.u32 %v2707, 4294901760
        %v3326 = vsub.f32 %v2707, %v3325
        %v3327 = vand.u32 %v3326, 4294901760
        %3328 = vmatpush1.msra.mxu0 %v3327
        %3329 = vmatprep.subr.mxu0 0.0
        %v3330 = vand.u32 %v2708, 4294901760
        %v3331 = vsub.f32 %v2708, %v3330
        %v3332 = vand.u32 %v3331, 4294901760
        %3333 = vmatpush1.msra.mxu0 %v3332
        %3334 = vmatprep.subr.mxu0 0.0
        %v3335 = vand.u32 %v2709, 4294901760
        %v3336 = vsub.f32 %v2709, %v3335
        %v3337 = vand.u32 %v3336, 4294901760
        %3338 = vmatpush1.msra.mxu0 %v3337
        %3339 = vmatprep.subr.mxu0 0.0
        %v3340 = vand.u32 %v2710, 4294901760
        %v3341 = vsub.f32 %v2710, %v3340
        %v3342 = vand.u32 %v3341, 4294901760
        %3343 = vmatpush1.msra.mxu0 %v3342
        %3344 = vmatprep.subr.mxu0 0.0
        %v3345 = vand.u32 %v2711, 4294901760
        %v3346 = vsub.f32 %v2711, %v3345
        %v3347 = vand.u32 %v3346, 4294901760
        %3348 = vmatpush1.msra.mxu0 %v3347
        %3349 = vmatprep.subr.mxu0 0.0
        %v3350 = vand.u32 %v2712, 4294901760
        %v3351 = vsub.f32 %v2712, %v3350
        %v3352 = vand.u32 %v3351, 4294901760
        %3353 = vmatpush1.msra.mxu0 %v3352
        %3354 = vmatprep.subr.mxu0 0.0
        %v3355 = vand.u32 %v2713, 4294901760
        %v3356 = vsub.f32 %v2713, %v3355
        %v3357 = vand.u32 %v3356, 4294901760
        %3358 = vmatpush1.msra.mxu0 %v3357
        %3359 = vmatprep.subr.mxu0 0.0
        %v3360 = vand.u32 %v2714, 4294901760
        %v3361 = vsub.f32 %v2714, %v3360
        %v3362 = vand.u32 %v3361, 4294901760
        %3363 = vmatpush1.msra.mxu0 %v3362
        %3364 = vmatprep.subr.mxu0 0.0
        %v3365 = vand.u32 %v2715, 4294901760
        %v3366 = vsub.f32 %v2715, %v3365
        %v3367 = vand.u32 %v3366, 4294901760
        %3368 = vmatpush1.msra.mxu0 %v3367
        %3369 = vmatprep.subr.mxu0 0.0
        %v3370 = vand.u32 %v2716, 4294901760
        %v3371 = vsub.f32 %v2716, %v3370
        %v3372 = vand.u32 %v3371, 4294901760
        %3373 = vmatpush1.msra.mxu0 %v3372
        %3374 = vmatprep.subr.mxu0 0.0
        %v3375 = vand.u32 %v2717, 4294901760
        %v3376 = vsub.f32 %v2717, %v3375
        %v3377 = vand.u32 %v3376, 4294901760
        %3378 = vmatpush1.msra.mxu0 %v3377
        %3379 = vmatprep.subr.mxu0 0.0
        %v3380 = vand.u32 %v2718, 4294901760
        %v3381 = vsub.f32 %v2718, %v3380
        %v3382 = vand.u32 %v3381, 4294901760
        %3383 = vmatpush1.msra.mxu0 %v3382
        %3384 = vmatprep.subr.mxu0 0.0
        %v3385 = vand.u32 %v2719, 4294901760
        %v3386 = vsub.f32 %v2719, %v3385
        %v3387 = vand.u32 %v3386, 4294901760
        %3388 = vmatpush1.msra.mxu0 %v3387
        %3389 = vmatprep.subr.mxu0 0.0
        %v3390 = vand.u32 %v2720, 4294901760
        %v3391 = vsub.f32 %v2720, %v3390
        %v3392 = vand.u32 %v3391, 4294901760
        %3393 = vmatpush1.msra.mxu0 %v3392
        %3394 = vmatprep.subr.mxu0 0.0
        %v3395 = vand.u32 %v2721, 4294901760
        %v3396 = vsub.f32 %v2721, %v3395
        %v3397 = vand.u32 %v3396, 4294901760
        %3398 = vmatpush1.msra.mxu0 %v3397
        %3399 = vmatprep.subr.mxu0 0.0
        %v3400 = vand.u32 %v2722, 4294901760
        %v3401 = vsub.f32 %v2722, %v3400
        %v3402 = vand.u32 %v3401, 4294901760
        %3403 = vmatpush1.msra.mxu0 %v3402
        %3404 = vmatprep.subr.mxu0 0.0
        %v3405 = vand.u32 %v2723, 4294901760
        %v3406 = vsub.f32 %v2723, %v3405
        %v3407 = vand.u32 %v3406, 4294901760
        %3408 = vmatpush1.msra.mxu0 %v3407
        %3409 = vmatprep.subr.mxu0 0.0
        %v3410 = vand.u32 %v2724, 4294901760
        %v3411 = vsub.f32 %v2724, %v3410
        %v3412 = vand.u32 %v3411, 4294901760
        %3413 = vmatpush1.msra.mxu0 %v3412
        %3414 = vmatprep.subr.mxu0 0.0
        %3415 = vmatpush1.msra.mxu0 0.0
        %3416 = vmatprep.subr.mxu0 0.0
        %3417 = vmatpush1.msra.mxu0 0.0
        %3418 = vmatprep.subr.mxu0 0.0
        %3419 = vmatpush1.msra.mxu0 0.0
        %3420 = vmatprep.subr.mxu0 0.0
        %3421 = vmatpush1.msra.mxu0 0.0
        %3422 = vmatprep.subr.mxu0 0.0
        %3423 = vmatpush1.msra.mxu0 0.0
        %3424 = vmatprep.subr.mxu0 0.0
        %3425 = vmatpush1.msra.mxu0 0.0
        %3426 = vmatprep.subr.mxu0 0.0
        %3427 = vmatpush1.msra.mxu0 0.0
        %3428 = vmatprep.subr.mxu0 0.0
        %3429 = vmatpush1.msra.mxu0 0.0
        %3430 = vmatprep.subr.mxu0 0.0
        %3431 = vmatpush1.msra.mxu0 0.0
        %3432 = vmatprep.subr.mxu0 0.0
        %3433 = vmatpush1.msra.mxu0 0.0
        %3434 = vmatprep.subr.mxu0 0.0
        %3435 = vmatpush1.msra.mxu0 0.0
        %3436 = vmatprep.subr.mxu0 0.0
        %3437 = vmatpush1.msra.mxu0 0.0
        %3438 = vmatprep.subr.mxu0 0.0
        %3439 = vmatpush1.msra.mxu0 0.0
        %3440 = vmatprep.subr.mxu0 0.0
        %3441 = vmatpush1.msra.mxu0 0.0
        %v3442 = vand.u32 %v2726, 4294901760
        %3443 = vmatprep.mubr.f32.mxu0 %v3442
        %v3444 = vand.u32 %v2684, 4294901760
        %3445 = vmatmul.mubr.f32.gmra.mrb[0].mxu0 %v3444
        %v3446 = vpop.f32.mrb[0].mxu0
        %v3447 = vadd.f32 %v3288, %v3446
        %v3448 = vpop.f32.mrb[0].mxu0
        %v3449 = vand.u32 %v2728, 4294901760
        %3450 = vmatprep.mubr.f32.mxu0 %v3449
        %v3451 = vand.u32 %v2689, 4294901760
        %3452 = vmatmul.mubr.f32.gmra.mrb[0].mxu0 %v3451
        %v3453 = vpop.f32.mrb[0].mxu0
        %v3454 = vadd.f32 %v3299, %v3453
        %v3455 = vpop.f32.mrb[0].mxu0
        %v3456 = vand.u32 %v2730, 4294901760
        %3457 = vmatprep.mubr.f32.mxu0 %v3456
        %v3458 = vand.u32 %v2694, 4294901760
        %3459 = vmatmul.mubr.f32.gmra.mrb[0].mxu0 %v3458
        %v3460 = vpop.f32.mrb[0].mxu0
        %v3461 = vadd.f32 %v3310, %v3460
        %v3462 = vpop.f32.mrb[0].mxu0
        %v3463 = vand.u32 %v2732, 4294901760
        %3464 = vmatprep.mubr.f32.mxu0 %v3463
        %v3465 = vand.u32 %v2699, 4294901760
        %3466 = vmatmul.mubr.f32.gmra.mrb[0].mxu0 %v3465
        %v3467 = vpop.f32.mrb[0].mxu0
        %v3468 = vadd.f32 %v3321, %v3467
        %v3469 = vpop.f32.mrb[0].mxu0
        %3470 = vdwg.mxu0
        %3471 = vmatprep.subr.mxu0 0.0
        %v3472 = vand.u32 %v2707, 4294901760
        %3473 = vmatpush1.msra.mxu0 %v3472
        %3474 = vmatprep.subr.mxu0 0.0
        %v3475 = vand.u32 %v2708, 4294901760
        %3476 = vmatpush1.msra.mxu0 %v3475
        %3477 = vmatprep.subr.mxu0 0.0
        %v3478 = vand.u32 %v2709, 4294901760
        %3479 = vmatpush1.msra.mxu0 %v3478
        %3480 = vmatprep.subr.mxu0 0.0
        %v3481 = vand.u32 %v2710, 4294901760
        %3482 = vmatpush1.msra.mxu0 %v3481
        %3483 = vmatprep.subr.mxu0 0.0
        %v3484 = vand.u32 %v2711, 4294901760
        %3485 = vmatpush1.msra.mxu0 %v3484
        %3486 = vmatprep.subr.mxu0 0.0
        %v3487 = vand.u32 %v2712, 4294901760
        %3488 = vmatpush1.msra.mxu0 %v3487
        %3489 = vmatprep.subr.mxu0 0.0
        %v3490 = vand.u32 %v2713, 4294901760
        %3491 = vmatpush1.msra.mxu0 %v3490
        %3492 = vmatprep.subr.mxu0 0.0
        %v3493 = vand.u32 %v2714, 4294901760
        %3494 = vmatpush1.msra.mxu0 %v3493
        %3495 = vmatprep.subr.mxu0 0.0
        %v3496 = vand.u32 %v2715, 4294901760
        %3497 = vmatpush1.msra.mxu0 %v3496
        %3498 = vmatprep.subr.mxu0 0.0
        %v3499 = vand.u32 %v2716, 4294901760
        %3500 = vmatpush1.msra.mxu0 %v3499
        %3501 = vmatprep.subr.mxu0 0.0
        %v3502 = vand.u32 %v2717, 4294901760
        %3503 = vmatpush1.msra.mxu0 %v3502
        %3504 = vmatprep.subr.mxu0 0.0
        %v3505 = vand.u32 %v2718, 4294901760
        %3506 = vmatpush1.msra.mxu0 %v3505
        %3507 = vmatprep.subr.mxu0 0.0
        %v3508 = vand.u32 %v2719, 4294901760
        %3509 = vmatpush1.msra.mxu0 %v3508
        %3510 = vmatprep.subr.mxu0 0.0
        %v3511 = vand.u32 %v2720, 4294901760
        %3512 = vmatpush1.msra.mxu0 %v3511
        %3513 = vmatprep.subr.mxu0 0.0
        %v3514 = vand.u32 %v2721, 4294901760
        %3515 = vmatpush1.msra.mxu0 %v3514
        %3516 = vmatprep.subr.mxu0 0.0
        %v3517 = vand.u32 %v2722, 4294901760
        %3518 = vmatpush1.msra.mxu0 %v3517
        %3519 = vmatprep.subr.mxu0 0.0
        %v3520 = vand.u32 %v2723, 4294901760
        %3521 = vmatpush1.msra.mxu0 %v3520
        %3522 = vmatprep.subr.mxu0 0.0
        %v3523 = vand.u32 %v2724, 4294901760
        %3524 = vmatpush1.msra.mxu0 %v3523
        %3525 = vmatprep.subr.mxu0 0.0
        %3526 = vmatpush1.msra.mxu0 0.0
        %3527 = vmatprep.subr.mxu0 0.0
        %3528 = vmatpush1.msra.mxu0 0.0
        %3529 = vmatprep.subr.mxu0 0.0
        %3530 = vmatpush1.msra.mxu0 0.0
        %3531 = vmatprep.subr.mxu0 0.0
        %3532 = vmatpush1.msra.mxu0 0.0
        %3533 = vmatprep.subr.mxu0 0.0
        %3534 = vmatpush1.msra.mxu0 0.0
        %3535 = vmatprep.subr.mxu0 0.0
        %3536 = vmatpush1.msra.mxu0 0.0
        %3537 = vmatprep.subr.mxu0 0.0
        %3538 = vmatpush1.msra.mxu0 0.0
        %3539 = vmatprep.subr.mxu0 0.0
        %3540 = vmatpush1.msra.mxu0 0.0
        %3541 = vmatprep.subr.mxu0 0.0
        %3542 = vmatpush1.msra.mxu0 0.0
        %3543 = vmatprep.subr.mxu0 0.0
        %3544 = vmatpush1.msra.mxu0 0.0
        %3545 = vmatprep.subr.mxu0 0.0
        %3546 = vmatpush1.msra.mxu0 0.0
        %3547 = vmatprep.subr.mxu0 0.0
        %3548 = vmatpush1.msra.mxu0 0.0
        %3549 = vmatprep.subr.mxu0 0.0
        %3550 = vmatpush1.msra.mxu0 0.0
        %3551 = vmatprep.subr.mxu0 0.0
        %3552 = vmatpush1.msra.mxu0 0.0
        %v3553 = vand.u32 %v2726, 4294901760
        %3554 = vmatprep.mubr.f32.mxu0 %v3553
        %v3555 = vand.u32 %v2684, 4294901760
        %3556 = vmatmul.mubr.f32.gmra.mrb[0].mxu0 %v3555
        %v3557 = vpop.f32.mrb[0].mxu0
        %v3558 = vadd.f32 %v3447, %v3557
        %v3559 = vpop.f32.mrb[0].mxu0
        %v3560 = vand.u32 %v2728, 4294901760
        %3561 = vmatprep.mubr.f32.mxu0 %v3560
        %v3562 = vand.u32 %v2689, 4294901760
        %3563 = vmatmul.mubr.f32.gmra.mrb[0].mxu0 %v3562
        %v3564 = vpop.f32.mrb[0].mxu0
        %v3565 = vadd.f32 %v3454, %v3564
        %v3566 = vpop.f32.mrb[0].mxu0
        %v3567 = vand.u32 %v2730, 4294901760
        %3568 = vmatprep.mubr.f32.mxu0 %v3567
        %v3569 = vand.u32 %v2694, 4294901760
        %3570 = vmatmul.mubr.f32.gmra.mrb[0].mxu0 %v3569
        %v3571 = vpop.f32.mrb[0].mxu0
        %v3572 = vadd.f32 %v3461, %v3571
        %v3573 = vpop.f32.mrb[0].mxu0
        %v3574 = vand.u32 %v2732, 4294901760
        %3575 = vmatprep.mubr.f32.mxu0 %v3574
        %v3576 = vand.u32 %v2699, 4294901760
        %3577 = vmatmul.mubr.f32.gmra.mrb[0].mxu0 %v3576
        %v3578 = vpop.f32.mrb[0].mxu0
        %v3579 = vadd.f32 %v3468, %v3578
        %v3580 = vpop.f32.mrb[0].mxu0
        %3581 = vdwg.mxu0
        %v3582 = vsel %vm2725, %v2649, 0
        %v3584 = vsel %vm2725, %v2631, 0
        %v3586 = vsel %vm2725, %v2651, 0
        %v3588 = vsel %vm2725, %v2637, 0
        %3590 = vmatprep.subr.mxu0 0.0
        %v3591 = vand.u32 %v2656, 4294901760
        %3592 = vmatpush1.msra.mxu0 %v3591
        %3593 = vmatprep.subr.mxu0 0.0
        %v3594 = vand.u32 %v2657, 4294901760
        %3595 = vmatpush1.msra.mxu0 %v3594
        %3596 = vmatprep.subr.mxu0 0.0
        %v3597 = vand.u32 %v2658, 4294901760
        %3598 = vmatpush1.msra.mxu0 %v3597
        %3599 = vmatprep.subr.mxu0 0.0
        %v3600 = vand.u32 %v2659, 4294901760
        %3601 = vmatpush1.msra.mxu0 %v3600
        %3602 = vmatprep.subr.mxu0 0.0
        %v3603 = vand.u32 %v2660, 4294901760
        %3604 = vmatpush1.msra.mxu0 %v3603
        %3605 = vmatprep.subr.mxu0 0.0
        %v3606 = vand.u32 %v2661, 4294901760
        %3607 = vmatpush1.msra.mxu0 %v3606
        %3608 = vmatprep.subr.mxu0 0.0
        %v3609 = vand.u32 %v2662, 4294901760
        %3610 = vmatpush1.msra.mxu0 %v3609
        %3611 = vmatprep.subr.mxu0 0.0
        %v3612 = vand.u32 %v2663, 4294901760
        %3613 = vmatpush1.msra.mxu0 %v3612
        %3614 = vmatprep.subr.mxu0 0.0
        %v3615 = vand.u32 %v2664, 4294901760
        %3616 = vmatpush1.msra.mxu0 %v3615
        %3617 = vmatprep.subr.mxu0 0.0
        %v3618 = vand.u32 %v2665, 4294901760
        %3619 = vmatpush1.msra.mxu0 %v3618
        %3620 = vmatprep.subr.mxu0 0.0
        %v3621 = vand.u32 %v2666, 4294901760
        %3622 = vmatpush1.msra.mxu0 %v3621
        %3623 = vmatprep.subr.mxu0 0.0
        %v3624 = vand.u32 %v2667, 4294901760
        %3625 = vmatpush1.msra.mxu0 %v3624
        %3626 = vmatprep.subr.mxu0 0.0
        %v3627 = vand.u32 %v2668, 4294901760
        %3628 = vmatpush1.msra.mxu0 %v3627
        %3629 = vmatprep.subr.mxu0 0.0
        %v3630 = vand.u32 %v2669, 4294901760
        %3631 = vmatpush1.msra.mxu0 %v3630
        %3632 = vmatprep.subr.mxu0 0.0
        %v3633 = vand.u32 %v2670, 4294901760
        %3634 = vmatpush1.msra.mxu0 %v3633
        %3635 = vmatprep.subr.mxu0 0.0
        %v3636 = vand.u32 %v2671, 4294901760
        %3637 = vmatpush1.msra.mxu0 %v3636
        %3638 = vmatprep.subr.mxu0 0.0
        %v3639 = vand.u32 %v2672, 4294901760
        %3640 = vmatpush1.msra.mxu0 %v3639
        %3641 = vmatprep.subr.mxu0 0.0
        %v3642 = vand.u32 %v2673, 4294901760
        %3643 = vmatpush1.msra.mxu0 %v3642
        %3644 = vmatprep.subr.mxu0 0.0
        %3645 = vmatpush1.msra.mxu0 0.0
        %3646 = vmatprep.subr.mxu0 0.0
        %3647 = vmatpush1.msra.mxu0 0.0
        %3648 = vmatprep.subr.mxu0 0.0
        %3649 = vmatpush1.msra.mxu0 0.0
        %3650 = vmatprep.subr.mxu0 0.0
        %3651 = vmatpush1.msra.mxu0 0.0
        %3652 = vmatprep.subr.mxu0 0.0
        %3653 = vmatpush1.msra.mxu0 0.0
        %3654 = vmatprep.subr.mxu0 0.0
        %3655 = vmatpush1.msra.mxu0 0.0
        %3656 = vmatprep.subr.mxu0 0.0
        %3657 = vmatpush1.msra.mxu0 0.0
        %3658 = vmatprep.subr.mxu0 0.0
        %3659 = vmatpush1.msra.mxu0 0.0
        %3660 = vmatprep.subr.mxu0 0.0
        %3661 = vmatpush1.msra.mxu0 0.0
        %3662 = vmatprep.subr.mxu0 0.0
        %3663 = vmatpush1.msra.mxu0 0.0
        %3664 = vmatprep.subr.mxu0 0.0
        %3665 = vmatpush1.msra.mxu0 0.0
        %3666 = vmatprep.subr.mxu0 0.0
        %3667 = vmatpush1.msra.mxu0 0.0
        %3668 = vmatprep.subr.mxu0 0.0
        %3669 = vmatpush1.msra.mxu0 0.0
        %3670 = vmatprep.subr.mxu0 0.0
        %3671 = vmatpush1.msra.mxu0 0.0
        %v3672 = vand.u32 %v3582, 4294901760
        %v3673 = vsub.f32 %v3582, %v3672
        %v3674 = vand.u32 %v3673, 4294901760
        %v3675 = vsub.f32 %v3673, %v3674
        %v3676 = vand.u32 %v3675, 4294901760
        %3677 = vmatprep.mubr.f32.mxu0 %v3676
        %v3678 = vand.u32 %v2648, 4294901760
        %v3679 = vsub.f32 %v2648, %v3678
        %v3680 = vand.u32 %v3679, 4294901760
        %v3681 = vsub.f32 %v3679, %v3680
        %v3682 = vand.u32 %v3681, 4294901760
        %3683 = vmatmul.mubr.f32.gmra.mrb[0].mxu0 %v3682
        %v3684 = vpop.f32.mrb[0].mxu0
        %v3685 = vadd.f32 %v3558, %v3684
        %v3686 = vpop.f32.mrb[0].mxu0
        %v3687 = vand.u32 %v3584, 4294901760
        %v3688 = vsub.f32 %v3584, %v3687
        %v3689 = vand.u32 %v3688, 4294901760
        %v3690 = vsub.f32 %v3688, %v3689
        %v3691 = vand.u32 %v3690, 4294901760
        %3692 = vmatprep.mubr.f32.mxu0 %v3691
        %v3693 = vand.u32 %v2629, 4294901760
        %v3694 = vsub.f32 %v2629, %v3693
        %v3695 = vand.u32 %v3694, 4294901760
        %v3696 = vsub.f32 %v3694, %v3695
        %v3697 = vand.u32 %v3696, 4294901760
        %3698 = vmatmul.mubr.f32.gmra.mrb[0].mxu0 %v3697
        %v3699 = vpop.f32.mrb[0].mxu0
        %v3700 = vadd.f32 %v3565, %v3699
        %v3701 = vpop.f32.mrb[0].mxu0
        %v3702 = vand.u32 %v3586, 4294901760
        %v3703 = vsub.f32 %v3586, %v3702
        %v3704 = vand.u32 %v3703, 4294901760
        %v3705 = vsub.f32 %v3703, %v3704
        %v3706 = vand.u32 %v3705, 4294901760
        %3707 = vmatprep.mubr.f32.mxu0 %v3706
        %v3708 = vand.u32 %v2650, 4294901760
        %v3709 = vsub.f32 %v2650, %v3708
        %v3710 = vand.u32 %v3709, 4294901760
        %v3711 = vsub.f32 %v3709, %v3710
        %v3712 = vand.u32 %v3711, 4294901760
        %3713 = vmatmul.mubr.f32.gmra.mrb[0].mxu0 %v3712
        %v3714 = vpop.f32.mrb[0].mxu0
        %v3715 = vadd.f32 %v3572, %v3714
        %v3716 = vpop.f32.mrb[0].mxu0
        %v3717 = vand.u32 %v3588, 4294901760
        %v3718 = vsub.f32 %v3588, %v3717
        %v3719 = vand.u32 %v3718, 4294901760
        %v3720 = vsub.f32 %v3718, %v3719
        %v3721 = vand.u32 %v3720, 4294901760
        %3722 = vmatprep.mubr.f32.mxu0 %v3721
        %v3723 = vand.u32 %v2635, 4294901760
        %v3724 = vsub.f32 %v2635, %v3723
        %v3725 = vand.u32 %v3724, 4294901760
        %v3726 = vsub.f32 %v3724, %v3725
        %v3727 = vand.u32 %v3726, 4294901760
        %3728 = vmatmul.mubr.f32.gmra.mrb[0].mxu0 %v3727
        %v3729 = vpop.f32.mrb[0].mxu0
        %v3730 = vadd.f32 %v3579, %v3729
        %v3731 = vpop.f32.mrb[0].mxu0
        %3732 = vdwg.mxu0
        %3733 = vmatprep.subr.mxu0 0.0
        %v3734 = vand.u32 %v2656, 4294901760
        %v3735 = vsub.f32 %v2656, %v3734
        %v3736 = vand.u32 %v3735, 4294901760
        %v3737 = vsub.f32 %v3735, %v3736
        %v3738 = vand.u32 %v3737, 4294901760
        %3739 = vmatpush1.msra.mxu0 %v3738
        %3740 = vmatprep.subr.mxu0 0.0
        %v3741 = vand.u32 %v2657, 4294901760
        %v3742 = vsub.f32 %v2657, %v3741
        %v3743 = vand.u32 %v3742, 4294901760
        %v3744 = vsub.f32 %v3742, %v3743
        %v3745 = vand.u32 %v3744, 4294901760
        %3746 = vmatpush1.msra.mxu0 %v3745
        %3747 = vmatprep.subr.mxu0 0.0
        %v3748 = vand.u32 %v2658, 4294901760
        %v3749 = vsub.f32 %v2658, %v3748
        %v3750 = vand.u32 %v3749, 4294901760
        %v3751 = vsub.f32 %v3749, %v3750
        %v3752 = vand.u32 %v3751, 4294901760
        %3753 = vmatpush1.msra.mxu0 %v3752
        %3754 = vmatprep.subr.mxu0 0.0
        %v3755 = vand.u32 %v2659, 4294901760
        %v3756 = vsub.f32 %v2659, %v3755
        %v3757 = vand.u32 %v3756, 4294901760
        %v3758 = vsub.f32 %v3756, %v3757
        %v3759 = vand.u32 %v3758, 4294901760
        %3760 = vmatpush1.msra.mxu0 %v3759
        %3761 = vmatprep.subr.mxu0 0.0
        %v3762 = vand.u32 %v2660, 4294901760
        %v3763 = vsub.f32 %v2660, %v3762
        %v3764 = vand.u32 %v3763, 4294901760
        %v3765 = vsub.f32 %v3763, %v3764
        %v3766 = vand.u32 %v3765, 4294901760
        %3767 = vmatpush1.msra.mxu0 %v3766
        %3768 = vmatprep.subr.mxu0 0.0
        %v3769 = vand.u32 %v2661, 4294901760
        %v3770 = vsub.f32 %v2661, %v3769
        %v3771 = vand.u32 %v3770, 4294901760
        %v3772 = vsub.f32 %v3770, %v3771
        %v3773 = vand.u32 %v3772, 4294901760
        %3774 = vmatpush1.msra.mxu0 %v3773
        %3775 = vmatprep.subr.mxu0 0.0
        %v3776 = vand.u32 %v2662, 4294901760
        %v3777 = vsub.f32 %v2662, %v3776
        %v3778 = vand.u32 %v3777, 4294901760
        %v3779 = vsub.f32 %v3777, %v3778
        %v3780 = vand.u32 %v3779, 4294901760
        %3781 = vmatpush1.msra.mxu0 %v3780
        %3782 = vmatprep.subr.mxu0 0.0
        %v3783 = vand.u32 %v2663, 4294901760
        %v3784 = vsub.f32 %v2663, %v3783
        %v3785 = vand.u32 %v3784, 4294901760
        %v3786 = vsub.f32 %v3784, %v3785
        %v3787 = vand.u32 %v3786, 4294901760
        %3788 = vmatpush1.msra.mxu0 %v3787
        %3789 = vmatprep.subr.mxu0 0.0
        %v3790 = vand.u32 %v2664, 4294901760
        %v3791 = vsub.f32 %v2664, %v3790
        %v3792 = vand.u32 %v3791, 4294901760
        %v3793 = vsub.f32 %v3791, %v3792
        %v3794 = vand.u32 %v3793, 4294901760
        %3795 = vmatpush1.msra.mxu0 %v3794
        %3796 = vmatprep.subr.mxu0 0.0
        %v3797 = vand.u32 %v2665, 4294901760
        %v3798 = vsub.f32 %v2665, %v3797
        %v3799 = vand.u32 %v3798, 4294901760
        %v3800 = vsub.f32 %v3798, %v3799
        %v3801 = vand.u32 %v3800, 4294901760
        %3802 = vmatpush1.msra.mxu0 %v3801
        %3803 = vmatprep.subr.mxu0 0.0
        %v3804 = vand.u32 %v2666, 4294901760
        %v3805 = vsub.f32 %v2666, %v3804
        %v3806 = vand.u32 %v3805, 4294901760
        %v3807 = vsub.f32 %v3805, %v3806
        %v3808 = vand.u32 %v3807, 4294901760
        %3809 = vmatpush1.msra.mxu0 %v3808
        %3810 = vmatprep.subr.mxu0 0.0
        %v3811 = vand.u32 %v2667, 4294901760
        %v3812 = vsub.f32 %v2667, %v3811
        %v3813 = vand.u32 %v3812, 4294901760
        %v3814 = vsub.f32 %v3812, %v3813
        %v3815 = vand.u32 %v3814, 4294901760
        %3816 = vmatpush1.msra.mxu0 %v3815
        %3817 = vmatprep.subr.mxu0 0.0
        %v3818 = vand.u32 %v2668, 4294901760
        %v3819 = vsub.f32 %v2668, %v3818
        %v3820 = vand.u32 %v3819, 4294901760
        %v3821 = vsub.f32 %v3819, %v3820
        %v3822 = vand.u32 %v3821, 4294901760
        %3823 = vmatpush1.msra.mxu0 %v3822
        %3824 = vmatprep.subr.mxu0 0.0
        %v3825 = vand.u32 %v2669, 4294901760
        %v3826 = vsub.f32 %v2669, %v3825
        %v3827 = vand.u32 %v3826, 4294901760
        %v3828 = vsub.f32 %v3826, %v3827
        %v3829 = vand.u32 %v3828, 4294901760
        %3830 = vmatpush1.msra.mxu0 %v3829
        %3831 = vmatprep.subr.mxu0 0.0
        %v3832 = vand.u32 %v2670, 4294901760
        %v3833 = vsub.f32 %v2670, %v3832
        %v3834 = vand.u32 %v3833, 4294901760
        %v3835 = vsub.f32 %v3833, %v3834
        %v3836 = vand.u32 %v3835, 4294901760
        %3837 = vmatpush1.msra.mxu0 %v3836
        %3838 = vmatprep.subr.mxu0 0.0
        %v3839 = vand.u32 %v2671, 4294901760
        %v3840 = vsub.f32 %v2671, %v3839
        %v3841 = vand.u32 %v3840, 4294901760
        %v3842 = vsub.f32 %v3840, %v3841
        %v3843 = vand.u32 %v3842, 4294901760
        %3844 = vmatpush1.msra.mxu0 %v3843
        %3845 = vmatprep.subr.mxu0 0.0
        %v3846 = vand.u32 %v2672, 4294901760
        %v3847 = vsub.f32 %v2672, %v3846
        %v3848 = vand.u32 %v3847, 4294901760
        %v3849 = vsub.f32 %v3847, %v3848
        %v3850 = vand.u32 %v3849, 4294901760
        %3851 = vmatpush1.msra.mxu0 %v3850
        %3852 = vmatprep.subr.mxu0 0.0
        %v3853 = vand.u32 %v2673, 4294901760
        %v3854 = vsub.f32 %v2673, %v3853
        %v3855 = vand.u32 %v3854, 4294901760
        %v3856 = vsub.f32 %v3854, %v3855
        %v3857 = vand.u32 %v3856, 4294901760
        %3858 = vmatpush1.msra.mxu0 %v3857
        %3859 = vmatprep.subr.mxu0 0.0
        %3860 = vmatpush1.msra.mxu0 0.0
        %3861 = vmatprep.subr.mxu0 0.0
        %3862 = vmatpush1.msra.mxu0 0.0
        %3863 = vmatprep.subr.mxu0 0.0
        %3864 = vmatpush1.msra.mxu0 0.0
        %3865 = vmatprep.subr.mxu0 0.0
        %3866 = vmatpush1.msra.mxu0 0.0
        %3867 = vmatprep.subr.mxu0 0.0
        %3868 = vmatpush1.msra.mxu0 0.0
        %3869 = vmatprep.subr.mxu0 0.0
        %3870 = vmatpush1.msra.mxu0 0.0
        %3871 = vmatprep.subr.mxu0 0.0
        %3872 = vmatpush1.msra.mxu0 0.0
        %3873 = vmatprep.subr.mxu0 0.0
        %3874 = vmatpush1.msra.mxu0 0.0
        %3875 = vmatprep.subr.mxu0 0.0
        %3876 = vmatpush1.msra.mxu0 0.0
        %3877 = vmatprep.subr.mxu0 0.0
        %3878 = vmatpush1.msra.mxu0 0.0
        %3879 = vmatprep.subr.mxu0 0.0
        %3880 = vmatpush1.msra.mxu0 0.0
        %3881 = vmatprep.subr.mxu0 0.0
        %3882 = vmatpush1.msra.mxu0 0.0
        %3883 = vmatprep.subr.mxu0 0.0
        %3884 = vmatpush1.msra.mxu0 0.0
        %3885 = vmatprep.subr.mxu0 0.0
        %3886 = vmatpush1.msra.mxu0 0.0
        %v3887 = vand.u32 %v3582, 4294901760
        %3888 = vmatprep.mubr.f32.mxu0 %v3887
        %v3889 = vand.u32 %v2648, 4294901760
        %3890 = vmatmul.mubr.f32.gmra.mrb[0].mxu0 %v3889
        %v3891 = vpop.f32.mrb[0].mxu0
        %v3892 = vadd.f32 %v3685, %v3891
        %v3893 = vpop.f32.mrb[0].mxu0
        %v3894 = vand.u32 %v3584, 4294901760
        %3895 = vmatprep.mubr.f32.mxu0 %v3894
        %v3896 = vand.u32 %v2629, 4294901760
        %3897 = vmatmul.mubr.f32.gmra.mrb[0].mxu0 %v3896
        %v3898 = vpop.f32.mrb[0].mxu0
        %v3899 = vadd.f32 %v3700, %v3898
        %v3900 = vpop.f32.mrb[0].mxu0
        %v3901 = vand.u32 %v3586, 4294901760
        %3902 = vmatprep.mubr.f32.mxu0 %v3901
        %v3903 = vand.u32 %v2650, 4294901760
        %3904 = vmatmul.mubr.f32.gmra.mrb[0].mxu0 %v3903
        %v3905 = vpop.f32.mrb[0].mxu0
        %v3906 = vadd.f32 %v3715, %v3905
        %v3907 = vpop.f32.mrb[0].mxu0
        %v3908 = vand.u32 %v3588, 4294901760
        %3909 = vmatprep.mubr.f32.mxu0 %v3908
        %v3910 = vand.u32 %v2635, 4294901760
        %3911 = vmatmul.mubr.f32.gmra.mrb[0].mxu0 %v3910
        %v3912 = vpop.f32.mrb[0].mxu0
        %v3913 = vadd.f32 %v3730, %v3912
        %v3914 = vpop.f32.mrb[0].mxu0
        %3915 = vdwg.mxu0
        %3916 = vmatprep.subr.mxu0 0.0
        %v3917 = vand.u32 %v2656, 4294901760
        %v3918 = vsub.f32 %v2656, %v3917
        %3919 = vmatpush1.msra.mxu0 %v3918
        %3920 = vmatprep.subr.mxu0 0.0
        %v3921 = vand.u32 %v2657, 4294901760
        %v3922 = vsub.f32 %v2657, %v3921
        %3923 = vmatpush1.msra.mxu0 %v3922
        %3924 = vmatprep.subr.mxu0 0.0
        %v3925 = vand.u32 %v2658, 4294901760
        %v3926 = vsub.f32 %v2658, %v3925
        %3927 = vmatpush1.msra.mxu0 %v3926
        %3928 = vmatprep.subr.mxu0 0.0
        %v3929 = vand.u32 %v2659, 4294901760
        %v3930 = vsub.f32 %v2659, %v3929
        %3931 = vmatpush1.msra.mxu0 %v3930
        %3932 = vmatprep.subr.mxu0 0.0
        %v3933 = vand.u32 %v2660, 4294901760
        %v3934 = vsub.f32 %v2660, %v3933
        %3935 = vmatpush1.msra.mxu0 %v3934
        %3936 = vmatprep.subr.mxu0 0.0
        %v3937 = vand.u32 %v2661, 4294901760
        %v3938 = vsub.f32 %v2661, %v3937
        %3939 = vmatpush1.msra.mxu0 %v3938
        %3940 = vmatprep.subr.mxu0 0.0
        %v3941 = vand.u32 %v2662, 4294901760
        %v3942 = vsub.f32 %v2662, %v3941
        %3943 = vmatpush1.msra.mxu0 %v3942
        %3944 = vmatprep.subr.mxu0 0.0
        %v3945 = vand.u32 %v2663, 4294901760
        %v3946 = vsub.f32 %v2663, %v3945
        %3947 = vmatpush1.msra.mxu0 %v3946
        %3948 = vmatprep.subr.mxu0 0.0
        %v3949 = vand.u32 %v2664, 4294901760
        %v3950 = vsub.f32 %v2664, %v3949
        %3951 = vmatpush1.msra.mxu0 %v3950
        %3952 = vmatprep.subr.mxu0 0.0
        %v3953 = vand.u32 %v2665, 4294901760
        %v3954 = vsub.f32 %v2665, %v3953
        %3955 = vmatpush1.msra.mxu0 %v3954
        %3956 = vmatprep.subr.mxu0 0.0
        %v3957 = vand.u32 %v2666, 4294901760
        %v3958 = vsub.f32 %v2666, %v3957
        %3959 = vmatpush1.msra.mxu0 %v3958
        %3960 = vmatprep.subr.mxu0 0.0
        %v3961 = vand.u32 %v2667, 4294901760
        %v3962 = vsub.f32 %v2667, %v3961
        %3963 = vmatpush1.msra.mxu0 %v3962
        %3964 = vmatprep.subr.mxu0 0.0
        %v3965 = vand.u32 %v2668, 4294901760
        %v3966 = vsub.f32 %v2668, %v3965
        %3967 = vmatpush1.msra.mxu0 %v3966
        %3968 = vmatprep.subr.mxu0 0.0
        %v3969 = vand.u32 %v2669, 4294901760
        %v3970 = vsub.f32 %v2669, %v3969
        %3971 = vmatpush1.msra.mxu0 %v3970
        %3972 = vmatprep.subr.mxu0 0.0
        %v3973 = vand.u32 %v2670, 4294901760
        %v3974 = vsub.f32 %v2670, %v3973
        %3975 = vmatpush1.msra.mxu0 %v3974
        %3976 = vmatprep.subr.mxu0 0.0
        %v3977 = vand.u32 %v2671, 4294901760
        %v3978 = vsub.f32 %v2671, %v3977
        %3979 = vmatpush1.msra.mxu0 %v3978
        %3980 = vmatprep.subr.mxu0 0.0
        %v3981 = vand.u32 %v2672, 4294901760
        %v3982 = vsub.f32 %v2672, %v3981
        %3983 = vmatpush1.msra.mxu0 %v3982
        %3984 = vmatprep.subr.mxu0 0.0
        %v3985 = vand.u32 %v2673, 4294901760
        %v3986 = vsub.f32 %v2673, %v3985
        %3987 = vmatpush1.msra.mxu0 %v3986
        %3988 = vmatprep.subr.mxu0 0.0
        %3989 = vmatpush1.msra.mxu0 0.0
        %3990 = vmatprep.subr.mxu0 0.0
        %3991 = vmatpush1.msra.mxu0 0.0
        %3992 = vmatprep.subr.mxu0 0.0
        %3993 = vmatpush1.msra.mxu0 0.0
        %3994 = vmatprep.subr.mxu0 0.0
        %3995 = vmatpush1.msra.mxu0 0.0
        %3996 = vmatprep.subr.mxu0 0.0
        %3997 = vmatpush1.msra.mxu0 0.0
        %3998 = vmatprep.subr.mxu0 0.0
        %3999 = vmatpush1.msra.mxu0 0.0
        %4000 = vmatprep.subr.mxu0 0.0
        %4001 = vmatpush1.msra.mxu0 0.0
        %4002 = vmatprep.subr.mxu0 0.0
        %4003 = vmatpush1.msra.mxu0 0.0
        %4004 = vmatprep.subr.mxu0 0.0
        %4005 = vmatpush1.msra.mxu0 0.0
        %4006 = vmatprep.subr.mxu0 0.0
        %4007 = vmatpush1.msra.mxu0 0.0
        %4008 = vmatprep.subr.mxu0 0.0
        %4009 = vmatpush1.msra.mxu0 0.0
        %4010 = vmatprep.subr.mxu0 0.0
        %4011 = vmatpush1.msra.mxu0 0.0
        %4012 = vmatprep.subr.mxu0 0.0
        %4013 = vmatpush1.msra.mxu0 0.0
        %4014 = vmatprep.subr.mxu0 0.0
        %4015 = vmatpush1.msra.mxu0 0.0
        %v4016 = vand.u32 %v3582, 4294901760
        %v4017 = vsub.f32 %v3582, %v4016
        %4018 = vmatprep.mubr.f32.mxu0 %v4017
        %v4019 = vand.u32 %v2648, 4294901760
        %v4020 = vsub.f32 %v2648, %v4019
        %4021 = vmatmul.mubr.f32.gmra.mrb[0].mxu0 %v4020
        %v4022 = vpop.f32.mrb[0].mxu0
        %v4023 = vadd.f32 %v3892, %v4022
        %v4024 = vpop.f32.mrb[0].mxu0
        %v4025 = vand.u32 %v3584, 4294901760
        %v4026 = vsub.f32 %v3584, %v4025
        %4027 = vmatprep.mubr.f32.mxu0 %v4026
        %v4028 = vand.u32 %v2629, 4294901760
        %v4029 = vsub.f32 %v2629, %v4028
        %4030 = vmatmul.mubr.f32.gmra.mrb[0].mxu0 %v4029
        %v4031 = vpop.f32.mrb[0].mxu0
        %v4032 = vadd.f32 %v3899, %v4031
        %v4033 = vpop.f32.mrb[0].mxu0
        %v4034 = vand.u32 %v3586, 4294901760
        %v4035 = vsub.f32 %v3586, %v4034
        %4036 = vmatprep.mubr.f32.mxu0 %v4035
        %v4037 = vand.u32 %v2650, 4294901760
        %v4038 = vsub.f32 %v2650, %v4037
        %4039 = vmatmul.mubr.f32.gmra.mrb[0].mxu0 %v4038
        %v4040 = vpop.f32.mrb[0].mxu0
        %v4041 = vadd.f32 %v3906, %v4040
        %v4042 = vpop.f32.mrb[0].mxu0
        %v4043 = vand.u32 %v3588, 4294901760
        %v4044 = vsub.f32 %v3588, %v4043
        %4045 = vmatprep.mubr.f32.mxu0 %v4044
        %v4046 = vand.u32 %v2635, 4294901760
        %v4047 = vsub.f32 %v2635, %v4046
        %4048 = vmatmul.mubr.f32.gmra.mrb[0].mxu0 %v4047
        %v4049 = vpop.f32.mrb[0].mxu0
        %v4050 = vadd.f32 %v3913, %v4049
        %v4051 = vpop.f32.mrb[0].mxu0
        %4052 = vdwg.mxu0
        %4053 = vmatprep.subr.mxu0 0.0
        %v4054 = vand.u32 %v2656, 4294901760
        %4055 = vmatpush1.msra.mxu0 %v4054
        %4056 = vmatprep.subr.mxu0 0.0
        %v4057 = vand.u32 %v2657, 4294901760
        %4058 = vmatpush1.msra.mxu0 %v4057
        %4059 = vmatprep.subr.mxu0 0.0
        %v4060 = vand.u32 %v2658, 4294901760
        %4061 = vmatpush1.msra.mxu0 %v4060
        %4062 = vmatprep.subr.mxu0 0.0
        %v4063 = vand.u32 %v2659, 4294901760
        %4064 = vmatpush1.msra.mxu0 %v4063
        %4065 = vmatprep.subr.mxu0 0.0
        %v4066 = vand.u32 %v2660, 4294901760
        %4067 = vmatpush1.msra.mxu0 %v4066
        %4068 = vmatprep.subr.mxu0 0.0
        %v4069 = vand.u32 %v2661, 4294901760
        %4070 = vmatpush1.msra.mxu0 %v4069
        %4071 = vmatprep.subr.mxu0 0.0
        %v4072 = vand.u32 %v2662, 4294901760
        %4073 = vmatpush1.msra.mxu0 %v4072
        %4074 = vmatprep.subr.mxu0 0.0
        %v4075 = vand.u32 %v2663, 4294901760
        %4076 = vmatpush1.msra.mxu0 %v4075
        %4077 = vmatprep.subr.mxu0 0.0
        %v4078 = vand.u32 %v2664, 4294901760
        %4079 = vmatpush1.msra.mxu0 %v4078
        %4080 = vmatprep.subr.mxu0 0.0
        %v4081 = vand.u32 %v2665, 4294901760
        %4082 = vmatpush1.msra.mxu0 %v4081
        %4083 = vmatprep.subr.mxu0 0.0
        %v4084 = vand.u32 %v2666, 4294901760
        %4085 = vmatpush1.msra.mxu0 %v4084
        %4086 = vmatprep.subr.mxu0 0.0
        %v4087 = vand.u32 %v2667, 4294901760
        %4088 = vmatpush1.msra.mxu0 %v4087
        %4089 = vmatprep.subr.mxu0 0.0
        %v4090 = vand.u32 %v2668, 4294901760
        %4091 = vmatpush1.msra.mxu0 %v4090
        %4092 = vmatprep.subr.mxu0 0.0
        %v4093 = vand.u32 %v2669, 4294901760
        %4094 = vmatpush1.msra.mxu0 %v4093
        %4095 = vmatprep.subr.mxu0 0.0
        %v4096 = vand.u32 %v2670, 4294901760
        %4097 = vmatpush1.msra.mxu0 %v4096
        %4098 = vmatprep.subr.mxu0 0.0
        %v4099 = vand.u32 %v2671, 4294901760
        %4100 = vmatpush1.msra.mxu0 %v4099
        %4101 = vmatprep.subr.mxu0 0.0
        %v4102 = vand.u32 %v2672, 4294901760
        %4103 = vmatpush1.msra.mxu0 %v4102
        %4104 = vmatprep.subr.mxu0 0.0
        %v4105 = vand.u32 %v2673, 4294901760
        %4106 = vmatpush1.msra.mxu0 %v4105
        %4107 = vmatprep.subr.mxu0 0.0
        %4108 = vmatpush1.msra.mxu0 0.0
        %4109 = vmatprep.subr.mxu0 0.0
        %4110 = vmatpush1.msra.mxu0 0.0
        %4111 = vmatprep.subr.mxu0 0.0
        %4112 = vmatpush1.msra.mxu0 0.0
        %4113 = vmatprep.subr.mxu0 0.0
        %4114 = vmatpush1.msra.mxu0 0.0
        %4115 = vmatprep.subr.mxu0 0.0
        %4116 = vmatpush1.msra.mxu0 0.0
        %4117 = vmatprep.subr.mxu0 0.0
        %4118 = vmatpush1.msra.mxu0 0.0
        %4119 = vmatprep.subr.mxu0 0.0
        %4120 = vmatpush1.msra.mxu0 0.0
        %4121 = vmatprep.subr.mxu0 0.0
        %4122 = vmatpush1.msra.mxu0 0.0
        %4123 = vmatprep.subr.mxu0 0.0
        %4124 = vmatpush1.msra.mxu0 0.0
        %4125 = vmatprep.subr.mxu0 0.0
        %4126 = vmatpush1.msra.mxu0 0.0
        %4127 = vmatprep.subr.mxu0 0.0
        %4128 = vmatpush1.msra.mxu0 0.0
        %4129 = vmatprep.subr.mxu0 0.0
        %4130 = vmatpush1.msra.mxu0 0.0
        %4131 = vmatprep.subr.mxu0 0.0
        %4132 = vmatpush1.msra.mxu0 0.0
        %4133 = vmatprep.subr.mxu0 0.0
        %4134 = vmatpush1.msra.mxu0 0.0
        %v4135 = vand.u32 %v3582, 4294901760
        %v4136 = vsub.f32 %v3582, %v4135
        %v4137 = vand.u32 %v4136, 4294901760
        %4138 = vmatprep.mubr.f32.mxu0 %v4137
        %v4139 = vand.u32 %v2648, 4294901760
        %v4140 = vsub.f32 %v2648, %v4139
        %v4141 = vand.u32 %v4140, 4294901760
        %4142 = vmatmul.mubr.f32.gmra.mrb[0].mxu0 %v4141
        %v4143 = vpop.f32.mrb[0].mxu0
        %v4144 = vadd.f32 %v4023, %v4143
        %v4145 = vpop.f32.mrb[0].mxu0
        %v4146 = vand.u32 %v3584, 4294901760
        %v4147 = vsub.f32 %v3584, %v4146
        %v4148 = vand.u32 %v4147, 4294901760
        %4149 = vmatprep.mubr.f32.mxu0 %v4148
        %v4150 = vand.u32 %v2629, 4294901760
        %v4151 = vsub.f32 %v2629, %v4150
        %v4152 = vand.u32 %v4151, 4294901760
        %4153 = vmatmul.mubr.f32.gmra.mrb[0].mxu0 %v4152
        %v4154 = vpop.f32.mrb[0].mxu0
        %v4155 = vadd.f32 %v4032, %v4154
        %v4156 = vpop.f32.mrb[0].mxu0
        %v4157 = vand.u32 %v3586, 4294901760
        %v4158 = vsub.f32 %v3586, %v4157
        %v4159 = vand.u32 %v4158, 4294901760
        %4160 = vmatprep.mubr.f32.mxu0 %v4159
        %v4161 = vand.u32 %v2650, 4294901760
        %v4162 = vsub.f32 %v2650, %v4161
        %v4163 = vand.u32 %v4162, 4294901760
        %4164 = vmatmul.mubr.f32.gmra.mrb[0].mxu0 %v4163
        %v4165 = vpop.f32.mrb[0].mxu0
        %v4166 = vadd.f32 %v4041, %v4165
        %v4167 = vpop.f32.mrb[0].mxu0
        %v4168 = vand.u32 %v3588, 4294901760
        %v4169 = vsub.f32 %v3588, %v4168
        %v4170 = vand.u32 %v4169, 4294901760
        %4171 = vmatprep.mubr.f32.mxu0 %v4170
        %v4172 = vand.u32 %v2635, 4294901760
        %v4173 = vsub.f32 %v2635, %v4172
        %v4174 = vand.u32 %v4173, 4294901760
        %4175 = vmatmul.mubr.f32.gmra.mrb[0].mxu0 %v4174
        %v4176 = vpop.f32.mrb[0].mxu0
        %v4177 = vadd.f32 %v4050, %v4176
        %v4178 = vpop.f32.mrb[0].mxu0
        %4179 = vdwg.mxu0
        %4180 = vmatprep.subr.mxu0 0.0
        %v4181 = vand.u32 %v2656, 4294901760
        %v4182 = vsub.f32 %v2656, %v4181
        %v4183 = vand.u32 %v4182, 4294901760
        %4184 = vmatpush1.msra.mxu0 %v4183
        %4185 = vmatprep.subr.mxu0 0.0
        %v4186 = vand.u32 %v2657, 4294901760
        %v4187 = vsub.f32 %v2657, %v4186
        %v4188 = vand.u32 %v4187, 4294901760
        %4189 = vmatpush1.msra.mxu0 %v4188
        %4190 = vmatprep.subr.mxu0 0.0
        %v4191 = vand.u32 %v2658, 4294901760
        %v4192 = vsub.f32 %v2658, %v4191
        %v4193 = vand.u32 %v4192, 4294901760
        %4194 = vmatpush1.msra.mxu0 %v4193
        %4195 = vmatprep.subr.mxu0 0.0
        %v4196 = vand.u32 %v2659, 4294901760
        %v4197 = vsub.f32 %v2659, %v4196
        %v4198 = vand.u32 %v4197, 4294901760
        %4199 = vmatpush1.msra.mxu0 %v4198
        %4200 = vmatprep.subr.mxu0 0.0
        %v4201 = vand.u32 %v2660, 4294901760
        %v4202 = vsub.f32 %v2660, %v4201
        %v4203 = vand.u32 %v4202, 4294901760
        %4204 = vmatpush1.msra.mxu0 %v4203
        %4205 = vmatprep.subr.mxu0 0.0
        %v4206 = vand.u32 %v2661, 4294901760
        %v4207 = vsub.f32 %v2661, %v4206
        %v4208 = vand.u32 %v4207, 4294901760
        %4209 = vmatpush1.msra.mxu0 %v4208
        %4210 = vmatprep.subr.mxu0 0.0
        %v4211 = vand.u32 %v2662, 4294901760
        %v4212 = vsub.f32 %v2662, %v4211
        %v4213 = vand.u32 %v4212, 4294901760
        %4214 = vmatpush1.msra.mxu0 %v4213
        %4215 = vmatprep.subr.mxu0 0.0
        %v4216 = vand.u32 %v2663, 4294901760
        %v4217 = vsub.f32 %v2663, %v4216
        %v4218 = vand.u32 %v4217, 4294901760
        %4219 = vmatpush1.msra.mxu0 %v4218
        %4220 = vmatprep.subr.mxu0 0.0
        %v4221 = vand.u32 %v2664, 4294901760
        %v4222 = vsub.f32 %v2664, %v4221
        %v4223 = vand.u32 %v4222, 4294901760
        %4224 = vmatpush1.msra.mxu0 %v4223
        %4225 = vmatprep.subr.mxu0 0.0
        %v4226 = vand.u32 %v2665, 4294901760
        %v4227 = vsub.f32 %v2665, %v4226
        %v4228 = vand.u32 %v4227, 4294901760
        %4229 = vmatpush1.msra.mxu0 %v4228
        %4230 = vmatprep.subr.mxu0 0.0
        %v4231 = vand.u32 %v2666, 4294901760
        %v4232 = vsub.f32 %v2666, %v4231
        %v4233 = vand.u32 %v4232, 4294901760
        %4234 = vmatpush1.msra.mxu0 %v4233
        %4235 = vmatprep.subr.mxu0 0.0
        %v4236 = vand.u32 %v2667, 4294901760
        %v4237 = vsub.f32 %v2667, %v4236
        %v4238 = vand.u32 %v4237, 4294901760
        %4239 = vmatpush1.msra.mxu0 %v4238
        %4240 = vmatprep.subr.mxu0 0.0
        %v4241 = vand.u32 %v2668, 4294901760
        %v4242 = vsub.f32 %v2668, %v4241
        %v4243 = vand.u32 %v4242, 4294901760
        %4244 = vmatpush1.msra.mxu0 %v4243
        %4245 = vmatprep.subr.mxu0 0.0
        %v4246 = vand.u32 %v2669, 4294901760
        %v4247 = vsub.f32 %v2669, %v4246
        %v4248 = vand.u32 %v4247, 4294901760
        %4249 = vmatpush1.msra.mxu0 %v4248
        %4250 = vmatprep.subr.mxu0 0.0
        %v4251 = vand.u32 %v2670, 4294901760
        %v4252 = vsub.f32 %v2670, %v4251
        %v4253 = vand.u32 %v4252, 4294901760
        %4254 = vmatpush1.msra.mxu0 %v4253
        %4255 = vmatprep.subr.mxu0 0.0
        %v4256 = vand.u32 %v2671, 4294901760
        %v4257 = vsub.f32 %v2671, %v4256
        %v4258 = vand.u32 %v4257, 4294901760
        %4259 = vmatpush1.msra.mxu0 %v4258
        %4260 = vmatprep.subr.mxu0 0.0
        %v4261 = vand.u32 %v2672, 4294901760
        %v4262 = vsub.f32 %v2672, %v4261
        %v4263 = vand.u32 %v4262, 4294901760
        %4264 = vmatpush1.msra.mxu0 %v4263
        %4265 = vmatprep.subr.mxu0 0.0
        %v4266 = vand.u32 %v2673, 4294901760
        %v4267 = vsub.f32 %v2673, %v4266
        %v4268 = vand.u32 %v4267, 4294901760
        %4269 = vmatpush1.msra.mxu0 %v4268
        %4270 = vmatprep.subr.mxu0 0.0
        %4271 = vmatpush1.msra.mxu0 0.0
        %4272 = vmatprep.subr.mxu0 0.0
        %4273 = vmatpush1.msra.mxu0 0.0
        %4274 = vmatprep.subr.mxu0 0.0
        %4275 = vmatpush1.msra.mxu0 0.0
        %4276 = vmatprep.subr.mxu0 0.0
        %4277 = vmatpush1.msra.mxu0 0.0
        %4278 = vmatprep.subr.mxu0 0.0
        %4279 = vmatpush1.msra.mxu0 0.0
        %4280 = vmatprep.subr.mxu0 0.0
        %4281 = vmatpush1.msra.mxu0 0.0
        %4282 = vmatprep.subr.mxu0 0.0
        %4283 = vmatpush1.msra.mxu0 0.0
        %4284 = vmatprep.subr.mxu0 0.0
        %4285 = vmatpush1.msra.mxu0 0.0
        %4286 = vmatprep.subr.mxu0 0.0
        %4287 = vmatpush1.msra.mxu0 0.0
        %4288 = vmatprep.subr.mxu0 0.0
        %4289 = vmatpush1.msra.mxu0 0.0
        %4290 = vmatprep.subr.mxu0 0.0
        %4291 = vmatpush1.msra.mxu0 0.0
        %4292 = vmatprep.subr.mxu0 0.0
        %4293 = vmatpush1.msra.mxu0 0.0
        %4294 = vmatprep.subr.mxu0 0.0
        %4295 = vmatpush1.msra.mxu0 0.0
        %4296 = vmatprep.subr.mxu0 0.0
        %4297 = vmatpush1.msra.mxu0 0.0
        %v4298 = vand.u32 %v3582, 4294901760
        %4299 = vmatprep.mubr.f32.mxu0 %v4298
        %v4300 = vand.u32 %v2648, 4294901760
        %4301 = vmatmul.mubr.f32.gmra.mrb[0].mxu0 %v4300
        %v4302 = vpop.f32.mrb[0].mxu0
        %v4303 = vadd.f32 %v4144, %v4302
        %v4304 = vpop.f32.mrb[0].mxu0
        %v4305 = vand.u32 %v3584, 4294901760
        %4306 = vmatprep.mubr.f32.mxu0 %v4305
        %v4307 = vand.u32 %v2629, 4294901760
        %4308 = vmatmul.mubr.f32.gmra.mrb[0].mxu0 %v4307
        %v4309 = vpop.f32.mrb[0].mxu0
        %v4310 = vadd.f32 %v4155, %v4309
        %v4311 = vpop.f32.mrb[0].mxu0
        %v4312 = vand.u32 %v3586, 4294901760
        %4313 = vmatprep.mubr.f32.mxu0 %v4312
        %v4314 = vand.u32 %v2650, 4294901760
        %4315 = vmatmul.mubr.f32.gmra.mrb[0].mxu0 %v4314
        %v4316 = vpop.f32.mrb[0].mxu0
        %v4317 = vadd.f32 %v4166, %v4316
        %v4318 = vpop.f32.mrb[0].mxu0
        %v4319 = vand.u32 %v3588, 4294901760
        %4320 = vmatprep.mubr.f32.mxu0 %v4319
        %v4321 = vand.u32 %v2635, 4294901760
        %4322 = vmatmul.mubr.f32.gmra.mrb[0].mxu0 %v4321
        %v4323 = vpop.f32.mrb[0].mxu0
        %v4324 = vadd.f32 %v4177, %v4323
        %v4325 = vpop.f32.mrb[0].mxu0
        %4326 = vdwg.mxu0
        %4327 = vmatprep.subr.mxu0 0.0
        %v4328 = vand.u32 %v2656, 4294901760
        %4329 = vmatpush1.msra.mxu0 %v4328
        %4330 = vmatprep.subr.mxu0 0.0
        %v4331 = vand.u32 %v2657, 4294901760
        %4332 = vmatpush1.msra.mxu0 %v4331
        %4333 = vmatprep.subr.mxu0 0.0
        %v4334 = vand.u32 %v2658, 4294901760
        %4335 = vmatpush1.msra.mxu0 %v4334
        %4336 = vmatprep.subr.mxu0 0.0
        %v4337 = vand.u32 %v2659, 4294901760
        %4338 = vmatpush1.msra.mxu0 %v4337
        %4339 = vmatprep.subr.mxu0 0.0
        %v4340 = vand.u32 %v2660, 4294901760
        %4341 = vmatpush1.msra.mxu0 %v4340
        %4342 = vmatprep.subr.mxu0 0.0
        %v4343 = vand.u32 %v2661, 4294901760
        %4344 = vmatpush1.msra.mxu0 %v4343
        %4345 = vmatprep.subr.mxu0 0.0
        %v4346 = vand.u32 %v2662, 4294901760
        %4347 = vmatpush1.msra.mxu0 %v4346
        %4348 = vmatprep.subr.mxu0 0.0
        %v4349 = vand.u32 %v2663, 4294901760
        %4350 = vmatpush1.msra.mxu0 %v4349
        %4351 = vmatprep.subr.mxu0 0.0
        %v4352 = vand.u32 %v2664, 4294901760
        %4353 = vmatpush1.msra.mxu0 %v4352
        %4354 = vmatprep.subr.mxu0 0.0
        %v4355 = vand.u32 %v2665, 4294901760
        %4356 = vmatpush1.msra.mxu0 %v4355
        %4357 = vmatprep.subr.mxu0 0.0
        %v4358 = vand.u32 %v2666, 4294901760
        %4359 = vmatpush1.msra.mxu0 %v4358
        %4360 = vmatprep.subr.mxu0 0.0
        %v4361 = vand.u32 %v2667, 4294901760
        %4362 = vmatpush1.msra.mxu0 %v4361
        %4363 = vmatprep.subr.mxu0 0.0
        %v4364 = vand.u32 %v2668, 4294901760
        %4365 = vmatpush1.msra.mxu0 %v4364
        %4366 = vmatprep.subr.mxu0 0.0
        %v4367 = vand.u32 %v2669, 4294901760
        %4368 = vmatpush1.msra.mxu0 %v4367
        %4369 = vmatprep.subr.mxu0 0.0
        %v4370 = vand.u32 %v2670, 4294901760
        %4371 = vmatpush1.msra.mxu0 %v4370
        %4372 = vmatprep.subr.mxu0 0.0
        %v4373 = vand.u32 %v2671, 4294901760
        %4374 = vmatpush1.msra.mxu0 %v4373
        %4375 = vmatprep.subr.mxu0 0.0
        %v4376 = vand.u32 %v2672, 4294901760
        %4377 = vmatpush1.msra.mxu0 %v4376
        %4378 = vmatprep.subr.mxu0 0.0
        %v4379 = vand.u32 %v2673, 4294901760
        %4380 = vmatpush1.msra.mxu0 %v4379
        %4381 = vmatprep.subr.mxu0 0.0
        %4382 = vmatpush1.msra.mxu0 0.0
        %4383 = vmatprep.subr.mxu0 0.0
        %4384 = vmatpush1.msra.mxu0 0.0
        %4385 = vmatprep.subr.mxu0 0.0
        %4386 = vmatpush1.msra.mxu0 0.0
        %4387 = vmatprep.subr.mxu0 0.0
        %4388 = vmatpush1.msra.mxu0 0.0
        %4389 = vmatprep.subr.mxu0 0.0
        %4390 = vmatpush1.msra.mxu0 0.0
        %4391 = vmatprep.subr.mxu0 0.0
        %4392 = vmatpush1.msra.mxu0 0.0
        %4393 = vmatprep.subr.mxu0 0.0
        %4394 = vmatpush1.msra.mxu0 0.0
        %4395 = vmatprep.subr.mxu0 0.0
        %4396 = vmatpush1.msra.mxu0 0.0
        %4397 = vmatprep.subr.mxu0 0.0
        %4398 = vmatpush1.msra.mxu0 0.0
        %4399 = vmatprep.subr.mxu0 0.0
        %4400 = vmatpush1.msra.mxu0 0.0
        %4401 = vmatprep.subr.mxu0 0.0
        %4402 = vmatpush1.msra.mxu0 0.0
        %4403 = vmatprep.subr.mxu0 0.0
        %4404 = vmatpush1.msra.mxu0 0.0
        %4405 = vmatprep.subr.mxu0 0.0
        %4406 = vmatpush1.msra.mxu0 0.0
        %4407 = vmatprep.subr.mxu0 0.0
        %4408 = vmatpush1.msra.mxu0 0.0
        %v4409 = vand.u32 %v3582, 4294901760
        %4410 = vmatprep.mubr.f32.mxu0 %v4409
        %v4411 = vand.u32 %v2648, 4294901760
        %4412 = vmatmul.mubr.f32.gmra.mrb[0].mxu0 %v4411
        %v4413 = vpop.f32.mrb[0].mxu0
        %v4414 = vadd.f32 %v4303, %v4413
        %v4415 = vpop.f32.mrb[0].mxu0
        %v4416 = vand.u32 %v3584, 4294901760
        %4417 = vmatprep.mubr.f32.mxu0 %v4416
        %v4418 = vand.u32 %v2629, 4294901760
        %4419 = vmatmul.mubr.f32.gmra.mrb[0].mxu0 %v4418
        %v4420 = vpop.f32.mrb[0].mxu0
        %v4421 = vadd.f32 %v4310, %v4420
        %v4422 = vpop.f32.mrb[0].mxu0
        %v4423 = vand.u32 %v3586, 4294901760
        %4424 = vmatprep.mubr.f32.mxu0 %v4423
        %v4425 = vand.u32 %v2650, 4294901760
        %4426 = vmatmul.mubr.f32.gmra.mrb[0].mxu0 %v4425
        %v4427 = vpop.f32.mrb[0].mxu0
        %v4428 = vadd.f32 %v4317, %v4427
        %v4429 = vpop.f32.mrb[0].mxu0
        %v4430 = vand.u32 %v3588, 4294901760
        %4431 = vmatprep.mubr.f32.mxu0 %v4430
        %v4432 = vand.u32 %v2635, 4294901760
        %4433 = vmatmul.mubr.f32.gmra.mrb[0].mxu0 %v4432
        %v4434 = vpop.f32.mrb[0].mxu0
        %v4435 = vadd.f32 %v4324, %v4434
        %v4436 = vpop.f32.mrb[0].mxu0
        %4437 = vdwg.mxu0
        %v4438 = vrot.slane %v2648, 2
        %v4439 = vrot.slane %v2629, 2
        %v4440 = vsel %vm1855, %v4438, %v4439
        %v4441 = vrot.slane %v2649, 2
        %v4442 = vrot.slane %v2631, 2
        %v4443 = vsel %vm1855, %v4441, %v4442
        %v4444 = vrot.slane %v2652, 2
        %v4445 = vsel %vm1855, %v4439, %v4444
        %v4446 = vrot.slane %v2653, 2
        %v4447 = vsel %vm1855, %v4442, %v4446
        %v4448 = vrot.slane %v2650, 2
        %v4449 = vrot.slane %v2635, 2
        %v4450 = vsel %vm1855, %v4448, %v4449
        %v4451 = vrot.slane %v2651, 2
        %v4452 = vrot.slane %v2637, 2
        %v4453 = vsel %vm1855, %v4451, %v4452
        %v4454 = vrot.slane %v2654, 2
        %v4455 = vsel %vm1855, %v4449, %v4454
        %v4456 = vrot.slane %v2655, 2
        %v4457 = vsel %vm1855, %v4452, %v4456
        %s4462 = scalar_lea.vmem [#allocation7], 288
        %v4463 = vld [vmem:[%s4462] sm:$0xff]
        %v4464 = vld [vmem:[%s4462 + $0x8] sm:$0xff]
        %v4465 = vld [vmem:[%s4462 + $0x10] sm:$0xff]
        %v4466 = vld [vmem:[%s4462 + $0x18] sm:$0xff]
        %v4467 = vld [vmem:[%s4462 + $0x20] sm:$0xff]
        %v4468 = vld [vmem:[%s4462 + $0x28] sm:$0xff]
        %v4469 = vld [vmem:[%s4462 + $0x30] sm:$0xff]
        %v4470 = vld [vmem:[%s4462 + $0x38] sm:$0xff]
        %v4471 = vld [vmem:[%s4462 + $0x40] sm:$0xff]
        %v4472 = vld [vmem:[%s4462 + $0x48] sm:$0xff]
        %v4473 = vld [vmem:[%s4462 + $0x50] sm:$0xff]
        %v4474 = vld [vmem:[%s4462 + $0x58] sm:$0xff]
        %v4475 = vld [vmem:[%s4462 + $0x60] sm:$0xff]
        %v4476 = vld [vmem:[%s4462 + $0x68] sm:$0xff]
        %v4477 = vld [vmem:[%s4462 + $0x70] sm:$0xff]
        %v4478 = vld [vmem:[%s4462 + $0x78] sm:$0xff]
        %v4479 = vld [vmem:[%s4462 + $0x80] sm:$0xff]
        %v4480 = vld [vmem:[%s4462 + $0x88] sm:$0xff]
        %v4481 = vsel %vm2725, %v4443, 0
        %v4483 = vsel %vm2725, %v4447, 0
        %v4485 = vsel %vm2725, %v4453, 0
        %v4487 = vsel %vm2725, %v4457, 0
        %4489 = vmatprep.subr.mxu0 0.0
        %v4490 = vand.u32 %v4463, 4294901760
        %4491 = vmatpush1.msra.mxu0 %v4490
        %4492 = vmatprep.subr.mxu0 0.0
        %v4493 = vand.u32 %v4464, 4294901760
        %4494 = vmatpush1.msra.mxu0 %v4493
        %4495 = vmatprep.subr.mxu0 0.0
        %v4496 = vand.u32 %v4465, 4294901760
        %4497 = vmatpush1.msra.mxu0 %v4496
        %4498 = vmatprep.subr.mxu0 0.0
        %v4499 = vand.u32 %v4466, 4294901760
        %4500 = vmatpush1.msra.mxu0 %v4499
        %4501 = vmatprep.subr.mxu0 0.0
        %v4502 = vand.u32 %v4467, 4294901760
        %4503 = vmatpush1.msra.mxu0 %v4502
        %4504 = vmatprep.subr.mxu0 0.0
        %v4505 = vand.u32 %v4468, 4294901760
        %4506 = vmatpush1.msra.mxu0 %v4505
        %4507 = vmatprep.subr.mxu0 0.0
        %v4508 = vand.u32 %v4469, 4294901760
        %4509 = vmatpush1.msra.mxu0 %v4508
        %4510 = vmatprep.subr.mxu0 0.0
        %v4511 = vand.u32 %v4470, 4294901760
        %4512 = vmatpush1.msra.mxu0 %v4511
        %4513 = vmatprep.subr.mxu0 0.0
        %v4514 = vand.u32 %v4471, 4294901760
        %4515 = vmatpush1.msra.mxu0 %v4514
        %4516 = vmatprep.subr.mxu0 0.0
        %v4517 = vand.u32 %v4472, 4294901760
        %4518 = vmatpush1.msra.mxu0 %v4517
        %4519 = vmatprep.subr.mxu0 0.0
        %v4520 = vand.u32 %v4473, 4294901760
        %4521 = vmatpush1.msra.mxu0 %v4520
        %4522 = vmatprep.subr.mxu0 0.0
        %v4523 = vand.u32 %v4474, 4294901760
        %4524 = vmatpush1.msra.mxu0 %v4523
        %4525 = vmatprep.subr.mxu0 0.0
        %v4526 = vand.u32 %v4475, 4294901760
        %4527 = vmatpush1.msra.mxu0 %v4526
        %4528 = vmatprep.subr.mxu0 0.0
        %v4529 = vand.u32 %v4476, 4294901760
        %4530 = vmatpush1.msra.mxu0 %v4529
        %4531 = vmatprep.subr.mxu0 0.0
        %v4532 = vand.u32 %v4477, 4294901760
        %4533 = vmatpush1.msra.mxu0 %v4532
        %4534 = vmatprep.subr.mxu0 0.0
        %v4535 = vand.u32 %v4478, 4294901760
        %4536 = vmatpush1.msra.mxu0 %v4535
        %4537 = vmatprep.subr.mxu0 0.0
        %v4538 = vand.u32 %v4479, 4294901760
        %4539 = vmatpush1.msra.mxu0 %v4538
        %4540 = vmatprep.subr.mxu0 0.0
        %v4541 = vand.u32 %v4480, 4294901760
        %4542 = vmatpush1.msra.mxu0 %v4541
        %4543 = vmatprep.subr.mxu0 0.0
        %4544 = vmatpush1.msra.mxu0 0.0
        %4545 = vmatprep.subr.mxu0 0.0
        %4546 = vmatpush1.msra.mxu0 0.0
        %4547 = vmatprep.subr.mxu0 0.0
        %4548 = vmatpush1.msra.mxu0 0.0
        %4549 = vmatprep.subr.mxu0 0.0
        %4550 = vmatpush1.msra.mxu0 0.0
        %4551 = vmatprep.subr.mxu0 0.0
        %4552 = vmatpush1.msra.mxu0 0.0
        %4553 = vmatprep.subr.mxu0 0.0
        %4554 = vmatpush1.msra.mxu0 0.0
        %4555 = vmatprep.subr.mxu0 0.0
        %4556 = vmatpush1.msra.mxu0 0.0
        %4557 = vmatprep.subr.mxu0 0.0
        %4558 = vmatpush1.msra.mxu0 0.0
        %4559 = vmatprep.subr.mxu0 0.0
        %4560 = vmatpush1.msra.mxu0 0.0
        %4561 = vmatprep.subr.mxu0 0.0
        %4562 = vmatpush1.msra.mxu0 0.0
        %4563 = vmatprep.subr.mxu0 0.0
        %4564 = vmatpush1.msra.mxu0 0.0
        %4565 = vmatprep.subr.mxu0 0.0
        %4566 = vmatpush1.msra.mxu0 0.0
        %4567 = vmatprep.subr.mxu0 0.0
        %4568 = vmatpush1.msra.mxu0 0.0
        %4569 = vmatprep.subr.mxu0 0.0
        %4570 = vmatpush1.msra.mxu0 0.0
        %v4571 = vand.u32 %v4481, 4294901760
        %v4572 = vsub.f32 %v4481, %v4571
        %v4573 = vand.u32 %v4572, 4294901760
        %v4574 = vsub.f32 %v4572, %v4573
        %v4575 = vand.u32 %v4574, 4294901760
        %4576 = vmatprep.mubr.f32.mxu0 %v4575
        %v4577 = vand.u32 %v4440, 4294901760
        %v4578 = vsub.f32 %v4440, %v4577
        %v4579 = vand.u32 %v4578, 4294901760
        %v4580 = vsub.f32 %v4578, %v4579
        %v4581 = vand.u32 %v4580, 4294901760
        %4582 = vmatmul.mubr.f32.gmra.mrb[0].mxu0 %v4581
        %v4583 = vpop.f32.mrb[0].mxu0
        %v4584 = vadd.f32 0.0, %v4583
        %v4585 = vpop.f32.mrb[0].mxu0
        %v4586 = vand.u32 %v4483, 4294901760
        %v4587 = vsub.f32 %v4483, %v4586
        %v4588 = vand.u32 %v4587, 4294901760
        %v4589 = vsub.f32 %v4587, %v4588
        %v4590 = vand.u32 %v4589, 4294901760
        %4591 = vmatprep.mubr.f32.mxu0 %v4590
        %v4592 = vand.u32 %v4445, 4294901760
        %v4593 = vsub.f32 %v4445, %v4592
        %v4594 = vand.u32 %v4593, 4294901760
        %v4595 = vsub.f32 %v4593, %v4594
        %v4596 = vand.u32 %v4595, 4294901760
        %4597 = vmatmul.mubr.f32.gmra.mrb[0].mxu0 %v4596
        %v4598 = vpop.f32.mrb[0].mxu0
        %v4599 = vadd.f32 0.0, %v4598
        %v4600 = vpop.f32.mrb[0].mxu0
        %v4601 = vand.u32 %v4485, 4294901760
        %v4602 = vsub.f32 %v4485, %v4601
        %v4603 = vand.u32 %v4602, 4294901760
        %v4604 = vsub.f32 %v4602, %v4603
        %v4605 = vand.u32 %v4604, 4294901760
        %4606 = vmatprep.mubr.f32.mxu0 %v4605
        %v4607 = vand.u32 %v4450, 4294901760
        %v4608 = vsub.f32 %v4450, %v4607
        %v4609 = vand.u32 %v4608, 4294901760
        %v4610 = vsub.f32 %v4608, %v4609
        %v4611 = vand.u32 %v4610, 4294901760
        %4612 = vmatmul.mubr.f32.gmra.mrb[0].mxu0 %v4611
        %v4613 = vpop.f32.mrb[0].mxu0
        %v4614 = vadd.f32 0.0, %v4613
        %v4615 = vpop.f32.mrb[0].mxu0
        %v4616 = vand.u32 %v4487, 4294901760
        %v4617 = vsub.f32 %v4487, %v4616
        %v4618 = vand.u32 %v4617, 4294901760
        %v4619 = vsub.f32 %v4617, %v4618
        %v4620 = vand.u32 %v4619, 4294901760
        %4621 = vmatprep.mubr.f32.mxu0 %v4620
        %v4622 = vand.u32 %v4455, 4294901760
        %v4623 = vsub.f32 %v4455, %v4622
        %v4624 = vand.u32 %v4623, 4294901760
        %v4625 = vsub.f32 %v4623, %v4624
        %v4626 = vand.u32 %v4625, 4294901760
        %4627 = vmatmul.mubr.f32.gmra.mrb[0].mxu0 %v4626
        %v4628 = vpop.f32.mrb[0].mxu0
        %v4629 = vadd.f32 0.0, %v4628
        %v4630 = vpop.f32.mrb[0].mxu0
        %4631 = vdwg.mxu0
        %4632 = vmatprep.subr.mxu0 0.0
        %v4633 = vand.u32 %v4463, 4294901760
        %v4634 = vsub.f32 %v4463, %v4633
        %v4635 = vand.u32 %v4634, 4294901760
        %v4636 = vsub.f32 %v4634, %v4635
        %v4637 = vand.u32 %v4636, 4294901760
        %4638 = vmatpush1.msra.mxu0 %v4637
        %4639 = vmatprep.subr.mxu0 0.0
        %v4640 = vand.u32 %v4464, 4294901760
        %v4641 = vsub.f32 %v4464, %v4640
        %v4642 = vand.u32 %v4641, 4294901760
        %v4643 = vsub.f32 %v4641, %v4642
        %v4644 = vand.u32 %v4643, 4294901760
        %4645 = vmatpush1.msra.mxu0 %v4644
        %4646 = vmatprep.subr.mxu0 0.0
        %v4647 = vand.u32 %v4465, 4294901760
        %v4648 = vsub.f32 %v4465, %v4647
        %v4649 = vand.u32 %v4648, 4294901760
        %v4650 = vsub.f32 %v4648, %v4649
        %v4651 = vand.u32 %v4650, 4294901760
        %4652 = vmatpush1.msra.mxu0 %v4651
        %4653 = vmatprep.subr.mxu0 0.0
        %v4654 = vand.u32 %v4466, 4294901760
        %v4655 = vsub.f32 %v4466, %v4654
        %v4656 = vand.u32 %v4655, 4294901760
        %v4657 = vsub.f32 %v4655, %v4656
        %v4658 = vand.u32 %v4657, 4294901760
        %4659 = vmatpush1.msra.mxu0 %v4658
        %4660 = vmatprep.subr.mxu0 0.0
        %v4661 = vand.u32 %v4467, 4294901760
        %v4662 = vsub.f32 %v4467, %v4661
        %v4663 = vand.u32 %v4662, 4294901760
        %v4664 = vsub.f32 %v4662, %v4663
        %v4665 = vand.u32 %v4664, 4294901760
        %4666 = vmatpush1.msra.mxu0 %v4665
        %4667 = vmatprep.subr.mxu0 0.0
        %v4668 = vand.u32 %v4468, 4294901760
        %v4669 = vsub.f32 %v4468, %v4668
        %v4670 = vand.u32 %v4669, 4294901760
        %v4671 = vsub.f32 %v4669, %v4670
        %v4672 = vand.u32 %v4671, 4294901760
        %4673 = vmatpush1.msra.mxu0 %v4672
        %4674 = vmatprep.subr.mxu0 0.0
        %v4675 = vand.u32 %v4469, 4294901760
        %v4676 = vsub.f32 %v4469, %v4675
        %v4677 = vand.u32 %v4676, 4294901760
        %v4678 = vsub.f32 %v4676, %v4677
        %v4679 = vand.u32 %v4678, 4294901760
        %4680 = vmatpush1.msra.mxu0 %v4679
        %4681 = vmatprep.subr.mxu0 0.0
        %v4682 = vand.u32 %v4470, 4294901760
        %v4683 = vsub.f32 %v4470, %v4682
        %v4684 = vand.u32 %v4683, 4294901760
        %v4685 = vsub.f32 %v4683, %v4684
        %v4686 = vand.u32 %v4685, 4294901760
        %4687 = vmatpush1.msra.mxu0 %v4686
        %4688 = vmatprep.subr.mxu0 0.0
        %v4689 = vand.u32 %v4471, 4294901760
        %v4690 = vsub.f32 %v4471, %v4689
        %v4691 = vand.u32 %v4690, 4294901760
        %v4692 = vsub.f32 %v4690, %v4691
        %v4693 = vand.u32 %v4692, 4294901760
        %4694 = vmatpush1.msra.mxu0 %v4693
        %4695 = vmatprep.subr.mxu0 0.0
        %v4696 = vand.u32 %v4472, 4294901760
        %v4697 = vsub.f32 %v4472, %v4696
        %v4698 = vand.u32 %v4697, 4294901760
        %v4699 = vsub.f32 %v4697, %v4698
        %v4700 = vand.u32 %v4699, 4294901760
        %4701 = vmatpush1.msra.mxu0 %v4700
        %4702 = vmatprep.subr.mxu0 0.0
        %v4703 = vand.u32 %v4473, 4294901760
        %v4704 = vsub.f32 %v4473, %v4703
        %v4705 = vand.u32 %v4704, 4294901760
        %v4706 = vsub.f32 %v4704, %v4705
        %v4707 = vand.u32 %v4706, 4294901760
        %4708 = vmatpush1.msra.mxu0 %v4707
        %4709 = vmatprep.subr.mxu0 0.0
        %v4710 = vand.u32 %v4474, 4294901760
        %v4711 = vsub.f32 %v4474, %v4710
        %v4712 = vand.u32 %v4711, 4294901760
        %v4713 = vsub.f32 %v4711, %v4712
        %v4714 = vand.u32 %v4713, 4294901760
        %4715 = vmatpush1.msra.mxu0 %v4714
        %4716 = vmatprep.subr.mxu0 0.0
        %v4717 = vand.u32 %v4475, 4294901760
        %v4718 = vsub.f32 %v4475, %v4717
        %v4719 = vand.u32 %v4718, 4294901760
        %v4720 = vsub.f32 %v4718, %v4719
        %v4721 = vand.u32 %v4720, 4294901760
        %4722 = vmatpush1.msra.mxu0 %v4721
        %4723 = vmatprep.subr.mxu0 0.0
        %v4724 = vand.u32 %v4476, 4294901760
        %v4725 = vsub.f32 %v4476, %v4724
        %v4726 = vand.u32 %v4725, 4294901760
        %v4727 = vsub.f32 %v4725, %v4726
        %v4728 = vand.u32 %v4727, 4294901760
        %4729 = vmatpush1.msra.mxu0 %v4728
        %4730 = vmatprep.subr.mxu0 0.0
        %v4731 = vand.u32 %v4477, 4294901760
        %v4732 = vsub.f32 %v4477, %v4731
        %v4733 = vand.u32 %v4732, 4294901760
        %v4734 = vsub.f32 %v4732, %v4733
        %v4735 = vand.u32 %v4734, 4294901760
        %4736 = vmatpush1.msra.mxu0 %v4735
        %4737 = vmatprep.subr.mxu0 0.0
        %v4738 = vand.u32 %v4478, 4294901760
        %v4739 = vsub.f32 %v4478, %v4738
        %v4740 = vand.u32 %v4739, 4294901760
        %v4741 = vsub.f32 %v4739, %v4740
        %v4742 = vand.u32 %v4741, 4294901760
        %4743 = vmatpush1.msra.mxu0 %v4742
        %4744 = vmatprep.subr.mxu0 0.0
        %v4745 = vand.u32 %v4479, 4294901760
        %v4746 = vsub.f32 %v4479, %v4745
        %v4747 = vand.u32 %v4746, 4294901760
        %v4748 = vsub.f32 %v4746, %v4747
        %v4749 = vand.u32 %v4748, 4294901760
        %4750 = vmatpush1.msra.mxu0 %v4749
        %4751 = vmatprep.subr.mxu0 0.0
        %v4752 = vand.u32 %v4480, 4294901760
        %v4753 = vsub.f32 %v4480, %v4752
        %v4754 = vand.u32 %v4753, 4294901760
        %v4755 = vsub.f32 %v4753, %v4754
        %v4756 = vand.u32 %v4755, 4294901760
        %4757 = vmatpush1.msra.mxu0 %v4756
        %4758 = vmatprep.subr.mxu0 0.0
        %4759 = vmatpush1.msra.mxu0 0.0
        %4760 = vmatprep.subr.mxu0 0.0
        %4761 = vmatpush1.msra.mxu0 0.0
        %4762 = vmatprep.subr.mxu0 0.0
        %4763 = vmatpush1.msra.mxu0 0.0
        %4764 = vmatprep.subr.mxu0 0.0
        %4765 = vmatpush1.msra.mxu0 0.0
        %4766 = vmatprep.subr.mxu0 0.0
        %4767 = vmatpush1.msra.mxu0 0.0
        %4768 = vmatprep.subr.mxu0 0.0
        %4769 = vmatpush1.msra.mxu0 0.0
        %4770 = vmatprep.subr.mxu0 0.0
        %4771 = vmatpush1.msra.mxu0 0.0
        %4772 = vmatprep.subr.mxu0 0.0
        %4773 = vmatpush1.msra.mxu0 0.0
        %4774 = vmatprep.subr.mxu0 0.0
        %4775 = vmatpush1.msra.mxu0 0.0
        %4776 = vmatprep.subr.mxu0 0.0
        %4777 = vmatpush1.msra.mxu0 0.0
        %4778 = vmatprep.subr.mxu0 0.0
        %4779 = vmatpush1.msra.mxu0 0.0
        %4780 = vmatprep.subr.mxu0 0.0
        %4781 = vmatpush1.msra.mxu0 0.0
        %4782 = vmatprep.subr.mxu0 0.0
        %4783 = vmatpush1.msra.mxu0 0.0
        %4784 = vmatprep.subr.mxu0 0.0
        %4785 = vmatpush1.msra.mxu0 0.0
        %v4786 = vand.u32 %v4481, 4294901760
        %4787 = vmatprep.mubr.f32.mxu0 %v4786
        %v4788 = vand.u32 %v4440, 4294901760
        %4789 = vmatmul.mubr.f32.gmra.mrb[0].mxu0 %v4788
        %v4790 = vpop.f32.mrb[0].mxu0
        %v4791 = vadd.f32 %v4584, %v4790
        %v4792 = vpop.f32.mrb[0].mxu0
        %v4793 = vand.u32 %v4483, 4294901760
        %4794 = vmatprep.mubr.f32.mxu0 %v4793
        %v4795 = vand.u32 %v4445, 4294901760
        %4796 = vmatmul.mubr.f32.gmra.mrb[0].mxu0 %v4795
        %v4797 = vpop.f32.mrb[0].mxu0
        %v4798 = vadd.f32 %v4599, %v4797
        %v4799 = vpop.f32.mrb[0].mxu0
        %v4800 = vand.u32 %v4485, 4294901760
        %4801 = vmatprep.mubr.f32.mxu0 %v4800
        %v4802 = vand.u32 %v4450, 4294901760
        %4803 = vmatmul.mubr.f32.gmra.mrb[0].mxu0 %v4802
        %v4804 = vpop.f32.mrb[0].mxu0
        %v4805 = vadd.f32 %v4614, %v4804
        %v4806 = vpop.f32.mrb[0].mxu0
        %v4807 = vand.u32 %v4487, 4294901760
        %4808 = vmatprep.mubr.f32.mxu0 %v4807
        %v4809 = vand.u32 %v4455, 4294901760
        %4810 = vmatmul.mubr.f32.gmra.mrb[0].mxu0 %v4809
        %v4811 = vpop.f32.mrb[0].mxu0
        %v4812 = vadd.f32 %v4629, %v4811
        %v4813 = vpop.f32.mrb[0].mxu0
        %4814 = vdwg.mxu0
        %4815 = vmatprep.subr.mxu0 0.0
        %v4816 = vand.u32 %v4463, 4294901760
        %v4817 = vsub.f32 %v4463, %v4816
        %4818 = vmatpush1.msra.mxu0 %v4817
        %4819 = vmatprep.subr.mxu0 0.0
        %v4820 = vand.u32 %v4464, 4294901760
        %v4821 = vsub.f32 %v4464, %v4820
        %4822 = vmatpush1.msra.mxu0 %v4821
        %4823 = vmatprep.subr.mxu0 0.0
        %v4824 = vand.u32 %v4465, 4294901760
        %v4825 = vsub.f32 %v4465, %v4824
        %4826 = vmatpush1.msra.mxu0 %v4825
        %4827 = vmatprep.subr.mxu0 0.0
        %v4828 = vand.u32 %v4466, 4294901760
        %v4829 = vsub.f32 %v4466, %v4828
        %4830 = vmatpush1.msra.mxu0 %v4829
        %4831 = vmatprep.subr.mxu0 0.0
        %v4832 = vand.u32 %v4467, 4294901760
        %v4833 = vsub.f32 %v4467, %v4832
        %4834 = vmatpush1.msra.mxu0 %v4833
        %4835 = vmatprep.subr.mxu0 0.0
        %v4836 = vand.u32 %v4468, 4294901760
        %v4837 = vsub.f32 %v4468, %v4836
        %4838 = vmatpush1.msra.mxu0 %v4837
        %4839 = vmatprep.subr.mxu0 0.0
        %v4840 = vand.u32 %v4469, 4294901760
        %v4841 = vsub.f32 %v4469, %v4840
        %4842 = vmatpush1.msra.mxu0 %v4841
        %4843 = vmatprep.subr.mxu0 0.0
        %v4844 = vand.u32 %v4470, 4294901760
        %v4845 = vsub.f32 %v4470, %v4844
        %4846 = vmatpush1.msra.mxu0 %v4845
        %4847 = vmatprep.subr.mxu0 0.0
        %v4848 = vand.u32 %v4471, 4294901760
        %v4849 = vsub.f32 %v4471, %v4848
        %4850 = vmatpush1.msra.mxu0 %v4849
        %4851 = vmatprep.subr.mxu0 0.0
        %v4852 = vand.u32 %v4472, 4294901760
        %v4853 = vsub.f32 %v4472, %v4852
        %4854 = vmatpush1.msra.mxu0 %v4853
        %4855 = vmatprep.subr.mxu0 0.0
        %v4856 = vand.u32 %v4473, 4294901760
        %v4857 = vsub.f32 %v4473, %v4856
        %4858 = vmatpush1.msra.mxu0 %v4857
        %4859 = vmatprep.subr.mxu0 0.0
        %v4860 = vand.u32 %v4474, 4294901760
        %v4861 = vsub.f32 %v4474, %v4860
        %4862 = vmatpush1.msra.mxu0 %v4861
        %4863 = vmatprep.subr.mxu0 0.0
        %v4864 = vand.u32 %v4475, 4294901760
        %v4865 = vsub.f32 %v4475, %v4864
        %4866 = vmatpush1.msra.mxu0 %v4865
        %4867 = vmatprep.subr.mxu0 0.0
        %v4868 = vand.u32 %v4476, 4294901760
        %v4869 = vsub.f32 %v4476, %v4868
        %4870 = vmatpush1.msra.mxu0 %v4869
        %4871 = vmatprep.subr.mxu0 0.0
        %v4872 = vand.u32 %v4477, 4294901760
        %v4873 = vsub.f32 %v4477, %v4872
        %4874 = vmatpush1.msra.mxu0 %v4873
        %4875 = vmatprep.subr.mxu0 0.0
        %v4876 = vand.u32 %v4478, 4294901760
        %v4877 = vsub.f32 %v4478, %v4876
        %4878 = vmatpush1.msra.mxu0 %v4877
        %4879 = vmatprep.subr.mxu0 0.0
        %v4880 = vand.u32 %v4479, 4294901760
        %v4881 = vsub.f32 %v4479, %v4880
        %4882 = vmatpush1.msra.mxu0 %v4881
        %4883 = vmatprep.subr.mxu0 0.0
        %v4884 = vand.u32 %v4480, 4294901760
        %v4885 = vsub.f32 %v4480, %v4884
        %4886 = vmatpush1.msra.mxu0 %v4885
        %4887 = vmatprep.subr.mxu0 0.0
        %4888 = vmatpush1.msra.mxu0 0.0
        %4889 = vmatprep.subr.mxu0 0.0
        %4890 = vmatpush1.msra.mxu0 0.0
        %4891 = vmatprep.subr.mxu0 0.0
        %4892 = vmatpush1.msra.mxu0 0.0
        %4893 = vmatprep.subr.mxu0 0.0
        %4894 = vmatpush1.msra.mxu0 0.0
        %4895 = vmatprep.subr.mxu0 0.0
        %4896 = vmatpush1.msra.mxu0 0.0
        %4897 = vmatprep.subr.mxu0 0.0
        %4898 = vmatpush1.msra.mxu0 0.0
        %4899 = vmatprep.subr.mxu0 0.0
        %4900 = vmatpush1.msra.mxu0 0.0
        %4901 = vmatprep.subr.mxu0 0.0
        %4902 = vmatpush1.msra.mxu0 0.0
        %4903 = vmatprep.subr.mxu0 0.0
        %4904 = vmatpush1.msra.mxu0 0.0
        %4905 = vmatprep.subr.mxu0 0.0
        %4906 = vmatpush1.msra.mxu0 0.0
        %4907 = vmatprep.subr.mxu0 0.0
        %4908 = vmatpush1.msra.mxu0 0.0
        %4909 = vmatprep.subr.mxu0 0.0
        %4910 = vmatpush1.msra.mxu0 0.0
        %4911 = vmatprep.subr.mxu0 0.0
        %4912 = vmatpush1.msra.mxu0 0.0
        %4913 = vmatprep.subr.mxu0 0.0
        %4914 = vmatpush1.msra.mxu0 0.0
        %v4915 = vand.u32 %v4481, 4294901760
        %v4916 = vsub.f32 %v4481, %v4915
        %4917 = vmatprep.mubr.f32.mxu0 %v4916
        %v4918 = vand.u32 %v4440, 4294901760
        %v4919 = vsub.f32 %v4440, %v4918
        %4920 = vmatmul.mubr.f32.gmra.mrb[0].mxu0 %v4919
        %v4921 = vpop.f32.mrb[0].mxu0
        %v4922 = vadd.f32 %v4791, %v4921
        %v4923 = vpop.f32.mrb[0].mxu0
        %v4924 = vand.u32 %v4483, 4294901760
        %v4925 = vsub.f32 %v4483, %v4924
        %4926 = vmatprep.mubr.f32.mxu0 %v4925
        %v4927 = vand.u32 %v4445, 4294901760
        %v4928 = vsub.f32 %v4445, %v4927
        %4929 = vmatmul.mubr.f32.gmra.mrb[0].mxu0 %v4928
        %v4930 = vpop.f32.mrb[0].mxu0
        %v4931 = vadd.f32 %v4798, %v4930
        %v4932 = vpop.f32.mrb[0].mxu0
        %v4933 = vand.u32 %v4485, 4294901760
        %v4934 = vsub.f32 %v4485, %v4933
        %4935 = vmatprep.mubr.f32.mxu0 %v4934
        %v4936 = vand.u32 %v4450, 4294901760
        %v4937 = vsub.f32 %v4450, %v4936
        %4938 = vmatmul.mubr.f32.gmra.mrb[0].mxu0 %v4937
        %v4939 = vpop.f32.mrb[0].mxu0
        %v4940 = vadd.f32 %v4805, %v4939
        %v4941 = vpop.f32.mrb[0].mxu0
        %v4942 = vand.u32 %v4487, 4294901760
        %v4943 = vsub.f32 %v4487, %v4942
        %4944 = vmatprep.mubr.f32.mxu0 %v4943
        %v4945 = vand.u32 %v4455, 4294901760
        %v4946 = vsub.f32 %v4455, %v4945
        %4947 = vmatmul.mubr.f32.gmra.mrb[0].mxu0 %v4946
        %v4948 = vpop.f32.mrb[0].mxu0
        %v4949 = vadd.f32 %v4812, %v4948
        %v4950 = vpop.f32.mrb[0].mxu0
        %4951 = vdwg.mxu0
        %4952 = vmatprep.subr.mxu0 0.0
        %v4953 = vand.u32 %v4463, 4294901760
        %4954 = vmatpush1.msra.mxu0 %v4953
        %4955 = vmatprep.subr.mxu0 0.0
        %v4956 = vand.u32 %v4464, 4294901760
        %4957 = vmatpush1.msra.mxu0 %v4956
        %4958 = vmatprep.subr.mxu0 0.0
        %v4959 = vand.u32 %v4465, 4294901760
        %4960 = vmatpush1.msra.mxu0 %v4959
        %4961 = vmatprep.subr.mxu0 0.0
        %v4962 = vand.u32 %v4466, 4294901760
        %4963 = vmatpush1.msra.mxu0 %v4962
        %4964 = vmatprep.subr.mxu0 0.0
        %v4965 = vand.u32 %v4467, 4294901760
        %4966 = vmatpush1.msra.mxu0 %v4965
        %4967 = vmatprep.subr.mxu0 0.0
        %v4968 = vand.u32 %v4468, 4294901760
        %4969 = vmatpush1.msra.mxu0 %v4968
        %4970 = vmatprep.subr.mxu0 0.0
        %v4971 = vand.u32 %v4469, 4294901760
        %4972 = vmatpush1.msra.mxu0 %v4971
        %4973 = vmatprep.subr.mxu0 0.0
        %v4974 = vand.u32 %v4470, 4294901760
        %4975 = vmatpush1.msra.mxu0 %v4974
        %4976 = vmatprep.subr.mxu0 0.0
        %v4977 = vand.u32 %v4471, 4294901760
        %4978 = vmatpush1.msra.mxu0 %v4977
        %4979 = vmatprep.subr.mxu0 0.0
        %v4980 = vand.u32 %v4472, 4294901760
        %4981 = vmatpush1.msra.mxu0 %v4980
        %4982 = vmatprep.subr.mxu0 0.0
        %v4983 = vand.u32 %v4473, 4294901760
        %4984 = vmatpush1.msra.mxu0 %v4983
        %4985 = vmatprep.subr.mxu0 0.0
        %v4986 = vand.u32 %v4474, 4294901760
        %4987 = vmatpush1.msra.mxu0 %v4986
        %4988 = vmatprep.subr.mxu0 0.0
        %v4989 = vand.u32 %v4475, 4294901760
        %4990 = vmatpush1.msra.mxu0 %v4989
        %4991 = vmatprep.subr.mxu0 0.0
        %v4992 = vand.u32 %v4476, 4294901760
        %4993 = vmatpush1.msra.mxu0 %v4992
        %4994 = vmatprep.subr.mxu0 0.0
        %v4995 = vand.u32 %v4477, 4294901760
        %4996 = vmatpush1.msra.mxu0 %v4995
        %4997 = vmatprep.subr.mxu0 0.0
        %v4998 = vand.u32 %v4478, 4294901760
        %4999 = vmatpush1.msra.mxu0 %v4998
        %5000 = vmatprep.subr.mxu0 0.0
        %v5001 = vand.u32 %v4479, 4294901760
        %5002 = vmatpush1.msra.mxu0 %v5001
        %5003 = vmatprep.subr.mxu0 0.0
        %v5004 = vand.u32 %v4480, 4294901760
        %5005 = vmatpush1.msra.mxu0 %v5004
        %5006 = vmatprep.subr.mxu0 0.0
        %5007 = vmatpush1.msra.mxu0 0.0
        %5008 = vmatprep.subr.mxu0 0.0
        %5009 = vmatpush1.msra.mxu0 0.0
        %5010 = vmatprep.subr.mxu0 0.0
        %5011 = vmatpush1.msra.mxu0 0.0
        %5012 = vmatprep.subr.mxu0 0.0
        %5013 = vmatpush1.msra.mxu0 0.0
        %5014 = vmatprep.subr.mxu0 0.0
        %5015 = vmatpush1.msra.mxu0 0.0
        %5016 = vmatprep.subr.mxu0 0.0
        %5017 = vmatpush1.msra.mxu0 0.0
        %5018 = vmatprep.subr.mxu0 0.0
        %5019 = vmatpush1.msra.mxu0 0.0
        %5020 = vmatprep.subr.mxu0 0.0
        %5021 = vmatpush1.msra.mxu0 0.0
        %5022 = vmatprep.subr.mxu0 0.0
        %5023 = vmatpush1.msra.mxu0 0.0
        %5024 = vmatprep.subr.mxu0 0.0
        %5025 = vmatpush1.msra.mxu0 0.0
        %5026 = vmatprep.subr.mxu0 0.0
        %5027 = vmatpush1.msra.mxu0 0.0
        %5028 = vmatprep.subr.mxu0 0.0
        %5029 = vmatpush1.msra.mxu0 0.0
        %5030 = vmatprep.subr.mxu0 0.0
        %5031 = vmatpush1.msra.mxu0 0.0
        %5032 = vmatprep.subr.mxu0 0.0
        %5033 = vmatpush1.msra.mxu0 0.0
        %v5034 = vand.u32 %v4481, 4294901760
        %v5035 = vsub.f32 %v4481, %v5034
        %v5036 = vand.u32 %v5035, 4294901760
        %5037 = vmatprep.mubr.f32.mxu0 %v5036
        %v5038 = vand.u32 %v4440, 4294901760
        %v5039 = vsub.f32 %v4440, %v5038
        %v5040 = vand.u32 %v5039, 4294901760
        %5041 = vmatmul.mubr.f32.gmra.mrb[0].mxu0 %v5040
        %v5042 = vpop.f32.mrb[0].mxu0
        %v5043 = vadd.f32 %v4922, %v5042
        %v5044 = vpop.f32.mrb[0].mxu0
        %v5045 = vand.u32 %v4483, 4294901760
        %v5046 = vsub.f32 %v4483, %v5045
        %v5047 = vand.u32 %v5046, 4294901760
        %5048 = vmatprep.mubr.f32.mxu0 %v5047
        %v5049 = vand.u32 %v4445, 4294901760
        %v5050 = vsub.f32 %v4445, %v5049
        %v5051 = vand.u32 %v5050, 4294901760
        %5052 = vmatmul.mubr.f32.gmra.mrb[0].mxu0 %v5051
        %v5053 = vpop.f32.mrb[0].mxu0
        %v5054 = vadd.f32 %v4931, %v5053
        %v5055 = vpop.f32.mrb[0].mxu0
        %v5056 = vand.u32 %v4485, 4294901760
        %v5057 = vsub.f32 %v4485, %v5056
        %v5058 = vand.u32 %v5057, 4294901760
        %5059 = vmatprep.mubr.f32.mxu0 %v5058
        %v5060 = vand.u32 %v4450, 4294901760
        %v5061 = vsub.f32 %v4450, %v5060
        %v5062 = vand.u32 %v5061, 4294901760
        %5063 = vmatmul.mubr.f32.gmra.mrb[0].mxu0 %v5062
        %v5064 = vpop.f32.mrb[0].mxu0
        %v5065 = vadd.f32 %v4940, %v5064
        %v5066 = vpop.f32.mrb[0].mxu0
        %v5067 = vand.u32 %v4487, 4294901760
        %v5068 = vsub.f32 %v4487, %v5067
        %v5069 = vand.u32 %v5068, 4294901760
        %5070 = vmatprep.mubr.f32.mxu0 %v5069
        %v5071 = vand.u32 %v4455, 4294901760
        %v5072 = vsub.f32 %v4455, %v5071
        %v5073 = vand.u32 %v5072, 4294901760
        %5074 = vmatmul.mubr.f32.gmra.mrb[0].mxu0 %v5073
        %v5075 = vpop.f32.mrb[0].mxu0
        %v5076 = vadd.f32 %v4949, %v5075
        %v5077 = vpop.f32.mrb[0].mxu0
        %5078 = vdwg.mxu0
        %5079 = vmatprep.subr.mxu0 0.0
        %v5080 = vand.u32 %v4463, 4294901760
        %v5081 = vsub.f32 %v4463, %v5080
        %v5082 = vand.u32 %v5081, 4294901760
        %5083 = vmatpush1.msra.mxu0 %v5082
        %5084 = vmatprep.subr.mxu0 0.0
        %v5085 = vand.u32 %v4464, 4294901760
        %v5086 = vsub.f32 %v4464, %v5085
        %v5087 = vand.u32 %v5086, 4294901760
        %5088 = vmatpush1.msra.mxu0 %v5087
        %5089 = vmatprep.subr.mxu0 0.0
        %v5090 = vand.u32 %v4465, 4294901760
        %v5091 = vsub.f32 %v4465, %v5090
        %v5092 = vand.u32 %v5091, 4294901760
        %5093 = vmatpush1.msra.mxu0 %v5092
        %5094 = vmatprep.subr.mxu0 0.0
        %v5095 = vand.u32 %v4466, 4294901760
        %v5096 = vsub.f32 %v4466, %v5095
        %v5097 = vand.u32 %v5096, 4294901760
        %5098 = vmatpush1.msra.mxu0 %v5097
        %5099 = vmatprep.subr.mxu0 0.0
        %v5100 = vand.u32 %v4467, 4294901760
        %v5101 = vsub.f32 %v4467, %v5100
        %v5102 = vand.u32 %v5101, 4294901760
        %5103 = vmatpush1.msra.mxu0 %v5102
        %5104 = vmatprep.subr.mxu0 0.0
        %v5105 = vand.u32 %v4468, 4294901760
        %v5106 = vsub.f32 %v4468, %v5105
        %v5107 = vand.u32 %v5106, 4294901760
        %5108 = vmatpush1.msra.mxu0 %v5107
        %5109 = vmatprep.subr.mxu0 0.0
        %v5110 = vand.u32 %v4469, 4294901760
        %v5111 = vsub.f32 %v4469, %v5110
        %v5112 = vand.u32 %v5111, 4294901760
        %5113 = vmatpush1.msra.mxu0 %v5112
        %5114 = vmatprep.subr.mxu0 0.0
        %v5115 = vand.u32 %v4470, 4294901760
        %v5116 = vsub.f32 %v4470, %v5115
        %v5117 = vand.u32 %v5116, 4294901760
        %5118 = vmatpush1.msra.mxu0 %v5117
        %5119 = vmatprep.subr.mxu0 0.0
        %v5120 = vand.u32 %v4471, 4294901760
        %v5121 = vsub.f32 %v4471, %v5120
        %v5122 = vand.u32 %v5121, 4294901760
        %5123 = vmatpush1.msra.mxu0 %v5122
        %5124 = vmatprep.subr.mxu0 0.0
        %v5125 = vand.u32 %v4472, 4294901760
        %v5126 = vsub.f32 %v4472, %v5125
        %v5127 = vand.u32 %v5126, 4294901760
        %5128 = vmatpush1.msra.mxu0 %v5127
        %5129 = vmatprep.subr.mxu0 0.0
        %v5130 = vand.u32 %v4473, 4294901760
        %v5131 = vsub.f32 %v4473, %v5130
        %v5132 = vand.u32 %v5131, 4294901760
        %5133 = vmatpush1.msra.mxu0 %v5132
        %5134 = vmatprep.subr.mxu0 0.0
        %v5135 = vand.u32 %v4474, 4294901760
        %v5136 = vsub.f32 %v4474, %v5135
        %v5137 = vand.u32 %v5136, 4294901760
        %5138 = vmatpush1.msra.mxu0 %v5137
        %5139 = vmatprep.subr.mxu0 0.0
        %v5140 = vand.u32 %v4475, 4294901760
        %v5141 = vsub.f32 %v4475, %v5140
        %v5142 = vand.u32 %v5141, 4294901760
        %5143 = vmatpush1.msra.mxu0 %v5142
        %5144 = vmatprep.subr.mxu0 0.0
        %v5145 = vand.u32 %v4476, 4294901760
        %v5146 = vsub.f32 %v4476, %v5145
        %v5147 = vand.u32 %v5146, 4294901760
        %5148 = vmatpush1.msra.mxu0 %v5147
        %5149 = vmatprep.subr.mxu0 0.0
        %v5150 = vand.u32 %v4477, 4294901760
        %v5151 = vsub.f32 %v4477, %v5150
        %v5152 = vand.u32 %v5151, 4294901760
        %5153 = vmatpush1.msra.mxu0 %v5152
        %5154 = vmatprep.subr.mxu0 0.0
        %v5155 = vand.u32 %v4478, 4294901760
        %v5156 = vsub.f32 %v4478, %v5155
        %v5157 = vand.u32 %v5156, 4294901760
        %5158 = vmatpush1.msra.mxu0 %v5157
        %5159 = vmatprep.subr.mxu0 0.0
        %v5160 = vand.u32 %v4479, 4294901760
        %v5161 = vsub.f32 %v4479, %v5160
        %v5162 = vand.u32 %v5161, 4294901760
        %5163 = vmatpush1.msra.mxu0 %v5162
        %5164 = vmatprep.subr.mxu0 0.0
        %v5165 = vand.u32 %v4480, 4294901760
        %v5166 = vsub.f32 %v4480, %v5165
        %v5167 = vand.u32 %v5166, 4294901760
        %5168 = vmatpush1.msra.mxu0 %v5167
        %5169 = vmatprep.subr.mxu0 0.0
        %5170 = vmatpush1.msra.mxu0 0.0
        %5171 = vmatprep.subr.mxu0 0.0
        %5172 = vmatpush1.msra.mxu0 0.0
        %5173 = vmatprep.subr.mxu0 0.0
        %5174 = vmatpush1.msra.mxu0 0.0
        %5175 = vmatprep.subr.mxu0 0.0
        %5176 = vmatpush1.msra.mxu0 0.0
        %5177 = vmatprep.subr.mxu0 0.0
        %5178 = vmatpush1.msra.mxu0 0.0
        %5179 = vmatprep.subr.mxu0 0.0
        %5180 = vmatpush1.msra.mxu0 0.0
        %5181 = vmatprep.subr.mxu0 0.0
        %5182 = vmatpush1.msra.mxu0 0.0
        %5183 = vmatprep.subr.mxu0 0.0
        %5184 = vmatpush1.msra.mxu0 0.0
        %5185 = vmatprep.subr.mxu0 0.0
        %5186 = vmatpush1.msra.mxu0 0.0
        %5187 = vmatprep.subr.mxu0 0.0
        %5188 = vmatpush1.msra.mxu0 0.0
        %5189 = vmatprep.subr.mxu0 0.0
        %5190 = vmatpush1.msra.mxu0 0.0
        %5191 = vmatprep.subr.mxu0 0.0
        %5192 = vmatpush1.msra.mxu0 0.0
        %5193 = vmatprep.subr.mxu0 0.0
        %5194 = vmatpush1.msra.mxu0 0.0
        %5195 = vmatprep.subr.mxu0 0.0
        %5196 = vmatpush1.msra.mxu0 0.0
        %v5197 = vand.u32 %v4481, 4294901760
        %5198 = vmatprep.mubr.f32.mxu0 %v5197
        %v5199 = vand.u32 %v4440, 4294901760
        %5200 = vmatmul.mubr.f32.gmra.mrb[0].mxu0 %v5199
        %v5201 = vpop.f32.mrb[0].mxu0
        %v5202 = vadd.f32 %v5043, %v5201
        %v5203 = vpop.f32.mrb[0].mxu0
        %v5204 = vand.u32 %v4483, 4294901760
        %5205 = vmatprep.mubr.f32.mxu0 %v5204
        %v5206 = vand.u32 %v4445, 4294901760
        %5207 = vmatmul.mubr.f32.gmra.mrb[0].mxu0 %v5206
        %v5208 = vpop.f32.mrb[0].mxu0
        %v5209 = vadd.f32 %v5054, %v5208
        %v5210 = vpop.f32.mrb[0].mxu0
        %v5211 = vand.u32 %v4485, 4294901760
        %5212 = vmatprep.mubr.f32.mxu0 %v5211
        %v5213 = vand.u32 %v4450, 4294901760
        %5214 = vmatmul.mubr.f32.gmra.mrb[0].mxu0 %v5213
        %v5215 = vpop.f32.mrb[0].mxu0
        %v5216 = vadd.f32 %v5065, %v5215
        %v5217 = vpop.f32.mrb[0].mxu0
        %v5218 = vand.u32 %v4487, 4294901760
        %5219 = vmatprep.mubr.f32.mxu0 %v5218
        %v5220 = vand.u32 %v4455, 4294901760
        %5221 = vmatmul.mubr.f32.gmra.mrb[0].mxu0 %v5220
        %v5222 = vpop.f32.mrb[0].mxu0
        %v5223 = vadd.f32 %v5076, %v5222
        %v5224 = vpop.f32.mrb[0].mxu0
        %5225 = vdwg.mxu0
        %5226 = vmatprep.subr.mxu0 0.0
        %v5227 = vand.u32 %v4463, 4294901760
        %5228 = vmatpush1.msra.mxu0 %v5227
        %5229 = vmatprep.subr.mxu0 0.0
        %v5230 = vand.u32 %v4464, 4294901760
        %5231 = vmatpush1.msra.mxu0 %v5230
        %5232 = vmatprep.subr.mxu0 0.0
        %v5233 = vand.u32 %v4465, 4294901760
        %5234 = vmatpush1.msra.mxu0 %v5233
        %5235 = vmatprep.subr.mxu0 0.0
        %v5236 = vand.u32 %v4466, 4294901760
        %5237 = vmatpush1.msra.mxu0 %v5236
        %5238 = vmatprep.subr.mxu0 0.0
        %v5239 = vand.u32 %v4467, 4294901760
        %5240 = vmatpush1.msra.mxu0 %v5239
        %5241 = vmatprep.subr.mxu0 0.0
        %v5242 = vand.u32 %v4468, 4294901760
        %5243 = vmatpush1.msra.mxu0 %v5242
        %5244 = vmatprep.subr.mxu0 0.0
        %v5245 = vand.u32 %v4469, 4294901760
        %5246 = vmatpush1.msra.mxu0 %v5245
        %5247 = vmatprep.subr.mxu0 0.0
        %v5248 = vand.u32 %v4470, 4294901760
        %5249 = vmatpush1.msra.mxu0 %v5248
        %5250 = vmatprep.subr.mxu0 0.0
        %v5251 = vand.u32 %v4471, 4294901760
        %5252 = vmatpush1.msra.mxu0 %v5251
        %5253 = vmatprep.subr.mxu0 0.0
        %v5254 = vand.u32 %v4472, 4294901760
        %5255 = vmatpush1.msra.mxu0 %v5254
        %5256 = vmatprep.subr.mxu0 0.0
        %v5257 = vand.u32 %v4473, 4294901760
        %5258 = vmatpush1.msra.mxu0 %v5257
        %5259 = vmatprep.subr.mxu0 0.0
        %v5260 = vand.u32 %v4474, 4294901760
        %5261 = vmatpush1.msra.mxu0 %v5260
        %5262 = vmatprep.subr.mxu0 0.0
        %v5263 = vand.u32 %v4475, 4294901760
        %5264 = vmatpush1.msra.mxu0 %v5263
        %5265 = vmatprep.subr.mxu0 0.0
        %v5266 = vand.u32 %v4476, 4294901760
        %5267 = vmatpush1.msra.mxu0 %v5266
        %5268 = vmatprep.subr.mxu0 0.0
        %v5269 = vand.u32 %v4477, 4294901760
        %5270 = vmatpush1.msra.mxu0 %v5269
        %5271 = vmatprep.subr.mxu0 0.0
        %v5272 = vand.u32 %v4478, 4294901760
        %5273 = vmatpush1.msra.mxu0 %v5272
        %5274 = vmatprep.subr.mxu0 0.0
        %v5275 = vand.u32 %v4479, 4294901760
        %5276 = vmatpush1.msra.mxu0 %v5275
        %5277 = vmatprep.subr.mxu0 0.0
        %v5278 = vand.u32 %v4480, 4294901760
        %5279 = vmatpush1.msra.mxu0 %v5278
        %5280 = vmatprep.subr.mxu0 0.0
        %5281 = vmatpush1.msra.mxu0 0.0
        %5282 = vmatprep.subr.mxu0 0.0
        %5283 = vmatpush1.msra.mxu0 0.0
        %5284 = vmatprep.subr.mxu0 0.0
        %5285 = vmatpush1.msra.mxu0 0.0
        %5286 = vmatprep.subr.mxu0 0.0
        %5287 = vmatpush1.msra.mxu0 0.0
        %5288 = vmatprep.subr.mxu0 0.0
        %5289 = vmatpush1.msra.mxu0 0.0
        %5290 = vmatprep.subr.mxu0 0.0
        %5291 = vmatpush1.msra.mxu0 0.0
        %5292 = vmatprep.subr.mxu0 0.0
        %5293 = vmatpush1.msra.mxu0 0.0
        %5294 = vmatprep.subr.mxu0 0.0
        %5295 = vmatpush1.msra.mxu0 0.0
        %5296 = vmatprep.subr.mxu0 0.0
        %5297 = vmatpush1.msra.mxu0 0.0
        %5298 = vmatprep.subr.mxu0 0.0
        %5299 = vmatpush1.msra.mxu0 0.0
        %5300 = vmatprep.subr.mxu0 0.0
        %5301 = vmatpush1.msra.mxu0 0.0
        %5302 = vmatprep.subr.mxu0 0.0
        %5303 = vmatpush1.msra.mxu0 0.0
        %5304 = vmatprep.subr.mxu0 0.0
        %5305 = vmatpush1.msra.mxu0 0.0
        %5306 = vmatprep.subr.mxu0 0.0
        %5307 = vmatpush1.msra.mxu0 0.0
        %v5308 = vand.u32 %v4481, 4294901760
        %5309 = vmatprep.mubr.f32.mxu0 %v5308
        %v5310 = vand.u32 %v4440, 4294901760
        %5311 = vmatmul.mubr.f32.gmra.mrb[0].mxu0 %v5310
        %v5312 = vpop.f32.mrb[0].mxu0
        %v5313 = vadd.f32 %v5202, %v5312
        %v5314 = vpop.f32.mrb[0].mxu0
        %v5315 = vand.u32 %v4483, 4294901760
        %5316 = vmatprep.mubr.f32.mxu0 %v5315
        %v5317 = vand.u32 %v4445, 4294901760
        %5318 = vmatmul.mubr.f32.gmra.mrb[0].mxu0 %v5317
        %v5319 = vpop.f32.mrb[0].mxu0
        %v5320 = vadd.f32 %v5209, %v5319
        %v5321 = vpop.f32.mrb[0].mxu0
        %v5322 = vand.u32 %v4485, 4294901760
        %5323 = vmatprep.mubr.f32.mxu0 %v5322
        %v5324 = vand.u32 %v4450, 4294901760
        %5325 = vmatmul.mubr.f32.gmra.mrb[0].mxu0 %v5324
        %v5326 = vpop.f32.mrb[0].mxu0
        %v5327 = vadd.f32 %v5216, %v5326
        %v5328 = vpop.f32.mrb[0].mxu0
        %v5329 = vand.u32 %v4487, 4294901760
        %5330 = vmatprep.mubr.f32.mxu0 %v5329
        %v5331 = vand.u32 %v4455, 4294901760
        %5332 = vmatmul.mubr.f32.gmra.mrb[0].mxu0 %v5331
        %v5333 = vpop.f32.mrb[0].mxu0
        %v5334 = vadd.f32 %v5223, %v5333
        %v5335 = vpop.f32.mrb[0].mxu0
        %5336 = vdwg.mxu0
        %v5337 = vadd.f32 %v4414, %v5313
        %v5338 = vadd.f32 %v4421, %v5320
        %v5339 = vadd.f32 %v4428, %v5327
        %v5340 = vadd.f32 %v4435, %v5334
        %v5341 = vld [vmem:[#allocation8] sm:$0xff]
        %v5342 = vld [vmem:[#allocation8 + $0x8] sm:$0xff]
        %v5343 = vld [vmem:[#allocation8 + $0x10] sm:$0xff]
        %v5344 = vld [vmem:[#allocation8 + $0x18] sm:$0xff]
        %v5345 = vld [vmem:[#allocation8 + $0x20] sm:$0xff]
        %v5346 = vld [vmem:[#allocation8 + $0x28] sm:$0xff]
        %v5347 = vld [vmem:[#allocation8 + $0x30] sm:$0xff]
        %v5348 = vld [vmem:[#allocation8 + $0x38] sm:$0xff]
        %vm5349 = vcmask 523264
        %v5350 = vsel %vm5349, %v397, 0
        %v5352 = vsel %vm5349, %v398, 0
        %v5354 = vsel %vm5349, %v399, 0
        %v5356 = vsel %vm5349, %v400, 0
        %5358 = vmatprep.subr.mxu0 0.0
        %v5359 = vand.u32 %v5341, 4294901760
        %5360 = vmatpush1.msra.mxu0 %v5359
        %5361 = vmatprep.subr.mxu0 0.0
        %v5362 = vand.u32 %v5342, 4294901760
        %5363 = vmatpush1.msra.mxu0 %v5362
        %5364 = vmatprep.subr.mxu0 0.0
        %v5365 = vand.u32 %v5343, 4294901760
        %5366 = vmatpush1.msra.mxu0 %v5365
        %5367 = vmatprep.subr.mxu0 0.0
        %v5368 = vand.u32 %v5344, 4294901760
        %5369 = vmatpush1.msra.mxu0 %v5368
        %5370 = vmatprep.subr.mxu0 0.0
        %v5371 = vand.u32 %v5345, 4294901760
        %5372 = vmatpush1.msra.mxu0 %v5371
        %5373 = vmatprep.subr.mxu0 0.0
        %v5374 = vand.u32 %v5346, 4294901760
        %5375 = vmatpush1.msra.mxu0 %v5374
        %5376 = vmatprep.subr.mxu0 0.0
        %v5377 = vand.u32 %v5347, 4294901760
        %5378 = vmatpush1.msra.mxu0 %v5377
        %5379 = vmatprep.subr.mxu0 0.0
        %v5380 = vand.u32 %v5348, 4294901760
        %5381 = vmatpush1.msra.mxu0 %v5380
        %5382 = vmatprep.subr.mxu0 0.0
        %5383 = vmatpush1.msra.mxu0 0.0
        %5384 = vmatprep.subr.mxu0 0.0
        %5385 = vmatpush1.msra.mxu0 0.0
        %5386 = vmatprep.subr.mxu0 0.0
        %5387 = vmatpush1.msra.mxu0 0.0
        %5388 = vmatprep.subr.mxu0 0.0
        %5389 = vmatpush1.msra.mxu0 0.0
        %5390 = vmatprep.subr.mxu0 0.0
        %5391 = vmatpush1.msra.mxu0 0.0
        %5392 = vmatprep.subr.mxu0 0.0
        %5393 = vmatpush1.msra.mxu0 0.0
        %5394 = vmatprep.subr.mxu0 0.0
        %5395 = vmatpush1.msra.mxu0 0.0
        %5396 = vmatprep.subr.mxu0 0.0
        %5397 = vmatpush1.msra.mxu0 0.0
        %5398 = vmatprep.subr.mxu0 0.0
        %5399 = vmatpush1.msra.mxu0 0.0
        %5400 = vmatprep.subr.mxu0 0.0
        %5401 = vmatpush1.msra.mxu0 0.0
        %5402 = vmatprep.subr.mxu0 0.0
        %5403 = vmatpush1.msra.mxu0 0.0
        %5404 = vmatprep.subr.mxu0 0.0
        %5405 = vmatpush1.msra.mxu0 0.0
        %5406 = vmatprep.subr.mxu0 0.0
        %5407 = vmatpush1.msra.mxu0 0.0
        %5408 = vmatprep.subr.mxu0 0.0
        %5409 = vmatpush1.msra.mxu0 0.0
        %5410 = vmatprep.subr.mxu0 0.0
        %5411 = vmatpush1.msra.mxu0 0.0
        %5412 = vmatprep.subr.mxu0 0.0
        %5413 = vmatpush1.msra.mxu0 0.0
        %5414 = vmatprep.subr.mxu0 0.0
        %5415 = vmatpush1.msra.mxu0 0.0
        %5416 = vmatprep.subr.mxu0 0.0
        %5417 = vmatpush1.msra.mxu0 0.0
        %5418 = vmatprep.subr.mxu0 0.0
        %5419 = vmatpush1.msra.mxu0 0.0
        %5420 = vmatprep.subr.mxu0 0.0
        %5421 = vmatpush1.msra.mxu0 0.0
        %5422 = vmatprep.subr.mxu0 0.0
        %5423 = vmatpush1.msra.mxu0 0.0
        %5424 = vmatprep.subr.mxu0 0.0
        %5425 = vmatpush1.msra.mxu0 0.0
        %5426 = vmatprep.subr.mxu0 0.0
        %5427 = vmatpush1.msra.mxu0 0.0
        %5428 = vmatprep.subr.mxu0 0.0
        %5429 = vmatpush1.msra.mxu0 0.0
        %5430 = vmatprep.mubr.f32.mxu0 0.0
        %v5431 = vand.u32 %v5350, 4294901760
        %v5432 = vsub.f32 %v5350, %v5431
        %v5433 = vand.u32 %v5432, 4294901760
        %v5434 = vsub.f32 %v5432, %v5433
        %v5435 = vand.u32 %v5434, 4294901760
        %5436 = vmatmul.mubr.f32.gmra.mrb[0].mxu0 %v5435
        %v5437 = vpop.f32.mrb[0].mxu0
        %v5438 = vadd.f32 0.0, %v5437
        %v5439 = vpop.f32.mrb[0].mxu0
        %5440 = vmatprep.mubr.f32.mxu0 0.0
        %v5441 = vand.u32 %v5352, 4294901760
        %v5442 = vsub.f32 %v5352, %v5441
        %v5443 = vand.u32 %v5442, 4294901760
        %v5444 = vsub.f32 %v5442, %v5443
        %v5445 = vand.u32 %v5444, 4294901760
        %5446 = vmatmul.mubr.f32.gmra.mrb[0].mxu0 %v5445
        %v5447 = vpop.f32.mrb[0].mxu0
        %v5448 = vadd.f32 0.0, %v5447
        %v5449 = vpop.f32.mrb[0].mxu0
        %5450 = vmatprep.mubr.f32.mxu0 0.0
        %v5451 = vand.u32 %v5354, 4294901760
        %v5452 = vsub.f32 %v5354, %v5451
        %v5453 = vand.u32 %v5452, 4294901760
        %v5454 = vsub.f32 %v5452, %v5453
        %v5455 = vand.u32 %v5454, 4294901760
        %5456 = vmatmul.mubr.f32.gmra.mrb[0].mxu0 %v5455
        %v5457 = vpop.f32.mrb[0].mxu0
        %v5458 = vadd.f32 0.0, %v5457
        %v5459 = vpop.f32.mrb[0].mxu0
        %5460 = vmatprep.mubr.f32.mxu0 0.0
        %v5461 = vand.u32 %v5356, 4294901760
        %v5462 = vsub.f32 %v5356, %v5461
        %v5463 = vand.u32 %v5462, 4294901760
        %v5464 = vsub.f32 %v5462, %v5463
        %v5465 = vand.u32 %v5464, 4294901760
        %5466 = vmatmul.mubr.f32.gmra.mrb[0].mxu0 %v5465
        %v5467 = vpop.f32.mrb[0].mxu0
        %v5468 = vadd.f32 0.0, %v5467
        %v5469 = vpop.f32.mrb[0].mxu0
        %5470 = vdwg.mxu0
        %5471 = vmatprep.subr.mxu0 0.0
        %v5472 = vand.u32 %v5341, 4294901760
        %v5473 = vsub.f32 %v5341, %v5472
        %v5474 = vand.u32 %v5473, 4294901760
        %v5475 = vsub.f32 %v5473, %v5474
        %v5476 = vand.u32 %v5475, 4294901760
        %5477 = vmatpush1.msra.mxu0 %v5476
        %5478 = vmatprep.subr.mxu0 0.0
        %v5479 = vand.u32 %v5342, 4294901760
        %v5480 = vsub.f32 %v5342, %v5479
        %v5481 = vand.u32 %v5480, 4294901760
        %v5482 = vsub.f32 %v5480, %v5481
        %v5483 = vand.u32 %v5482, 4294901760
        %5484 = vmatpush1.msra.mxu0 %v5483
        %5485 = vmatprep.subr.mxu0 0.0
        %v5486 = vand.u32 %v5343, 4294901760
        %v5487 = vsub.f32 %v5343, %v5486
        %v5488 = vand.u32 %v5487, 4294901760
        %v5489 = vsub.f32 %v5487, %v5488
        %v5490 = vand.u32 %v5489, 4294901760
        %5491 = vmatpush1.msra.mxu0 %v5490
        %5492 = vmatprep.subr.mxu0 0.0
        %v5493 = vand.u32 %v5344, 4294901760
        %v5494 = vsub.f32 %v5344, %v5493
        %v5495 = vand.u32 %v5494, 4294901760
        %v5496 = vsub.f32 %v5494, %v5495
        %v5497 = vand.u32 %v5496, 4294901760
        %5498 = vmatpush1.msra.mxu0 %v5497
        %5499 = vmatprep.subr.mxu0 0.0
        %v5500 = vand.u32 %v5345, 4294901760
        %v5501 = vsub.f32 %v5345, %v5500
        %v5502 = vand.u32 %v5501, 4294901760
        %v5503 = vsub.f32 %v5501, %v5502
        %v5504 = vand.u32 %v5503, 4294901760
        %5505 = vmatpush1.msra.mxu0 %v5504
        %5506 = vmatprep.subr.mxu0 0.0
        %v5507 = vand.u32 %v5346, 4294901760
        %v5508 = vsub.f32 %v5346, %v5507
        %v5509 = vand.u32 %v5508, 4294901760
        %v5510 = vsub.f32 %v5508, %v5509
        %v5511 = vand.u32 %v5510, 4294901760
        %5512 = vmatpush1.msra.mxu0 %v5511
        %5513 = vmatprep.subr.mxu0 0.0
        %v5514 = vand.u32 %v5347, 4294901760
        %v5515 = vsub.f32 %v5347, %v5514
        %v5516 = vand.u32 %v5515, 4294901760
        %v5517 = vsub.f32 %v5515, %v5516
        %v5518 = vand.u32 %v5517, 4294901760
        %5519 = vmatpush1.msra.mxu0 %v5518
        %5520 = vmatprep.subr.mxu0 0.0
        %v5521 = vand.u32 %v5348, 4294901760
        %v5522 = vsub.f32 %v5348, %v5521
        %v5523 = vand.u32 %v5522, 4294901760
        %v5524 = vsub.f32 %v5522, %v5523
        %v5525 = vand.u32 %v5524, 4294901760
        %5526 = vmatpush1.msra.mxu0 %v5525
        %5527 = vmatprep.subr.mxu0 0.0
        %5528 = vmatpush1.msra.mxu0 0.0
        %5529 = vmatprep.subr.mxu0 0.0
        %5530 = vmatpush1.msra.mxu0 0.0
        %5531 = vmatprep.subr.mxu0 0.0
        %5532 = vmatpush1.msra.mxu0 0.0
        %5533 = vmatprep.subr.mxu0 0.0
        %5534 = vmatpush1.msra.mxu0 0.0
        %5535 = vmatprep.subr.mxu0 0.0
        %5536 = vmatpush1.msra.mxu0 0.0
        %5537 = vmatprep.subr.mxu0 0.0
        %5538 = vmatpush1.msra.mxu0 0.0
        %5539 = vmatprep.subr.mxu0 0.0
        %5540 = vmatpush1.msra.mxu0 0.0
        %5541 = vmatprep.subr.mxu0 0.0
        %5542 = vmatpush1.msra.mxu0 0.0
        %5543 = vmatprep.subr.mxu0 0.0
        %5544 = vmatpush1.msra.mxu0 0.0
        %5545 = vmatprep.subr.mxu0 0.0
        %5546 = vmatpush1.msra.mxu0 0.0
        %5547 = vmatprep.subr.mxu0 0.0
        %5548 = vmatpush1.msra.mxu0 0.0
        %5549 = vmatprep.subr.mxu0 0.0
        %5550 = vmatpush1.msra.mxu0 0.0
        %5551 = vmatprep.subr.mxu0 0.0
        %5552 = vmatpush1.msra.mxu0 0.0
        %5553 = vmatprep.subr.mxu0 0.0
        %5554 = vmatpush1.msra.mxu0 0.0
        %5555 = vmatprep.subr.mxu0 0.0
        %5556 = vmatpush1.msra.mxu0 0.0
        %5557 = vmatprep.subr.mxu0 0.0
        %5558 = vmatpush1.msra.mxu0 0.0
        %5559 = vmatprep.subr.mxu0 0.0
        %5560 = vmatpush1.msra.mxu0 0.0
        %5561 = vmatprep.subr.mxu0 0.0
        %5562 = vmatpush1.msra.mxu0 0.0
        %5563 = vmatprep.subr.mxu0 0.0
        %5564 = vmatpush1.msra.mxu0 0.0
        %5565 = vmatprep.subr.mxu0 0.0
        %5566 = vmatpush1.msra.mxu0 0.0
        %5567 = vmatprep.subr.mxu0 0.0
        %5568 = vmatpush1.msra.mxu0 0.0
        %5569 = vmatprep.subr.mxu0 0.0
        %5570 = vmatpush1.msra.mxu0 0.0
        %5571 = vmatprep.subr.mxu0 0.0
        %5572 = vmatpush1.msra.mxu0 0.0
        %5573 = vmatprep.subr.mxu0 0.0
        %5574 = vmatpush1.msra.mxu0 0.0
        %5575 = vmatprep.mubr.f32.mxu0 0.0
        %v5576 = vand.u32 %v5350, 4294901760
        %5577 = vmatmul.mubr.f32.gmra.mrb[0].mxu0 %v5576
        %v5578 = vpop.f32.mrb[0].mxu0
        %v5579 = vadd.f32 %v5438, %v5578
        %v5580 = vpop.f32.mrb[0].mxu0
        %5581 = vmatprep.mubr.f32.mxu0 0.0
        %v5582 = vand.u32 %v5352, 4294901760
        %5583 = vmatmul.mubr.f32.gmra.mrb[0].mxu0 %v5582
        %v5584 = vpop.f32.mrb[0].mxu0
        %v5585 = vadd.f32 %v5448, %v5584
        %v5586 = vpop.f32.mrb[0].mxu0
        %5587 = vmatprep.mubr.f32.mxu0 0.0
        %v5588 = vand.u32 %v5354, 4294901760
        %5589 = vmatmul.mubr.f32.gmra.mrb[0].mxu0 %v5588
        %v5590 = vpop.f32.mrb[0].mxu0
        %v5591 = vadd.f32 %v5458, %v5590
        %v5592 = vpop.f32.mrb[0].mxu0
        %5593 = vmatprep.mubr.f32.mxu0 0.0
        %v5594 = vand.u32 %v5356, 4294901760
        %5595 = vmatmul.mubr.f32.gmra.mrb[0].mxu0 %v5594
        %v5596 = vpop.f32.mrb[0].mxu0
        %v5597 = vadd.f32 %v5468, %v5596
        %v5598 = vpop.f32.mrb[0].mxu0
        %5599 = vdwg.mxu0
        %5600 = vmatprep.subr.mxu0 0.0
        %v5601 = vand.u32 %v5341, 4294901760
        %v5602 = vsub.f32 %v5341, %v5601
        %5603 = vmatpush1.msra.mxu0 %v5602
        %5604 = vmatprep.subr.mxu0 0.0
        %v5605 = vand.u32 %v5342, 4294901760
        %v5606 = vsub.f32 %v5342, %v5605
        %5607 = vmatpush1.msra.mxu0 %v5606
        %5608 = vmatprep.subr.mxu0 0.0
        %v5609 = vand.u32 %v5343, 4294901760
        %v5610 = vsub.f32 %v5343, %v5609
        %5611 = vmatpush1.msra.mxu0 %v5610
        %5612 = vmatprep.subr.mxu0 0.0
        %v5613 = vand.u32 %v5344, 4294901760
        %v5614 = vsub.f32 %v5344, %v5613
        %5615 = vmatpush1.msra.mxu0 %v5614
        %5616 = vmatprep.subr.mxu0 0.0
        %v5617 = vand.u32 %v5345, 4294901760
        %v5618 = vsub.f32 %v5345, %v5617
        %5619 = vmatpush1.msra.mxu0 %v5618
        %5620 = vmatprep.subr.mxu0 0.0
        %v5621 = vand.u32 %v5346, 4294901760
        %v5622 = vsub.f32 %v5346, %v5621
        %5623 = vmatpush1.msra.mxu0 %v5622
        %5624 = vmatprep.subr.mxu0 0.0
        %v5625 = vand.u32 %v5347, 4294901760
        %v5626 = vsub.f32 %v5347, %v5625
        %5627 = vmatpush1.msra.mxu0 %v5626
        %5628 = vmatprep.subr.mxu0 0.0
        %v5629 = vand.u32 %v5348, 4294901760
        %v5630 = vsub.f32 %v5348, %v5629
        %5631 = vmatpush1.msra.mxu0 %v5630
        %5632 = vmatprep.subr.mxu0 0.0
        %5633 = vmatpush1.msra.mxu0 0.0
        %5634 = vmatprep.subr.mxu0 0.0
        %5635 = vmatpush1.msra.mxu0 0.0
        %5636 = vmatprep.subr.mxu0 0.0
        %5637 = vmatpush1.msra.mxu0 0.0
        %5638 = vmatprep.subr.mxu0 0.0
        %5639 = vmatpush1.msra.mxu0 0.0
        %5640 = vmatprep.subr.mxu0 0.0
        %5641 = vmatpush1.msra.mxu0 0.0
        %5642 = vmatprep.subr.mxu0 0.0
        %5643 = vmatpush1.msra.mxu0 0.0
        %5644 = vmatprep.subr.mxu0 0.0
        %5645 = vmatpush1.msra.mxu0 0.0
        %5646 = vmatprep.subr.mxu0 0.0
        %5647 = vmatpush1.msra.mxu0 0.0
        %5648 = vmatprep.subr.mxu0 0.0
        %5649 = vmatpush1.msra.mxu0 0.0
        %5650 = vmatprep.subr.mxu0 0.0
        %5651 = vmatpush1.msra.mxu0 0.0
        %5652 = vmatprep.subr.mxu0 0.0
        %5653 = vmatpush1.msra.mxu0 0.0
        %5654 = vmatprep.subr.mxu0 0.0
        %5655 = vmatpush1.msra.mxu0 0.0
        %5656 = vmatprep.subr.mxu0 0.0
        %5657 = vmatpush1.msra.mxu0 0.0
        %5658 = vmatprep.subr.mxu0 0.0
        %5659 = vmatpush1.msra.mxu0 0.0
        %5660 = vmatprep.subr.mxu0 0.0
        %5661 = vmatpush1.msra.mxu0 0.0
        %5662 = vmatprep.subr.mxu0 0.0
        %5663 = vmatpush1.msra.mxu0 0.0
        %5664 = vmatprep.subr.mxu0 0.0
        %5665 = vmatpush1.msra.mxu0 0.0
        %5666 = vmatprep.subr.mxu0 0.0
        %5667 = vmatpush1.msra.mxu0 0.0
        %5668 = vmatprep.subr.mxu0 0.0
        %5669 = vmatpush1.msra.mxu0 0.0
        %5670 = vmatprep.subr.mxu0 0.0
        %5671 = vmatpush1.msra.mxu0 0.0
        %5672 = vmatprep.subr.mxu0 0.0
        %5673 = vmatpush1.msra.mxu0 0.0
        %5674 = vmatprep.subr.mxu0 0.0
        %5675 = vmatpush1.msra.mxu0 0.0
        %5676 = vmatprep.subr.mxu0 0.0
        %5677 = vmatpush1.msra.mxu0 0.0
        %5678 = vmatprep.subr.mxu0 0.0
        %5679 = vmatpush1.msra.mxu0 0.0
        %5680 = vmatprep.mubr.f32.mxu0 0.0
        %v5681 = vand.u32 %v5350, 4294901760
        %v5682 = vsub.f32 %v5350, %v5681
        %5683 = vmatmul.mubr.f32.gmra.mrb[0].mxu0 %v5682
        %v5684 = vpop.f32.mrb[0].mxu0
        %v5685 = vadd.f32 %v5579, %v5684
        %v5686 = vpop.f32.mrb[0].mxu0
        %5687 = vmatprep.mubr.f32.mxu0 0.0
        %v5688 = vand.u32 %v5352, 4294901760
        %v5689 = vsub.f32 %v5352, %v5688
        %5690 = vmatmul.mubr.f32.gmra.mrb[0].mxu0 %v5689
        %v5691 = vpop.f32.mrb[0].mxu0
        %v5692 = vadd.f32 %v5585, %v5691
        %v5693 = vpop.f32.mrb[0].mxu0
        %5694 = vmatprep.mubr.f32.mxu0 0.0
        %v5695 = vand.u32 %v5354, 4294901760
        %v5696 = vsub.f32 %v5354, %v5695
        %5697 = vmatmul.mubr.f32.gmra.mrb[0].mxu0 %v5696
        %v5698 = vpop.f32.mrb[0].mxu0
        %v5699 = vadd.f32 %v5591, %v5698
        %v5700 = vpop.f32.mrb[0].mxu0
        %5701 = vmatprep.mubr.f32.mxu0 0.0
        %v5702 = vand.u32 %v5356, 4294901760
        %v5703 = vsub.f32 %v5356, %v5702
        %5704 = vmatmul.mubr.f32.gmra.mrb[0].mxu0 %v5703
        %v5705 = vpop.f32.mrb[0].mxu0
        %v5706 = vadd.f32 %v5597, %v5705
        %v5707 = vpop.f32.mrb[0].mxu0
        %5708 = vdwg.mxu0
        %5709 = vmatprep.subr.mxu0 0.0
        %v5710 = vand.u32 %v5341, 4294901760
        %5711 = vmatpush1.msra.mxu0 %v5710
        %5712 = vmatprep.subr.mxu0 0.0
        %v5713 = vand.u32 %v5342, 4294901760
        %5714 = vmatpush1.msra.mxu0 %v5713
        %5715 = vmatprep.subr.mxu0 0.0
        %v5716 = vand.u32 %v5343, 4294901760
        %5717 = vmatpush1.msra.mxu0 %v5716
        %5718 = vmatprep.subr.mxu0 0.0
        %v5719 = vand.u32 %v5344, 4294901760
        %5720 = vmatpush1.msra.mxu0 %v5719
        %5721 = vmatprep.subr.mxu0 0.0
        %v5722 = vand.u32 %v5345, 4294901760
        %5723 = vmatpush1.msra.mxu0 %v5722
        %5724 = vmatprep.subr.mxu0 0.0
        %v5725 = vand.u32 %v5346, 4294901760
        %5726 = vmatpush1.msra.mxu0 %v5725
        %5727 = vmatprep.subr.mxu0 0.0
        %v5728 = vand.u32 %v5347, 4294901760
        %5729 = vmatpush1.msra.mxu0 %v5728
        %5730 = vmatprep.subr.mxu0 0.0
        %v5731 = vand.u32 %v5348, 4294901760
        %5732 = vmatpush1.msra.mxu0 %v5731
        %5733 = vmatprep.subr.mxu0 0.0
        %5734 = vmatpush1.msra.mxu0 0.0
        %5735 = vmatprep.subr.mxu0 0.0
        %5736 = vmatpush1.msra.mxu0 0.0
        %5737 = vmatprep.subr.mxu0 0.0
        %5738 = vmatpush1.msra.mxu0 0.0
        %5739 = vmatprep.subr.mxu0 0.0
        %5740 = vmatpush1.msra.mxu0 0.0
        %5741 = vmatprep.subr.mxu0 0.0
        %5742 = vmatpush1.msra.mxu0 0.0
        %5743 = vmatprep.subr.mxu0 0.0
        %5744 = vmatpush1.msra.mxu0 0.0
        %5745 = vmatprep.subr.mxu0 0.0
        %5746 = vmatpush1.msra.mxu0 0.0
        %5747 = vmatprep.subr.mxu0 0.0
        %5748 = vmatpush1.msra.mxu0 0.0
        %5749 = vmatprep.subr.mxu0 0.0
        %5750 = vmatpush1.msra.mxu0 0.0
        %5751 = vmatprep.subr.mxu0 0.0
        %5752 = vmatpush1.msra.mxu0 0.0
        %5753 = vmatprep.subr.mxu0 0.0
        %5754 = vmatpush1.msra.mxu0 0.0
        %5755 = vmatprep.subr.mxu0 0.0
        %5756 = vmatpush1.msra.mxu0 0.0
        %5757 = vmatprep.subr.mxu0 0.0
        %5758 = vmatpush1.msra.mxu0 0.0
        %5759 = vmatprep.subr.mxu0 0.0
        %5760 = vmatpush1.msra.mxu0 0.0
        %5761 = vmatprep.subr.mxu0 0.0
        %5762 = vmatpush1.msra.mxu0 0.0
        %5763 = vmatprep.subr.mxu0 0.0
        %5764 = vmatpush1.msra.mxu0 0.0
        %5765 = vmatprep.subr.mxu0 0.0
        %5766 = vmatpush1.msra.mxu0 0.0
        %5767 = vmatprep.subr.mxu0 0.0
        %5768 = vmatpush1.msra.mxu0 0.0
        %5769 = vmatprep.subr.mxu0 0.0
        %5770 = vmatpush1.msra.mxu0 0.0
        %5771 = vmatprep.subr.mxu0 0.0
        %5772 = vmatpush1.msra.mxu0 0.0
        %5773 = vmatprep.subr.mxu0 0.0
        %5774 = vmatpush1.msra.mxu0 0.0
        %5775 = vmatprep.subr.mxu0 0.0
        %5776 = vmatpush1.msra.mxu0 0.0
        %5777 = vmatprep.subr.mxu0 0.0
        %5778 = vmatpush1.msra.mxu0 0.0
        %5779 = vmatprep.subr.mxu0 0.0
        %5780 = vmatpush1.msra.mxu0 0.0
        %5781 = vmatprep.mubr.f32.mxu0 0.0
        %v5782 = vand.u32 %v5350, 4294901760
        %v5783 = vsub.f32 %v5350, %v5782
        %v5784 = vand.u32 %v5783, 4294901760
        %5785 = vmatmul.mubr.f32.gmra.mrb[0].mxu0 %v5784
        %v5786 = vpop.f32.mrb[0].mxu0
        %v5787 = vadd.f32 %v5685, %v5786
        %v5788 = vpop.f32.mrb[0].mxu0
        %5789 = vmatprep.mubr.f32.mxu0 0.0
        %v5790 = vand.u32 %v5352, 4294901760
        %v5791 = vsub.f32 %v5352, %v5790
        %v5792 = vand.u32 %v5791, 4294901760
        %5793 = vmatmul.mubr.f32.gmra.mrb[0].mxu0 %v5792
        %v5794 = vpop.f32.mrb[0].mxu0
        %v5795 = vadd.f32 %v5692, %v5794
        %v5796 = vpop.f32.mrb[0].mxu0
        %5797 = vmatprep.mubr.f32.mxu0 0.0
        %v5798 = vand.u32 %v5354, 4294901760
        %v5799 = vsub.f32 %v5354, %v5798
        %v5800 = vand.u32 %v5799, 4294901760
        %5801 = vmatmul.mubr.f32.gmra.mrb[0].mxu0 %v5800
        %v5802 = vpop.f32.mrb[0].mxu0
        %v5803 = vadd.f32 %v5699, %v5802
        %v5804 = vpop.f32.mrb[0].mxu0
        %5805 = vmatprep.mubr.f32.mxu0 0.0
        %v5806 = vand.u32 %v5356, 4294901760
        %v5807 = vsub.f32 %v5356, %v5806
        %v5808 = vand.u32 %v5807, 4294901760
        %5809 = vmatmul.mubr.f32.gmra.mrb[0].mxu0 %v5808
        %v5810 = vpop.f32.mrb[0].mxu0
        %v5811 = vadd.f32 %v5706, %v5810
        %v5812 = vpop.f32.mrb[0].mxu0
        %5813 = vdwg.mxu0
        %5814 = vmatprep.subr.mxu0 0.0
        %v5815 = vand.u32 %v5341, 4294901760
        %v5816 = vsub.f32 %v5341, %v5815
        %v5817 = vand.u32 %v5816, 4294901760
        %5818 = vmatpush1.msra.mxu0 %v5817
        %5819 = vmatprep.subr.mxu0 0.0
        %v5820 = vand.u32 %v5342, 4294901760
        %v5821 = vsub.f32 %v5342, %v5820
        %v5822 = vand.u32 %v5821, 4294901760
        %5823 = vmatpush1.msra.mxu0 %v5822
        %5824 = vmatprep.subr.mxu0 0.0
        %v5825 = vand.u32 %v5343, 4294901760
        %v5826 = vsub.f32 %v5343, %v5825
        %v5827 = vand.u32 %v5826, 4294901760
        %5828 = vmatpush1.msra.mxu0 %v5827
        %5829 = vmatprep.subr.mxu0 0.0
        %v5830 = vand.u32 %v5344, 4294901760
        %v5831 = vsub.f32 %v5344, %v5830
        %v5832 = vand.u32 %v5831, 4294901760
        %5833 = vmatpush1.msra.mxu0 %v5832
        %5834 = vmatprep.subr.mxu0 0.0
        %v5835 = vand.u32 %v5345, 4294901760
        %v5836 = vsub.f32 %v5345, %v5835
        %v5837 = vand.u32 %v5836, 4294901760
        %5838 = vmatpush1.msra.mxu0 %v5837
        %5839 = vmatprep.subr.mxu0 0.0
        %v5840 = vand.u32 %v5346, 4294901760
        %v5841 = vsub.f32 %v5346, %v5840
        %v5842 = vand.u32 %v5841, 4294901760
        %5843 = vmatpush1.msra.mxu0 %v5842
        %5844 = vmatprep.subr.mxu0 0.0
        %v5845 = vand.u32 %v5347, 4294901760
        %v5846 = vsub.f32 %v5347, %v5845
        %v5847 = vand.u32 %v5846, 4294901760
        %5848 = vmatpush1.msra.mxu0 %v5847
        %5849 = vmatprep.subr.mxu0 0.0
        %v5850 = vand.u32 %v5348, 4294901760
        %v5851 = vsub.f32 %v5348, %v5850
        %v5852 = vand.u32 %v5851, 4294901760
        %5853 = vmatpush1.msra.mxu0 %v5852
        %5854 = vmatprep.subr.mxu0 0.0
        %5855 = vmatpush1.msra.mxu0 0.0
        %5856 = vmatprep.subr.mxu0 0.0
        %5857 = vmatpush1.msra.mxu0 0.0
        %5858 = vmatprep.subr.mxu0 0.0
        %5859 = vmatpush1.msra.mxu0 0.0
        %5860 = vmatprep.subr.mxu0 0.0
        %5861 = vmatpush1.msra.mxu0 0.0
        %5862 = vmatprep.subr.mxu0 0.0
        %5863 = vmatpush1.msra.mxu0 0.0
        %5864 = vmatprep.subr.mxu0 0.0
        %5865 = vmatpush1.msra.mxu0 0.0
        %5866 = vmatprep.subr.mxu0 0.0
        %5867 = vmatpush1.msra.mxu0 0.0
        %5868 = vmatprep.subr.mxu0 0.0
        %5869 = vmatpush1.msra.mxu0 0.0
        %5870 = vmatprep.subr.mxu0 0.0
        %5871 = vmatpush1.msra.mxu0 0.0
        %5872 = vmatprep.subr.mxu0 0.0
        %5873 = vmatpush1.msra.mxu0 0.0
        %5874 = vmatprep.subr.mxu0 0.0
        %5875 = vmatpush1.msra.mxu0 0.0
        %5876 = vmatprep.subr.mxu0 0.0
        %5877 = vmatpush1.msra.mxu0 0.0
        %5878 = vmatprep.subr.mxu0 0.0
        %5879 = vmatpush1.msra.mxu0 0.0
        %5880 = vmatprep.subr.mxu0 0.0
        %5881 = vmatpush1.msra.mxu0 0.0
        %5882 = vmatprep.subr.mxu0 0.0
        %5883 = vmatpush1.msra.mxu0 0.0
        %5884 = vmatprep.subr.mxu0 0.0
        %5885 = vmatpush1.msra.mxu0 0.0
        %5886 = vmatprep.subr.mxu0 0.0
        %5887 = vmatpush1.msra.mxu0 0.0
        %5888 = vmatprep.subr.mxu0 0.0
        %5889 = vmatpush1.msra.mxu0 0.0
        %5890 = vmatprep.subr.mxu0 0.0
        %5891 = vmatpush1.msra.mxu0 0.0
        %5892 = vmatprep.subr.mxu0 0.0
        %5893 = vmatpush1.msra.mxu0 0.0
        %5894 = vmatprep.subr.mxu0 0.0
        %5895 = vmatpush1.msra.mxu0 0.0
        %5896 = vmatprep.subr.mxu0 0.0
        %5897 = vmatpush1.msra.mxu0 0.0
        %5898 = vmatprep.subr.mxu0 0.0
        %5899 = vmatpush1.msra.mxu0 0.0
        %5900 = vmatprep.subr.mxu0 0.0
        %5901 = vmatpush1.msra.mxu0 0.0
        %5902 = vmatprep.mubr.f32.mxu0 0.0
        %v5903 = vand.u32 %v5350, 4294901760
        %5904 = vmatmul.mubr.f32.gmra.mrb[0].mxu0 %v5903
        %v5905 = vpop.f32.mrb[0].mxu0
        %v5906 = vadd.f32 %v5787, %v5905
        %v5907 = vpop.f32.mrb[0].mxu0
        %5908 = vmatprep.mubr.f32.mxu0 0.0
        %v5909 = vand.u32 %v5352, 4294901760
        %5910 = vmatmul.mubr.f32.gmra.mrb[0].mxu0 %v5909
        %v5911 = vpop.f32.mrb[0].mxu0
        %v5912 = vadd.f32 %v5795, %v5911
        %v5913 = vpop.f32.mrb[0].mxu0
        %5914 = vmatprep.mubr.f32.mxu0 0.0
        %v5915 = vand.u32 %v5354, 4294901760
        %5916 = vmatmul.mubr.f32.gmra.mrb[0].mxu0 %v5915
        %v5917 = vpop.f32.mrb[0].mxu0
        %v5918 = vadd.f32 %v5803, %v5917
        %v5919 = vpop.f32.mrb[0].mxu0
        %5920 = vmatprep.mubr.f32.mxu0 0.0
        %v5921 = vand.u32 %v5356, 4294901760
        %5922 = vmatmul.mubr.f32.gmra.mrb[0].mxu0 %v5921
        %v5923 = vpop.f32.mrb[0].mxu0
        %v5924 = vadd.f32 %v5811, %v5923
        %v5925 = vpop.f32.mrb[0].mxu0
        %5926 = vdwg.mxu0
        %5927 = vmatprep.subr.mxu0 0.0
        %v5928 = vand.u32 %v5341, 4294901760
        %5929 = vmatpush1.msra.mxu0 %v5928
        %5930 = vmatprep.subr.mxu0 0.0
        %v5931 = vand.u32 %v5342, 4294901760
        %5932 = vmatpush1.msra.mxu0 %v5931
        %5933 = vmatprep.subr.mxu0 0.0
        %v5934 = vand.u32 %v5343, 4294901760
        %5935 = vmatpush1.msra.mxu0 %v5934
        %5936 = vmatprep.subr.mxu0 0.0
        %v5937 = vand.u32 %v5344, 4294901760
        %5938 = vmatpush1.msra.mxu0 %v5937
        %5939 = vmatprep.subr.mxu0 0.0
        %v5940 = vand.u32 %v5345, 4294901760
        %5941 = vmatpush1.msra.mxu0 %v5940
        %5942 = vmatprep.subr.mxu0 0.0
        %v5943 = vand.u32 %v5346, 4294901760
        %5944 = vmatpush1.msra.mxu0 %v5943
        %5945 = vmatprep.subr.mxu0 0.0
        %v5946 = vand.u32 %v5347, 4294901760
        %5947 = vmatpush1.msra.mxu0 %v5946
        %5948 = vmatprep.subr.mxu0 0.0
        %v5949 = vand.u32 %v5348, 4294901760
        %5950 = vmatpush1.msra.mxu0 %v5949
        %5951 = vmatprep.subr.mxu0 0.0
        %5952 = vmatpush1.msra.mxu0 0.0
        %5953 = vmatprep.subr.mxu0 0.0
        %5954 = vmatpush1.msra.mxu0 0.0
        %5955 = vmatprep.subr.mxu0 0.0
        %5956 = vmatpush1.msra.mxu0 0.0
        %5957 = vmatprep.subr.mxu0 0.0
        %5958 = vmatpush1.msra.mxu0 0.0
        %5959 = vmatprep.subr.mxu0 0.0
        %5960 = vmatpush1.msra.mxu0 0.0
        %5961 = vmatprep.subr.mxu0 0.0
        %5962 = vmatpush1.msra.mxu0 0.0
        %5963 = vmatprep.subr.mxu0 0.0
        %5964 = vmatpush1.msra.mxu0 0.0
        %5965 = vmatprep.subr.mxu0 0.0
        %5966 = vmatpush1.msra.mxu0 0.0
        %5967 = vmatprep.subr.mxu0 0.0
        %5968 = vmatpush1.msra.mxu0 0.0
        %5969 = vmatprep.subr.mxu0 0.0
        %5970 = vmatpush1.msra.mxu0 0.0
        %5971 = vmatprep.subr.mxu0 0.0
        %5972 = vmatpush1.msra.mxu0 0.0
        %5973 = vmatprep.subr.mxu0 0.0
        %5974 = vmatpush1.msra.mxu0 0.0
        %5975 = vmatprep.subr.mxu0 0.0
        %5976 = vmatpush1.msra.mxu0 0.0
        %5977 = vmatprep.subr.mxu0 0.0
        %5978 = vmatpush1.msra.mxu0 0.0
        %5979 = vmatprep.subr.mxu0 0.0
        %5980 = vmatpush1.msra.mxu0 0.0
        %5981 = vmatprep.subr.mxu0 0.0
        %5982 = vmatpush1.msra.mxu0 0.0
        %5983 = vmatprep.subr.mxu0 0.0
        %5984 = vmatpush1.msra.mxu0 0.0
        %5985 = vmatprep.subr.mxu0 0.0
        %5986 = vmatpush1.msra.mxu0 0.0
        %5987 = vmatprep.subr.mxu0 0.0
        %5988 = vmatpush1.msra.mxu0 0.0
        %5989 = vmatprep.subr.mxu0 0.0
        %5990 = vmatpush1.msra.mxu0 0.0
        %5991 = vmatprep.subr.mxu0 0.0
        %5992 = vmatpush1.msra.mxu0 0.0
        %5993 = vmatprep.subr.mxu0 0.0
        %5994 = vmatpush1.msra.mxu0 0.0
        %5995 = vmatprep.subr.mxu0 0.0
        %5996 = vmatpush1.msra.mxu0 0.0
        %5997 = vmatprep.subr.mxu0 0.0
        %5998 = vmatpush1.msra.mxu0 0.0
        %5999 = vmatprep.mubr.f32.mxu0 0.0
        %v6000 = vand.u32 %v5350, 4294901760
        %6001 = vmatmul.mubr.f32.gmra.mrb[0].mxu0 %v6000
        %v6002 = vpop.f32.mrb[0].mxu0
        %v6003 = vadd.f32 %v5906, %v6002
        %v6004 = vpop.f32.mrb[0].mxu0
        %6005 = vmatprep.mubr.f32.mxu0 0.0
        %v6006 = vand.u32 %v5352, 4294901760
        %6007 = vmatmul.mubr.f32.gmra.mrb[0].mxu0 %v6006
        %v6008 = vpop.f32.mrb[0].mxu0
        %v6009 = vadd.f32 %v5912, %v6008
        %v6010 = vpop.f32.mrb[0].mxu0
        %6011 = vmatprep.mubr.f32.mxu0 0.0
        %v6012 = vand.u32 %v5354, 4294901760
        %6013 = vmatmul.mubr.f32.gmra.mrb[0].mxu0 %v6012
        %v6014 = vpop.f32.mrb[0].mxu0
        %v6015 = vadd.f32 %v5918, %v6014
        %v6016 = vpop.f32.mrb[0].mxu0
        %6017 = vmatprep.mubr.f32.mxu0 0.0
        %v6018 = vand.u32 %v5356, 4294901760
        %6019 = vmatmul.mubr.f32.gmra.mrb[0].mxu0 %v6018
        %v6020 = vpop.f32.mrb[0].mxu0
        %v6021 = vadd.f32 %v5924, %v6020
        %v6022 = vpop.f32.mrb[0].mxu0
        %6023 = vdwg.mxu0
        %v6024 = vadd.f32 %v5337, %v6003
        %v6025 = vadd.f32 %v5338, %v6009
        %v6026 = vadd.f32 %v5339, %v6015
        %v6027 = vadd.f32 %v5340, %v6021
        %6028 = vst [vmem:[%s368] sm:$0xff] %v6024
        %6029 = vst [vmem:[%s368 + $0x8] sm:$0xff] %v6025
        %6030 = vst [vmem:[%s368 + $0x10] sm:$0xff] %v6026
        %6031 = vst [vmem:[%s368 + $0x18] sm:$0xff] %v6027
        %s6032 = sand.u32 %s208, 1
        %s6033 = scalar_lea.sflag [#allocation4], %s6032
        %s6034 = sand.u32 %s208, 1
        %s6035 = smul.addr %s6034, 32
        %s6036 = scalar_lea.vmem [#allocation10], %s6035
        // Predicated region
        $region69: #{tpu_custom_call.1} parent=51 // pred_check
          %p6037 = pneg %p218
        $region70: #{tpu_custom_call.1} parent=51 // pred_check_branch
          %6039 = sbr.rel (%p6037) target = $region72
        $region71: #{tpu_custom_call.1} parent=51 // pred_region
          %s6040 = smul.u32 2, %s27
          %s6042 = ssub.s32 512, 512
          %6043 = vsyncadd %s6033, %s6042
          %s6044 = smul.addr %s6040, 2
          %s6045 = smul.addr %s6044, 128
          %s6046 = scalar_lea.hbm %s8, %s6045
          %s6047 = sshll.u32 %s6036, 4
          %s6048 = int_to_ptr.vmem [resolvable:$true] %s6047
          %6053 = dma.vmem_to_hbm [thread:$0]  %s6048, 512, %s6046, %s6033, 128, 128, 8
        $region72: #{tpu_custom_call.1} parent=51 // pred_fallthru
          _
      $region52: #{tpu_custom_call.1} parent=5 // pred_fallthru
        _
      %p6054 = scmp.le.s32.totalorder 2, %s22
      // Predicated region
      $region73: #{tpu_custom_call.1} parent=5 // pred_check
        %p6055 = pneg %p6054
      $region74: #{tpu_custom_call.1} parent=5 // pred_check_branch
        %6057 = sbr.rel (%p6055) target = $region76
      $region75: #{tpu_custom_call.1} parent=5 // pred_region
        %s6058 = ssub.s32 %s22, 2
        // Predicated region
        $region77: #{tpu_custom_call.1} parent=75 // pred_check
          %p6059 = pneg %p224
        $region78: #{tpu_custom_call.1} parent=75 // pred_check_branch
          %6061 = sbr.rel (%p6059) target = $region80
        $region79: #{tpu_custom_call.1} parent=75 // pred_region
          %s6062 = sand.u32 %s209, 1
          %s6063 = scalar_lea.sflag [#allocation4], %s6062
          %s6064 = sand.u32 %s209, 1
          %s6065 = smul.addr %s6064, 32
          %s6066 = scalar_lea.vmem [#allocation10], %s6065
          %6067 = dma.done %s6063, 512
        $region80: #{tpu_custom_call.1} parent=75 // pred_fallthru
          _
      $region76: #{tpu_custom_call.1} parent=5 // pred_fallthru
        _
    $region6: #{tpu_custom_call.1} parent=1 // loop_footer
      %s26 = sadd.s32 1, %s22
    $region7: #{tpu_custom_call.1} parent=1 // loop_footer_branch
      %21 = sbr.rel target = $region3
    $region8: #{tpu_custom_call.1} parent=1 // loop_exit
      _
    %6068 = vsyncpa [#allocation3], 1
    %s6069 = scalar_lea.sflag [#allocation3], 1
    %6070 = vsyncpa %s6069, 1
    %6071 = vsyncpa [#allocation6], 1
    %6072 = vsyncpa [#allocation9], 1
    %6073 = vsyncpa [#allocation4], 1
    %s6074 = scalar_lea.sflag [#allocation4], 1
    %6075 = vsyncpa %s6074, 1

</llo_original>
